<compile_context>
chip_gen: v7x
topology: tpu7x:2x2x1
jax: 0.10.0
libtpu: 0.0.40
codegen_flags: <defaults>
</compile_context>

<pallas_src>
import jax
import jax.numpy as jnp
import numpy as np
from jax.experimental import pallas as pl
from jax.experimental.pallas import tpu as pltpu

BN_EPS = 1e-5          # PyTorch BatchNorm2d default
LANES = 128            # K / N lane padding for the MXU matmuls


# ------------------------------ helpers ------------------------------------ #
def _round_up(x, m):
    return ((x + m - 1) // m) * m


def _pick_tile_m(m, cap=1024):
    """Largest divisor of m that is a multiple of 8 and <= cap (fallback: m)."""
    best = None
    for d in range(8, min(m, cap) + 1, 8):
        if m % d == 0:
            best = d
    return best if best is not None else m


def _center_crop_nchw(x, th, tw):
    # torchvision CenterCrop semantics
    h, w = x.shape[2], x.shape[3]
    top = int(round((h - th) / 2.0))
    lft = int(round((w - tw) / 2.0))
    return x[:, :, top:top + th, lft:lft + tw]


def _im2col3x3(x):
    """(N, H, W, C) -> (N, H-2, W-2, 9*C); last axis ordered (kh, kw, c)."""
    n, hh, ww, c = x.shape
    taps = [x[:, kh:kh + hh - 2, kw:kw + ww - 2, :]
            for kh in range(3) for kw in range(3)]
    return jnp.concatenate(taps, axis=-1)


def _conv_w_k(w):
    """PyTorch conv weight (C_out, C_in, 3, 3) -> (LANES, LANES) bf16 with
    rows ordered (kh, kw, c_in) to match _im2col3x3, cols = c_out."""
    c_out, c_in = w.shape[0], w.shape[1]
    wm = jnp.transpose(w, (2, 3, 1, 0)).reshape(9 * c_in, c_out)
    wm = jnp.pad(wm, ((0, LANES - 9 * c_in), (0, LANES - c_out)))
    return wm.astype(jnp.bfloat16)


def _stats_to_affine(stats, count, gamma, beta):
    """Reduce per-tile (sum, sum_sq) partials -> per-channel BN (scale, shift)."""
    c = gamma.shape[0]
    s = jnp.sum(stats, axis=0)[:, :c]                   # (2, c_real)
    mean = s[0] / count
    var = jnp.maximum(s[1] / count - mean * mean, 0.0)  # one-pass var, f32
    scale = gamma * jax.lax.rsqrt(var + BN_EPS)
    shift = beta - mean * scale
    return scale, shift


# --------------------- ConvTranspose2d(k=2, s=2) kernel --------------------- #
def _upconv_kernel(x_ref, w_ref, b_ref, o_ref):
    o_ref[...] = (jnp.dot(x_ref[...], w_ref[...],
                          preferred_element_type=jnp.float32) + b_ref[...])


def _upconv_matmul(x_bf16, w_bf16, b_row):
    m, k = x_bf16.shape
    n = w_bf16.shape[1]
    return pl.pallas_call(
        _upconv_kernel,
        out_shape=jax.ShapeDtypeStruct((m, n), jnp.float32),
        grid_spec=pltpu.PrefetchScalarGridSpec(
            num_scalar_prefetch=0,
            grid=(1,),                                   # single step (review)
            in_specs=[
                pl.BlockSpec((m, k), lambda i: (0, 0)),
                pl.BlockSpec((k, n), lambda i: (0, 0)),
                pl.BlockSpec((1, n), lambda i: (0, 0)),
            ],
            out_specs=pl.BlockSpec((m, n), lambda i: (0, 0)),
        ),
        compiler_params=pltpu.CompilerParams(
            dimension_semantics=("arbitrary",)),
    )(x_bf16, w_bf16, b_row)


# -------- 3x3 conv as one matmul per tile (+ optional fused BN+ReLU) -------- #
def _make_conv_kernel(apply_input_act, c_out_pad, tile_m, m_real, m_pad):
    mask_rows = apply_input_act and (m_pad != m_real)

    def kernel(x_ref, w_ref, scale_ref, shift_ref, y_ref, stats_ref):
        x = x_ref[...]                                   # (tile_m, 128) bf16
        if apply_input_act:
            # Fused BatchNorm + ReLU of the PREVIOUS conv (f32 math), applied
            # per K lane: scale/shift are tiled 9x over the (kh, kw) taps.
            xf = jnp.maximum(x.astype(jnp.float32) * scale_ref[...]
                             + shift_ref[...], 0.0)
            x = xf.astype(jnp.bfloat16)

        # The whole 3x3 conv for this row block: ONE bf16 MXU matmul with the
        # taps folded into K, f32 accumulate (no 9-tap accumulator traffic).
        acc = jnp.dot(x, w_ref[...], preferred_element_type=jnp.float32)

        # Narrow (8-lane) output: no 128-padded activation written to HBM.
        y_ref[...] = acc[:, :c_out_pad]

        # Per-tile partial BN statistics (sum, sum_sq) per output channel.
        acc_s = acc
        if mask_rows:   # only needed if M was padded AND rows can be nonzero
            row = (pl.program_id(0) * tile_m
                   + jax.lax.broadcasted_iota(jnp.int32, acc.shape, 0))
            acc_s = jnp.where(row < m_real, acc, 0.0)
        stats_ref[0, 0:1, :] = jnp.sum(acc_s, axis=0, keepdims=True)
        stats_ref[0, 1:2, :] = jnp.sum(acc_s * acc_s, axis=0, keepdims=True)

    return kernel


def _conv3x3_matmul(patches, w_k, scale_k, shift_k, *, m_real, c_out_pad,
                    apply_input_act):
    """patches: (m_pad, 128) bf16 im2col rows.  Returns raw conv output
    (m_pad, c_out_pad) f32 and per-tile (sum, sum_sq) partials."""
    m_pad, k = patches.shape
    n = w_k.shape[1]
    tile_m = _pick_tile_m(m_pad)
    steps = m_pad // tile_m

    kernel = _make_conv_kernel(apply_input_act, c_out_pad, tile_m, m_real, m_pad)
    y, stats = pl.pallas_call(
        kernel,
        out_shape=(
            jax.ShapeDtypeStruct((m_pad, c_out_pad), jnp.float32),
            jax.ShapeDtypeStruct((steps, 2, n), jnp.float32),
        ),
        grid_spec=pltpu.PrefetchScalarGridSpec(
            num_scalar_prefetch=0,
            grid=(steps,),
            in_specs=[
                pl.BlockSpec((tile_m, k), lambda i: (i, 0)),
                pl.BlockSpec((k, n), lambda i: (0, 0)),
                pl.BlockSpec((1, n), lambda i: (0, 0)),
                pl.BlockSpec((1, n), lambda i: (0, 0)),
            ],
            out_specs=(
                pl.BlockSpec((tile_m, c_out_pad), lambda i: (i, 0)),
                pl.BlockSpec((1, 2, n), lambda i: (i, 0, 0)),
            ),
        ),
        compiler_params=pltpu.CompilerParams(
            dimension_semantics=("parallel",)),
    )(patches, w_k, scale_k, shift_k)
    return y, stats


# ------------------------------- forward pass ------------------------------ #
def up_conv_forward(down_x, left_x, params):
    (w_up, b_up, w1, b1, g1, be1, w2, b2, g2, be2) = params
    n, c_in, h, w = down_x.shape
    c_out = w_up.shape[1]
    del b1, b2  # conv biases are cancelled exactly by train-mode BatchNorm

    assert 9 * c_in <= LANES and 9 * c_out <= LANES
    # TODO(synk): for 9*C_in > 128, tile the folded K axis over extra grid steps.

    c_out_pad = _round_up(c_out, 8)

    # ---- ConvTranspose2d(k=2, s=2): one bf16 per-pixel matmul --------------
    m_up = n * h * w
    m_up_pad = _round_up(m_up, 8)
    x_flat = jnp.transpose(down_x, (0, 2, 3, 1)).reshape(m_up, c_in)
    x_flat = jnp.pad(x_flat, ((0, m_up_pad - m_up), (0, LANES - c_in)))
    x_flat = x_flat.astype(jnp.bfloat16)
    w_up_mat = jnp.transpose(w_up, (0, 2, 3, 1)).reshape(c_in, 4 * c_out)
    w_up_mat = jnp.pad(w_up_mat, ((0, LANES - c_in), (0, LANES - 4 * c_out)))
    w_up_mat = w_up_mat.astype(jnp.bfloat16)
    b_up_row = jnp.pad(jnp.tile(b_up, 4), (0, LANES - 4 * c_out)).reshape(1, LANES)
    y_up = _upconv_matmul(x_flat, w_up_mat, b_up_row)[:m_up, :4 * c_out]
    y_up = y_up.reshape(n, h, w, 2, 2, c_out)
    y_up = jnp.transpose(y_up, (0, 1, 3, 2, 4, 5)).reshape(n, 2 * h, 2 * w, c_out)

    # ---- CenterCrop(left) + channel concat at REAL channel count -----------
    left_c = jnp.transpose(_center_crop_nchw(left_x, 2 * h, 2 * w), (0, 2, 3, 1))
    x0 = jnp.concatenate([y_up, left_c], axis=-1)        # (n, 2h, 2w, c_in)

    h1, w1r = 2 * h - 2, 2 * w - 2                       # conv1 output size
    h2, w2r = 2 * h - 4, 2 * w - 4                       # conv2 output size
    zeros_row = jnp.zeros((1, LANES), jnp.float32)

    # ---- conv1: K = (kh,kw,c_in) folded im2col, one matmul/tile + stats ----
    m1 = n * h1 * w1r
    m1_pad = _round_up(m1, 8)
    p1 = _im2col3x3(x0).reshape(m1, 9 * c_in)
    p1 = jnp.pad(p1, ((0, m1_pad - m1),
                      (0, LANES - 9 * c_in))).astype(jnp.bfloat16)
    y1, s1 = _conv3x3_matmul(p1, _conv_w_k(w1), zeros_row, zeros_row,
                             m_real=m1, c_out_pad=c_out_pad,
                             apply_input_act=False)
    scale1, shift1 = _stats_to_affine(s1, m1, g1, be1)

    # ---- conv2: BN1+ReLU fused into its input path (K-lane tiled affine) ---
    y1 = y1[:m1, :c_out].reshape(n, h1, w1r, c_out)
    m2 = n * h2 * w2r
    m2_pad = _round_up(m2, 8)
    p2 = _im2col3x3(y1).reshape(m2, 9 * c_out)
    p2 = jnp.pad(p2, ((0, m2_pad - m2),
                      (0, LANES - 9 * c_out))).astype(jnp.bfloat16)
    scale1_k = jnp.pad(jnp.tile(scale1, 9), (0, LANES - 9 * c_out)).reshape(1, LANES)
    shift1_k = jnp.pad(jnp.tile(shift1, 9), (0, LANES - 9 * c_out)).reshape(1, LANES)
    y2, s2 = _conv3x3_matmul(p2, _conv_w_k(w2), scale1_k, shift1_k,
                             m_real=m2, c_out_pad=c_out_pad,
                             apply_input_act=True)
    scale2, shift2 = _stats_to_affine(s2, m2, g2, be2)

    # ---- BN2 + ReLU in plain JAX on the sliced real window -----------------
    y2 = y2[:m2, :c_out].reshape(n, h2, w2r, c_out)
    out = jnp.maximum(y2 * scale2 + shift2, 0.0)
    return jnp.transpose(out, (0, 3, 1, 2))              # NHWC -> NCHW


# --------------------------- pure-JAX f32 reference ------------------------- #
def _reference(down_x, left_x, params):
    (w_up, b_up, w1, b1, g1, be1, w2, b2, g2, be2) = params
    n, _, h, w = down_x.shape
    c_out = w_up.shape[1]

    # ConvTranspose2d: out[n,d,2i+kh,2j+kw] = sum_c x[n,c,i,j] W[c,d,kh,kw] + b
    y = jnp.einsum('ncij,cdhw->ndihjw', down_x, w_up)
    y = y.reshape(n, c_out, 2 * h, 2 * w) + b_up[None, :, None, None]

    left_c = _center_crop_nchw(left_x, 2 * h, 2 * w)
    x = jnp.concatenate([y, left_c], axis=1)

    def block(x, wc, bc, g, be):
        yy = jax.lax.conv_general_dilated(
            x, wc, (1, 1), 'VALID',
            dimension_numbers=('NCHW', 'OIHW', 'NCHW'))
        yy = yy + bc[None, :, None, None]
        mean = yy.mean(axis=(0, 2, 3), keepdims=True)
        var = ((yy - mean) ** 2).mean(axis=(0, 2, 3), keepdims=True)
        yh = (yy - mean) / jnp.sqrt(var + BN_EPS)
        return jnp.maximum(yh * g[None, :, None, None] + be[None, :, None, None],
                           0.0)

    return block(block(x, w1, b1, g1, be1), w2, b2, g2, be2)


# ----------------------------------- main ------------------------------------ #
if __name__ == "__main__":
    N, IN_CH, OUT_CH = 2, 8, 4
    H_DOWN, W_DOWN = 16, 16            # down_input spatial
    H_LEFT, W_LEFT = 36, 36            # left_input spatial (center-cropped to 32)

    key = jax.random.PRNGKey(0)
    k_d, k_l, k_wu, k_bu, k_w1, k_b1, k_w2, k_b2 = jax.random.split(key, 8)

    down_x = jax.random.normal(k_d, (N, IN_CH, H_DOWN, W_DOWN), jnp.float32)
    left_x = jax.random.normal(k_l, (N, IN_CH - OUT_CH, H_LEFT, W_LEFT),
                               jnp.float32)

    # ConvTranspose2d(in=8, out=4, k=2, s=2): weight (in, out, 2, 2)
    w_up = 0.2 * jax.random.normal(k_wu, (IN_CH, OUT_CH, 2, 2), jnp.float32)
    b_up = 0.2 * jax.random.normal(k_bu, (OUT_CH,), jnp.float32)
    # double_conv(in=8, out=4)
    w1 = 0.1 * jax.random.normal(k_w1, (OUT_CH, IN_CH, 3, 3), jnp.float32)
    b1 = 0.1 * jax.random.normal(k_b1, (OUT_CH,), jnp.float32)
    w2 = 0.1 * jax.random.normal(k_w2, (OUT_CH, OUT_CH, 3, 3), jnp.float32)
    b2 = 0.1 * jax.random.normal(k_b2, (OUT_CH,), jnp.float32)
    # BatchNorm2d default init: weight=1, bias=0
    g1 = jnp.ones((OUT_CH,), jnp.float32); be1 = jnp.zeros((OUT_CH,), jnp.float32)
    g2 = jnp.ones((OUT_CH,), jnp.float32); be2 = jnp.zeros((OUT_CH,), jnp.float32)

    params = (w_up, b_up, w1, b1, g1, be1, w2, b2, g2, be2)

    out = jax.block_until_ready(jax.jit(up_conv_forward)(down_x, left_x, params))
    ref = jax.block_until_ready(_reference(down_x, left_x, params))

    assert out.shape == (N, OUT_CH, 2 * H_DOWN - 4, 2 * W_DOWN - 4), out.shape
    # bf16 MXU operands everywhere (f32 accumulate / f32 BN math) -> loose tol.
    np.testing.assert_allclose(np.asarray(out), np.asarray(ref),
                               rtol=2e-2, atol=3e-2)

    print("KERNEL_OK")
</pallas_src>

<mosaic_0001>
module attributes {stable_mosaic.version = 11 : i64} {
  func.func @_upconv_kernel(%arg0: i32, %arg1: memref<512x128xbf16, #tpu.memory_space<vmem>>, %arg2: memref<128x128xbf16, #tpu.memory_space<vmem>>, %arg3: memref<1x128xf32, #tpu.memory_space<vmem>>, %arg4: memref<512x128xf32, #tpu.memory_space<vmem>>) attributes {dimension_semantics = [#tpu.dimension_semantics<arbitrary>], iteration_bounds = array<i64: 1>, scalar_prefetch = 0 : i64, scratch_operands = 0 : i64, tpu.core_type = #tpu.core_type<tc>, window_params = [{pipeline_mode = #tpu.pipeline_mode<synchronous>, transform_indices = @transform_0, window_bounds = array<i64: 512, 128>}, {pipeline_mode = #tpu.pipeline_mode<synchronous>, transform_indices = @transform_1, window_bounds = array<i64: 128, 128>}, {pipeline_mode = #tpu.pipeline_mode<synchronous>, transform_indices = @transform_2, window_bounds = array<i64: 1, 128>}, {pipeline_mode = #tpu.pipeline_mode<synchronous>, transform_indices = @transform_3, window_bounds = array<i64: 512, 128>}]} {
    %c0 = arith.constant 0 : index
    %c0_0 = arith.constant 0 : index
    %0 = vector.load %arg1[%c0, %c0_0] : memref<512x128xbf16, #tpu.memory_space<vmem>>, vector<512x128xbf16>
    %c0_1 = arith.constant 0 : index
    %c0_2 = arith.constant 0 : index
    %1 = vector.load %arg2[%c0_1, %c0_2] : memref<128x128xbf16, #tpu.memory_space<vmem>>, vector<128x128xbf16>
    %cst = arith.constant dense<0.000000e+00> : vector<512x128xf32>
    %2 = tpu.matmul %0, %1, %cst {dimension_numbers = #tpu.dot_dimension_numbers<[1], [0], [0], [1], [0, 0, 1, 1], [], []>} : vector<512x128xbf16>, vector<128x128xbf16>, vector<512x128xf32> -> vector<512x128xf32>
    %c0_3 = arith.constant 0 : index
    %c0_4 = arith.constant 0 : index
    %3 = vector.load %arg3[%c0_3, %c0_4] : memref<1x128xf32, #tpu.memory_space<vmem>>, vector<1x128xf32>
    %4 = vector.broadcast %3 : vector<1x128xf32> to vector<512x128xf32>
    %5 = arith.addf %2, %4 : vector<512x128xf32>
    %c0_5 = arith.constant 0 : index
    %c0_6 = arith.constant 0 : index
    %6 = vector.load %arg4[%c0_5, %c0_6] : memref<512x128xf32, #tpu.memory_space<vmem>>, vector<512x128xf32>
    tpu.vector_store %arg4[%c0_5, %c0_6], %5 {strides = array<i32>} : memref<512x128xf32, #tpu.memory_space<vmem>>, vector<512x128xf32>,
    return
  }
  func.func @transform_0(%arg0: i32) -> (i32, i32) {
    %c0_i32 = arith.constant 0 : i32
    %c0_i32_0 = arith.constant 0 : i32
    %c0_i32_1 = arith.constant 0 : i32
    return %c0_i32, %c0_i32_0 : i32, i32
  }
  func.func @transform_1(%arg0: i32) -> (i32, i32) {
    %c0_i32 = arith.constant 0 : i32
    %c0_i32_0 = arith.constant 0 : i32
    %c0_i32_1 = arith.constant 0 : i32
    return %c0_i32, %c0_i32_0 : i32, i32
  }
  func.func @transform_2(%arg0: i32) -> (i32, i32) {
    %c0_i32 = arith.constant 0 : i32
    %c0_i32_0 = arith.constant 0 : i32
    %c0_i32_1 = arith.constant 0 : i32
    return %c0_i32, %c0_i32_0 : i32, i32
  }
  func.func @transform_3(%arg0: i32) -> (i32, i32) {
    %c0_i32 = arith.constant 0 : i32
    %c0_i32_0 = arith.constant 0 : i32
    %c0_i32_1 = arith.constant 0 : i32
    return %c0_i32, %c0_i32_0 : i32, i32
  }
}

module attributes {stable_mosaic.version = 11 : i64} {
  func.func @kernel(%arg0: i32, %arg1: memref<600x128xbf16, #tpu.memory_space<vmem>>, %arg2: memref<128x128xbf16, #tpu.memory_space<vmem>>, %arg3: memref<1x128xf32, #tpu.memory_space<vmem>>, %arg4: memref<1x128xf32, #tpu.memory_space<vmem>>, %arg5: memref<600x8xf32, #tpu.memory_space<vmem>>, %arg6: memref<1x2x128xf32, #tpu.memory_space<vmem>>) attributes {dimension_semantics = [#tpu.dimension_semantics<parallel>], iteration_bounds = array<i64: 3>, scalar_prefetch = 0 : i64, scratch_operands = 0 : i64, tpu.core_type = #tpu.core_type<tc>, window_params = [{transform_indices = @transform_0, window_bounds = array<i64: 600, 128>}, {pipeline_mode = #tpu.pipeline_mode<synchronous>, transform_indices = @transform_1, window_bounds = array<i64: 128, 128>}, {pipeline_mode = #tpu.pipeline_mode<synchronous>, transform_indices = @transform_2, window_bounds = array<i64: 1, 128>}, {pipeline_mode = #tpu.pipeline_mode<synchronous>, transform_indices = @transform_3, window_bounds = array<i64: 1, 128>}, {transform_indices = @transform_4, window_bounds = array<i64: 600, 8>}, {transform_indices = @transform_5, window_bounds = array<i64: 1, 2, 128>}]} {
    %c0 = arith.constant 0 : index
    %c0_0 = arith.constant 0 : index
    %0 = vector.load %arg1[%c0, %c0_0] : memref<600x128xbf16, #tpu.memory_space<vmem>>, vector<600x128xbf16>
    %c0_1 = arith.constant 0 : index
    %c0_2 = arith.constant 0 : index
    %1 = vector.load %arg2[%c0_1, %c0_2] : memref<128x128xbf16, #tpu.memory_space<vmem>>, vector<128x128xbf16>
    %cst = arith.constant dense<0.000000e+00> : vector<600x128xf32>
    %2 = tpu.matmul %0, %1, %cst {dimension_numbers = #tpu.dot_dimension_numbers<[1], [0], [0], [1], [0, 0, 1, 1], [], []>} : vector<600x128xbf16>, vector<128x128xbf16>, vector<600x128xf32> -> vector<600x128xf32>
    %3 = vector.extract_strided_slice %2 {offsets = [0, 0], sizes = [600, 8], strides = [1, 1]} : vector<600x128xf32> to vector<600x8xf32>
    %c0_3 = arith.constant 0 : index
    %c0_4 = arith.constant 0 : index
    %4 = vector.load %arg5[%c0_3, %c0_4] : memref<600x8xf32, #tpu.memory_space<vmem>>, vector<600x8xf32>
    tpu.vector_store %arg5[%c0_3, %c0_4], %3 {strides = array<i32>} : memref<600x8xf32, #tpu.memory_space<vmem>>, vector<600x8xf32>,
    %cst_5 = arith.constant dense<0.000000e+00> : vector<128xf32>
    %5 = vector.multi_reduction <add>, %2, %cst_5 [0] : vector<600x128xf32> to vector<128xf32>
    %6 = vector.shape_cast %5 : vector<128xf32> to vector<1x128xf32>
    %c0_6 = arith.constant 0 : index
    %c0_7 = arith.constant 0 : index
    %c0_8 = arith.constant 0 : index
    %7 = vector.load %arg6[%c0_6, %c0_7, %c0_8] : memref<1x2x128xf32, #tpu.memory_space<vmem>>, vector<1x1x128xf32>
    %8 = vector.shape_cast %7 : vector<1x1x128xf32> to vector<1x128xf32>
    %9 = vector.shape_cast %6 : vector<1x128xf32> to vector<1x1x128xf32>
    tpu.vector_store %arg6[%c0_6, %c0_7, %c0_8], %9 {strides = array<i32>} : memref<1x2x128xf32, #tpu.memory_space<vmem>>, vector<1x1x128xf32>,
    %10 = arith.mulf %2, %2 : vector<600x128xf32>
    %cst_9 = arith.constant dense<0.000000e+00> : vector<128xf32>
    %11 = vector.multi_reduction <add>, %10, %cst_9 [0] : vector<600x128xf32> to vector<128xf32>
    %12 = vector.shape_cast %11 : vector<128xf32> to vector<1x128xf32>
    %c0_10 = arith.constant 0 : index
    %c1 = arith.constant 1 : index
    %c0_11 = arith.constant 0 : index
    %13 = vector.load %arg6[%c0_10, %c1, %c0_11] : memref<1x2x128xf32, #tpu.memory_space<vmem>>, vector<1x1x128xf32>
    %14 = vector.shape_cast %13 : vector<1x1x128xf32> to vector<1x128xf32>
    %15 = vector.shape_cast %12 : vector<1x128xf32> to vector<1x1x128xf32>
    tpu.vector_store %arg6[%c0_10, %c1, %c0_11], %15 {strides = array<i32>} : memref<1x2x128xf32, #tpu.memory_space<vmem>>, vector<1x1x128xf32>,
    return
  }
  func.func @transform_0(%arg0: i32) -> (i32, i32) {
    %c0_i32 = arith.constant 0 : i32
    %c0_i32_0 = arith.constant 0 : i32
    return %arg0, %c0_i32 : i32, i32
  }
  func.func @transform_1(%arg0: i32) -> (i32, i32) {
    %c0_i32 = arith.constant 0 : i32
    %c0_i32_0 = arith.constant 0 : i32
    %c0_i32_1 = arith.constant 0 : i32
    return %c0_i32, %c0_i32_0 : i32, i32
  }
  func.func @transform_2(%arg0: i32) -> (i32, i32) {
    %c0_i32 = arith.constant 0 : i32
    %c0_i32_0 = arith.constant 0 : i32
    %c0_i32_1 = arith.constant 0 : i32
    return %c0_i32, %c0_i32_0 : i32, i32
  }
  func.func @transform_3(%arg0: i32) -> (i32, i32) {
    %c0_i32 = arith.constant 0 : i32
    %c0_i32_0 = arith.constant 0 : i32
    %c0_i32_1 = arith.constant 0 : i32
    return %c0_i32, %c0_i32_0 : i32, i32
  }
  func.func @transform_4(%arg0: i32) -> (i32, i32) {
    %c0_i32 = arith.constant 0 : i32
    %c0_i32_0 = arith.constant 0 : i32
    return %arg0, %c0_i32 : i32, i32
  }
  func.func @transform_5(%arg0: i32) -> (i32, i32, i32) {
    %c0_i32 = arith.constant 0 : i32
    %c0_i32_0 = arith.constant 0 : i32
    %c0_i32_1 = arith.constant 0 : i32
    return %arg0, %c0_i32, %c0_i32_0 : i32, i32, i32
  }
}

module attributes {stable_mosaic.version = 11 : i64} {
  func.func @kernel(%arg0: i32, %arg1: memref<784x128xbf16, #tpu.memory_space<vmem>>, %arg2: memref<128x128xbf16, #tpu.memory_space<vmem>>, %arg3: memref<1x128xf32, #tpu.memory_space<vmem>>, %arg4: memref<1x128xf32, #tpu.memory_space<vmem>>, %arg5: memref<784x8xf32, #tpu.memory_space<vmem>>, %arg6: memref<1x2x128xf32, #tpu.memory_space<vmem>>) attributes {dimension_semantics = [#tpu.dimension_semantics<parallel>], iteration_bounds = array<i64: 2>, scalar_prefetch = 0 : i64, scratch_operands = 0 : i64, tpu.core_type = #tpu.core_type<tc>, window_params = [{transform_indices = @transform_0, window_bounds = array<i64: 784, 128>}, {pipeline_mode = #tpu.pipeline_mode<synchronous>, transform_indices = @transform_1, window_bounds = array<i64: 128, 128>}, {pipeline_mode = #tpu.pipeline_mode<synchronous>, transform_indices = @transform_2, window_bounds = array<i64: 1, 128>}, {pipeline_mode = #tpu.pipeline_mode<synchronous>, transform_indices = @transform_3, window_bounds = array<i64: 1, 128>}, {transform_indices = @transform_4, window_bounds = array<i64: 784, 8>}, {transform_indices = @transform_5, window_bounds = array<i64: 1, 2, 128>}]} {
    %c0 = arith.constant 0 : index
    %c0_0 = arith.constant 0 : index
    %0 = vector.load %arg1[%c0, %c0_0] : memref<784x128xbf16, #tpu.memory_space<vmem>>, vector<784x128xbf16>
    %1 = arith.extf %0 : vector<784x128xbf16> to vector<784x128xf32>
    %c0_1 = arith.constant 0 : index
    %c0_2 = arith.constant 0 : index
    %2 = vector.load %arg3[%c0_1, %c0_2] : memref<1x128xf32, #tpu.memory_space<vmem>>, vector<1x128xf32>
    %3 = vector.broadcast %2 : vector<1x128xf32> to vector<784x128xf32>
    %4 = arith.mulf %1, %3 : vector<784x128xf32>
    %c0_3 = arith.constant 0 : index
    %c0_4 = arith.constant 0 : index
    %5 = vector.load %arg4[%c0_3, %c0_4] : memref<1x128xf32, #tpu.memory_space<vmem>>, vector<1x128xf32>
    %6 = vector.broadcast %5 : vector<1x128xf32> to vector<784x128xf32>
    %7 = arith.addf %4, %6 : vector<784x128xf32>
    %cst = arith.constant 0.000000e+00 : f32
    %8 = vector.broadcast %cst : f32 to vector<784x128xf32>
    %9 = arith.maximumf %7, %8 : vector<784x128xf32>
    %10 = arith.truncf %9 : vector<784x128xf32> to vector<784x128xbf16>
    %c0_5 = arith.constant 0 : index
    %c0_6 = arith.constant 0 : index
    %11 = vector.load %arg2[%c0_5, %c0_6] : memref<128x128xbf16, #tpu.memory_space<vmem>>, vector<128x128xbf16>
    %cst_7 = arith.constant dense<0.000000e+00> : vector<784x128xf32>
    %12 = tpu.matmul %10, %11, %cst_7 {dimension_numbers = #tpu.dot_dimension_numbers<[1], [0], [0], [1], [0, 0, 1, 1], [], []>} : vector<784x128xbf16>, vector<128x128xbf16>, vector<784x128xf32> -> vector<784x128xf32>
    %13 = vector.extract_strided_slice %12 {offsets = [0, 0], sizes = [784, 8], strides = [1, 1]} : vector<784x128xf32> to vector<784x8xf32>
    %c0_8 = arith.constant 0 : index
    %c0_9 = arith.constant 0 : index
    %14 = vector.load %arg5[%c0_8, %c0_9] : memref<784x8xf32, #tpu.memory_space<vmem>>, vector<784x8xf32>
    tpu.vector_store %arg5[%c0_8, %c0_9], %13 {strides = array<i32>} : memref<784x8xf32, #tpu.memory_space<vmem>>, vector<784x8xf32>,
    %cst_10 = arith.constant dense<0.000000e+00> : vector<128xf32>
    %15 = vector.multi_reduction <add>, %12, %cst_10 [0] : vector<784x128xf32> to vector<128xf32>
    %16 = vector.shape_cast %15 : vector<128xf32> to vector<1x128xf32>
    %c0_11 = arith.constant 0 : index
    %c0_12 = arith.constant 0 : index
    %c0_13 = arith.constant 0 : index
    %17 = vector.load %arg6[%c0_11, %c0_12, %c0_13] : memref<1x2x128xf32, #tpu.memory_space<vmem>>, vector<1x1x128xf32>
    %18 = vector.shape_cast %17 : vector<1x1x128xf32> to vector<1x128xf32>
    %19 = vector.shape_cast %16 : vector<1x128xf32> to vector<1x1x128xf32>
    tpu.vector_store %arg6[%c0_11, %c0_12, %c0_13], %19 {strides = array<i32>} : memref<1x2x128xf32, #tpu.memory_space<vmem>>, vector<1x1x128xf32>,
    %20 = arith.mulf %12, %12 : vector<784x128xf32>
    %cst_14 = arith.constant dense<0.000000e+00> : vector<128xf32>
    %21 = vector.multi_reduction <add>, %20, %cst_14 [0] : vector<784x128xf32> to vector<128xf32>
    %22 = vector.shape_cast %21 : vector<128xf32> to vector<1x128xf32>
    %c0_15 = arith.constant 0 : index
    %c1 = arith.constant 1 : index
    %c0_16 = arith.constant 0 : index
    %23 = vector.load %arg6[%c0_15, %c1, %c0_16] : memref<1x2x128xf32, #tpu.memory_space<vmem>>, vector<1x1x128xf32>
    %24 = vector.shape_cast %23 : vector<1x1x128xf32> to vector<1x128xf32>
    %25 = vector.shape_cast %22 : vector<1x128xf32> to vector<1x1x128xf32>
    tpu.vector_store %arg6[%c0_15, %c1, %c0_16], %25 {strides = array<i32>} : memref<1x2x128xf32, #tpu.memory_space<vmem>>, vector<1x1x128xf32>,
    return
  }
  func.func @transform_0(%arg0: i32) -> (i32, i32) {
    %c0_i32 = arith.constant 0 : i32
    %c0_i32_0 = arith.constant 0 : i32
    return %arg0, %c0_i32 : i32, i32
  }
  func.func @transform_1(%arg0: i32) -> (i32, i32) {
    %c0_i32 = arith.constant 0 : i32
    %c0_i32_0 = arith.constant 0 : i32
    %c0_i32_1 = arith.constant 0 : i32
    return %c0_i32, %c0_i32_0 : i32, i32
  }
  func.func @transform_2(%arg0: i32) -> (i32, i32) {
    %c0_i32 = arith.constant 0 : i32
    %c0_i32_0 = arith.constant 0 : i32
    %c0_i32_1 = arith.constant 0 : i32
    return %c0_i32, %c0_i32_0 : i32, i32
  }
  func.func @transform_3(%arg0: i32) -> (i32, i32) {
    %c0_i32 = arith.constant 0 : i32
    %c0_i32_0 = arith.constant 0 : i32
    %c0_i32_1 = arith.constant 0 : i32
    return %c0_i32, %c0_i32_0 : i32, i32
  }
  func.func @transform_4(%arg0: i32) -> (i32, i32) {
    %c0_i32 = arith.constant 0 : i32
    %c0_i32_0 = arith.constant 0 : i32
    return %arg0, %c0_i32 : i32, i32
  }
  func.func @transform_5(%arg0: i32) -> (i32, i32, i32) {
    %c0_i32 = arith.constant 0 : i32
    %c0_i32_0 = arith.constant 0 : i32
    %c0_i32_1 = arith.constant 0 : i32
    return %arg0, %c0_i32, %c0_i32_0 : i32, i32, i32
  }
}

</mosaic_0001>

<llo_original>
// kernel: tile.18
$region0: #{tile.18}
  #allocation2 [shape = 's32[1]{0}', space=sflag, size = 0x4, scoped, tag = 'scoped memory for tile.18']
  %s0 = inlined_call_operand.hbm [shape: f32[4], index: 0, kind: input, shape index: {}]
  %s1 = inlined_call_operand.vmem [shape: f32[4,4], index: 1, kind: output, shape index: {}]
  $region1: #{tile.18} parent=0
    #allocation0 [shape = 'u8[512]{0}', space=vmem, size = 0x400, scoped, tag = 'operand span for operand 0']
    #allocation1 [shape = 's32[1]{0}', space=sflag, size = 0x4, scoped, tag = 'scoped memory for tile.18']
    %2 = vsyncpa [#allocation1], 0
    // Predicated region
    $region2: #{tile.18} parent=1 // pred_check
      _
    $region3: #{tile.18} parent=1 // pred_check_branch
      %4 = sbr.rel (0) target = $region5
    $region4: #{tile.18} parent=1 // pred_region
      %s6 = ssub.s32 16, 16
      %7 = vsyncadd [#allocation1], %s6
      %s9 = sshll.u32 [#allocation0], 4
      %s10 = int_to_ptr.vmem [resolvable:$true] %s9
      %12 = dma.hbm_to_vmem [thread:$0]  %s0, 16, %s10, [#allocation1]
    $region5: #{tile.18} parent=1 // pred_fallthru
      _
    // Predicated region
    $region6: #{tile.18} parent=1 // pred_check
      _
    $region7: #{tile.18} parent=1 // pred_check_branch
      %14 = sbr.rel (0) target = $region9
    $region8: #{tile.18} parent=1 // pred_region
      %15 = dma.done [#allocation1], 16
    $region9: #{tile.18} parent=1 // pred_fallthru
      _
    %v16 = vld [vmem:[#allocation0] ss:$0 sm:$0xff]
    %17 = vst [vmem:[%s1] sm:$0xf] %v16
    %18 = vsyncpa [#allocation1], 1

// kernel: tile.19
$region0: #{tile.19}
  %s0 = inlined_call_operand.vmem [shape: f32[4,4], index: 0, kind: input, shape index: {}]
  %s1 = inlined_call_operand.vmem [shape: f32[16], index: 1, kind: output, shape index: {}]
  $region1: #{tile.19} parent=0
    #allocation0 [shape = 'u8[4096]{0}', space=vmem, size = 0x1000, scoped, tag = 'scoped mem for output reshape']
    #allocation1 [shape = 'u8[4096]{0}', space=vmem, size = 0x1000, scoped, tag = 'scoped mem for input reshape']
    %s3 = sshllo.u32 0, 4
    %v4 = vld [vmem:[%s0] sm:%s3]
    %5 = vst [vmem:[#allocation1] sm:%s3] %v4
    %v6 = vld [vmem:[#allocation1] sm:$0x1]
    %vm7 = vcmask 31744
    %8 = vst.msk [vmem:[#allocation0] sm:$0x1] %vm7, %v6
    %s9 = scalar_lea.vmem [#allocation1], 3
    %v10 = vld [vmem:[%s9] sm:$0x1]
    %11 = vrot.lane.b32.xlu0 %v10, 12
    %v12 = vpop.permute.xlu0 %11
    %vm13 = vcmask 130144
    %14 = vst.msk [vmem:[#allocation0] sm:$0x1] %vm13, %v12
    %s15 = scalar_lea.vmem [#allocation1], 2
    %v16 = vld [vmem:[%s15] sm:$0x1]
    %17 = vrot.lane.b32.xlu0 %v16, 8
    %v18 = vpop.permute.xlu0 %17
    %vm19 = vcmask 97344
    %20 = vst.msk [vmem:[#allocation0] sm:$0x1] %vm19, %v18
    %s21 = scalar_lea.vmem [#allocation1], 1
    %v22 = vld [vmem:[%s21] sm:$0x1]
    %23 = vrot.lane.b32.xlu0 %v22, 4
    %v24 = vpop.permute.xlu0 %23
    %vm25 = vcmask 64544
    %26 = vst.msk [vmem:[#allocation0] sm:$0x1] %vm25, %v24
    %s28 = sshllo.u32 0, 1
    %v30 = vld [vmem:[#allocation0] sm:%s28]
    %s31 = sshllo.u32 0, 1
    %32 = vst [vmem:[%s1] sm:%s31] %v30

// kernel: up_conv_forward.3
$region0: #{up_conv_forward.3}
  #allocation0 [shape = 'u32[]', space=smem, size = 0x4, offset = 0x4, fixed_abs, tag = 'smem constant byte address 0x4 - core index']
  #allocation1 [shape = 'u32[144,128]{1,0:T(1,128)}', space=vmem, size = 0x12000, scoped, tag = 'internal scratch']
  %s0 = inlined_call_operand.vmem [shape: bf16[512,128], index: 0, kind: input, shape index: {}]
  %s1 = inlined_call_operand.vmem [shape: bf16[128,128], index: 1, kind: input, shape index: {}]
  %s2 = inlined_call_operand.vmem [shape: f32[1,128], index: 2, kind: input, shape index: {}]
  %s3 = inlined_call_operand.vmem [shape: f32[512,128], index: 3, kind: output, shape index: {}]
  %s4 = sld [smem:[#allocation0]]
  $region22: #{up_conv_forward.3} parent=0
    _
  %s6 = ssub.s32 1, %s4
  %s7 = scalar_select 0, %s6, %s4
  // Predicated region
  $region2: #{up_conv_forward.3} parent=0 // pred_check
    _
  $region3: #{up_conv_forward.3} parent=0 // pred_check_branch
    %9 = sbr.rel (0) target = $region5
  $region4: #{up_conv_forward.3} parent=0 // pred_region
    _
  $region5: #{up_conv_forward.3} parent=0 // pred_fallthru
    _
  // Predicated region
  $region6: #{up_conv_forward.3} parent=0 // pred_check
    _
  $region7: #{up_conv_forward.3} parent=0 // pred_check_branch
    %11 = sbr.rel (0) target = $region9
  $region8: #{up_conv_forward.3} parent=0 // pred_region
    _
  $region9: #{up_conv_forward.3} parent=0 // pred_fallthru
    _
  // Predicated region
  $region10: #{up_conv_forward.3} parent=0 // pred_check
    _
  $region11: #{up_conv_forward.3} parent=0 // pred_check_branch
    %13 = sbr.rel (0) target = $region13
  $region12: #{up_conv_forward.3} parent=0 // pred_region
    _
  $region13: #{up_conv_forward.3} parent=0 // pred_fallthru
    _
  %v15 = vld [vmem:[%s0] sm:$0xf]
  %v16 = vld [vmem:[%s0 + $0x4] sm:$0xf]
  %v17 = vld [vmem:[%s0 + $0x8] sm:$0xf]
  %v18 = vld [vmem:[%s0 + $0xc] sm:$0xf]
  %v19 = vld [vmem:[%s0 + $0x10] sm:$0xf]
  %v20 = vld [vmem:[%s0 + $0x14] sm:$0xf]
  %v21 = vld [vmem:[%s0 + $0x18] sm:$0xf]
  %v22 = vld [vmem:[%s0 + $0x1c] sm:$0xf]
  %v23 = vld [vmem:[%s0 + $0x20] sm:$0xf]
  %v24 = vld [vmem:[%s0 + $0x24] sm:$0xf]
  %v25 = vld [vmem:[%s0 + $0x28] sm:$0xf]
  %v26 = vld [vmem:[%s0 + $0x2c] sm:$0xf]
  %v27 = vld [vmem:[%s0 + $0x30] sm:$0xf]
  %v28 = vld [vmem:[%s0 + $0x34] sm:$0xf]
  %v29 = vld [vmem:[%s0 + $0x38] sm:$0xf]
  %v30 = vld [vmem:[%s0 + $0x3c] sm:$0xf]
  %v31 = vld [vmem:[%s0 + $0x40] sm:$0xf]
  %v32 = vld [vmem:[%s0 + $0x44] sm:$0xf]
  %v33 = vld [vmem:[%s0 + $0x48] sm:$0xf]
  %v34 = vld [vmem:[%s0 + $0x4c] sm:$0xf]
  %v35 = vld [vmem:[%s0 + $0x50] sm:$0xf]
  %v36 = vld [vmem:[%s0 + $0x54] sm:$0xf]
  %v37 = vld [vmem:[%s0 + $0x58] sm:$0xf]
  %v38 = vld [vmem:[%s0 + $0x5c] sm:$0xf]
  %v39 = vld [vmem:[%s0 + $0x60] sm:$0xf]
  %v40 = vld [vmem:[%s0 + $0x64] sm:$0xf]
  %v41 = vld [vmem:[%s0 + $0x68] sm:$0xf]
  %v42 = vld [vmem:[%s0 + $0x6c] sm:$0xf]
  %v43 = vld [vmem:[%s0 + $0x70] sm:$0xf]
  %v44 = vld [vmem:[%s0 + $0x74] sm:$0xf]
  %v45 = vld [vmem:[%s0 + $0x78] sm:$0xf]
  %v46 = vld [vmem:[%s0 + $0x7c] sm:$0xf]
  %v47 = vld [vmem:[%s0 + $0x80] sm:$0xf]
  %v48 = vld [vmem:[%s0 + $0x84] sm:$0xf]
  %v49 = vld [vmem:[%s0 + $0x88] sm:$0xf]
  %v50 = vld [vmem:[%s0 + $0x8c] sm:$0xf]
  %v51 = vld [vmem:[%s0 + $0x90] sm:$0xf]
  %v52 = vld [vmem:[%s0 + $0x94] sm:$0xf]
  %v53 = vld [vmem:[%s0 + $0x98] sm:$0xf]
  %v54 = vld [vmem:[%s0 + $0x9c] sm:$0xf]
  %v55 = vld [vmem:[%s0 + $0xa0] sm:$0xf]
  %v56 = vld [vmem:[%s0 + $0xa4] sm:$0xf]
  %v57 = vld [vmem:[%s0 + $0xa8] sm:$0xf]
  %v58 = vld [vmem:[%s0 + $0xac] sm:$0xf]
  %v59 = vld [vmem:[%s0 + $0xb0] sm:$0xf]
  %v60 = vld [vmem:[%s0 + $0xb4] sm:$0xf]
  %v61 = vld [vmem:[%s0 + $0xb8] sm:$0xf]
  %v62 = vld [vmem:[%s0 + $0xbc] sm:$0xf]
  %v63 = vld [vmem:[%s0 + $0xc0] sm:$0xf]
  %v64 = vld [vmem:[%s0 + $0xc4] sm:$0xf]
  %v65 = vld [vmem:[%s0 + $0xc8] sm:$0xf]
  %v66 = vld [vmem:[%s0 + $0xcc] sm:$0xf]
  %v67 = vld [vmem:[%s0 + $0xd0] sm:$0xf]
  %v68 = vld [vmem:[%s0 + $0xd4] sm:$0xf]
  %v69 = vld [vmem:[%s0 + $0xd8] sm:$0xf]
  %v70 = vld [vmem:[%s0 + $0xdc] sm:$0xf]
  %v71 = vld [vmem:[%s0 + $0xe0] sm:$0xf]
  %v72 = vld [vmem:[%s0 + $0xe4] sm:$0xf]
  %v73 = vld [vmem:[%s0 + $0xe8] sm:$0xf]
  %v74 = vld [vmem:[%s0 + $0xec] sm:$0xf]
  %v75 = vld [vmem:[%s0 + $0xf0] sm:$0xf]
  %v76 = vld [vmem:[%s0 + $0xf4] sm:$0xf]
  %v77 = vld [vmem:[%s0 + $0xf8] sm:$0xf]
  %v78 = vld [vmem:[%s0 + $0xfc] sm:$0xf]
  %v79 = vld [vmem:[%s1] sm:$0xf]
  %v80 = vld [vmem:[%s1 + $0x4] sm:$0xf]
  %v81 = vld [vmem:[%s1 + $0x8] sm:$0xf]
  %v82 = vld [vmem:[%s1 + $0xc] sm:$0xf]
  %v83 = vld [vmem:[%s1 + $0x10] sm:$0xf]
  %v84 = vld [vmem:[%s1 + $0x14] sm:$0xf]
  %v85 = vld [vmem:[%s1 + $0x18] sm:$0xf]
  %v86 = vld [vmem:[%s1 + $0x1c] sm:$0xf]
  %v87 = vld [vmem:[%s1 + $0x20] sm:$0xf]
  %v88 = vld [vmem:[%s1 + $0x24] sm:$0xf]
  %v89 = vld [vmem:[%s1 + $0x28] sm:$0xf]
  %v90 = vld [vmem:[%s1 + $0x2c] sm:$0xf]
  %v91 = vld [vmem:[%s1 + $0x30] sm:$0xf]
  %v92 = vld [vmem:[%s1 + $0x34] sm:$0xf]
  %v93 = vld [vmem:[%s1 + $0x38] sm:$0xf]
  %v94 = vld [vmem:[%s1 + $0x3c] sm:$0xf]
  %v95 = vld [vmem:[%s2] sm:$0x1]
  %v97 = vlaneseq
  %v98 = vshrl.u32 %v97, 7
  %v99 = vsub.s32 0, %v98
  %v100 = vrot.slane %v95, %v99
  %v166 = vunpack.c.l.b16 %v15
  %v167 = vunpack.c.l.b16 %v16
  %v168 = vunpack.c.l.b16 %v17
  %v169 = vunpack.c.l.b16 %v18
  %v170 = vunpack.c.l.b16 %v19
  %v171 = vunpack.c.l.b16 %v20
  %v172 = vunpack.c.l.b16 %v21
  %v173 = vunpack.c.l.b16 %v22
  %v174 = vunpack.c.l.b16 %v23
  %v175 = vunpack.c.l.b16 %v24
  %v176 = vunpack.c.l.b16 %v25
  %v177 = vunpack.c.l.b16 %v26
  %v178 = vunpack.c.l.b16 %v27
  %v179 = vunpack.c.l.b16 %v28
  %v180 = vunpack.c.l.b16 %v29
  %v181 = vunpack.c.l.b16 %v30
  %v182 = vunpack.c.l.b16 %v31
  %v183 = vunpack.c.l.b16 %v32
  %v184 = vunpack.c.l.b16 %v33
  %v185 = vunpack.c.l.b16 %v34
  %v186 = vunpack.c.l.b16 %v35
  %v187 = vunpack.c.l.b16 %v36
  %v188 = vunpack.c.l.b16 %v37
  %v189 = vunpack.c.l.b16 %v38
  %v190 = vunpack.c.l.b16 %v39
  %v191 = vunpack.c.l.b16 %v40
  %v192 = vunpack.c.l.b16 %v41
  %v193 = vunpack.c.l.b16 %v42
  %v194 = vunpack.c.l.b16 %v43
  %v195 = vunpack.c.l.b16 %v44
  %v196 = vunpack.c.l.b16 %v45
  %v197 = vunpack.c.l.b16 %v46
  %v198 = vunpack.c.l.b16 %v47
  %v199 = vunpack.c.l.b16 %v48
  %v200 = vunpack.c.l.b16 %v49
  %v201 = vunpack.c.l.b16 %v50
  %v202 = vunpack.c.l.b16 %v51
  %v203 = vunpack.c.l.b16 %v52
  %v204 = vunpack.c.l.b16 %v53
  %v205 = vunpack.c.l.b16 %v54
  %v206 = vunpack.c.l.b16 %v55
  %v207 = vunpack.c.l.b16 %v56
  %v208 = vunpack.c.l.b16 %v57
  %v209 = vunpack.c.l.b16 %v58
  %v210 = vunpack.c.l.b16 %v59
  %v211 = vunpack.c.l.b16 %v60
  %v212 = vunpack.c.l.b16 %v61
  %v213 = vunpack.c.l.b16 %v62
  %v214 = vunpack.c.l.b16 %v63
  %v215 = vunpack.c.l.b16 %v64
  %v216 = vunpack.c.l.b16 %v65
  %v217 = vunpack.c.l.b16 %v66
  %v218 = vunpack.c.l.b16 %v67
  %v219 = vunpack.c.l.b16 %v68
  %v220 = vunpack.c.l.b16 %v69
  %v221 = vunpack.c.l.b16 %v70
  %v222 = vunpack.c.l.b16 %v71
  %v223 = vunpack.c.l.b16 %v72
  %v224 = vunpack.c.l.b16 %v73
  %v225 = vunpack.c.l.b16 %v74
  %v226 = vunpack.c.l.b16 %v75
  %v227 = vunpack.c.l.b16 %v76
  %v228 = vunpack.c.l.b16 %v77
  %v229 = vunpack.c.l.b16 %v78
  %v230 = vpack.c.b16 %v167, %v166
  %v231 = vpack.c.b16 %v169, %v168
  %v232 = vpack.c.b16 %v171, %v170
  %v233 = vpack.c.b16 %v173, %v172
  %v234 = vpack.c.b16 %v175, %v174
  %v235 = vpack.c.b16 %v177, %v176
  %v236 = vpack.c.b16 %v179, %v178
  %v237 = vpack.c.b16 %v181, %v180
  %v238 = vpack.c.b16 %v183, %v182
  %v239 = vpack.c.b16 %v185, %v184
  %v240 = vpack.c.b16 %v187, %v186
  %v241 = vpack.c.b16 %v189, %v188
  %v242 = vpack.c.b16 %v191, %v190
  %v243 = vpack.c.b16 %v193, %v192
  %v244 = vpack.c.b16 %v195, %v194
  %v245 = vpack.c.b16 %v197, %v196
  %v246 = vpack.c.b16 %v199, %v198
  %v247 = vpack.c.b16 %v201, %v200
  %v248 = vpack.c.b16 %v203, %v202
  %v249 = vpack.c.b16 %v205, %v204
  %v250 = vpack.c.b16 %v207, %v206
  %v251 = vpack.c.b16 %v209, %v208
  %v252 = vpack.c.b16 %v211, %v210
  %v253 = vpack.c.b16 %v213, %v212
  %v254 = vpack.c.b16 %v215, %v214
  %v255 = vpack.c.b16 %v217, %v216
  %v256 = vpack.c.b16 %v219, %v218
  %v257 = vpack.c.b16 %v221, %v220
  %v258 = vpack.c.b16 %v223, %v222
  %v259 = vpack.c.b16 %v225, %v224
  %v260 = vpack.c.b16 %v227, %v226
  %v261 = vpack.c.b16 %v229, %v228
  %v310 = vunpack.c.l.b16 %v79
  %v311 = vunpack.c.l.b16 %v80
  %v312 = vunpack.c.l.b16 %v81
  %v313 = vunpack.c.l.b16 %v82
  %v314 = vunpack.c.l.b16 %v83
  %v315 = vunpack.c.l.b16 %v84
  %v316 = vunpack.c.l.b16 %v85
  %v317 = vunpack.c.l.b16 %v86
  %v318 = vunpack.c.l.b16 %v87
  %v319 = vunpack.c.l.b16 %v88
  %v320 = vunpack.c.l.b16 %v89
  %v321 = vunpack.c.l.b16 %v90
  %v322 = vunpack.c.l.b16 %v91
  %v323 = vunpack.c.l.b16 %v92
  %v324 = vunpack.c.l.b16 %v93
  %v325 = vunpack.c.l.b16 %v94
  %v326 = vpack.c.b16 %v311, %v310
  %v327 = vpack.c.b16 %v313, %v312
  %v328 = vpack.c.b16 %v315, %v314
  %v329 = vpack.c.b16 %v317, %v316
  %v330 = vpack.c.b16 %v319, %v318
  %v331 = vpack.c.b16 %v321, %v320
  %v332 = vpack.c.b16 %v323, %v322
  %v333 = vpack.c.b16 %v325, %v324
  %342 = vmatprep.subr.bf16.mxu0 0
  %343 = vmatpush1.bf16.msra.mxu0 %v326
  %344 = vmatprep.subr.bf16.mxu0 0
  %345 = vmatpush1.bf16.msra.mxu0 %v327
  %346 = vmatprep.subr.bf16.mxu0 0
  %347 = vmatpush1.bf16.msra.mxu0 %v328
  %348 = vmatprep.subr.bf16.mxu0 0
  %349 = vmatpush1.bf16.msra.mxu0 %v329
  %350 = vmatprep.subr.bf16.mxu0 0
  %351 = vmatpush1.bf16.msra.mxu0 %v330
  %352 = vmatprep.subr.bf16.mxu0 0
  %353 = vmatpush1.bf16.msra.mxu0 %v331
  %354 = vmatprep.subr.bf16.mxu0 0
  %355 = vmatpush1.bf16.msra.mxu0 %v332
  %356 = vmatprep.subr.bf16.mxu0 0
  %357 = vmatpush1.bf16.msra.mxu0 %v333
  %358 = vmatprep.subr.bf16.mxu0 0
  %359 = vmatpush1.bf16.msra.mxu0 0
  %360 = vmatprep.subr.bf16.mxu0 0
  %361 = vmatpush1.bf16.msra.mxu0 0
  %362 = vmatprep.subr.bf16.mxu0 0
  %363 = vmatpush1.bf16.msra.mxu0 0
  %364 = vmatprep.subr.bf16.mxu0 0
  %365 = vmatpush1.bf16.msra.mxu0 0
  %366 = vmatprep.subr.bf16.mxu0 0
  %367 = vmatpush1.bf16.msra.mxu0 0
  %368 = vmatprep.subr.bf16.mxu0 0
  %369 = vmatpush1.bf16.msra.mxu0 0
  %370 = vmatprep.subr.bf16.mxu0 0
  %371 = vmatpush1.bf16.msra.mxu0 0
  %372 = vmatprep.subr.bf16.mxu0 0
  %373 = vmatpush1.bf16.msra.mxu0 0
  %374 = vmatprep.mubr.bf16.mxu0 0
  %375 = vmatmul.mubr.bf16.gmra.mrb[0].mxu0 %v230
  %v376 = vpop.f32.mrb[0].mxu0
  %v377 = vadd.f32 %v100, %v376
  %v378 = vpop.f32.mrb[0].mxu0
  %v379 = vpop.f32.mrb[0].mxu0
  %v380 = vadd.f32 %v100, %v379
  %v381 = vpop.f32.mrb[0].mxu0
  %382 = vmatprep.mubr.bf16.mxu0 0
  %383 = vmatmul.mubr.bf16.gmra.mrb[0].mxu0 %v231
  %v384 = vpop.f32.mrb[0].mxu0
  %v385 = vadd.f32 %v100, %v384
  %v386 = vpop.f32.mrb[0].mxu0
  %v387 = vpop.f32.mrb[0].mxu0
  %v388 = vadd.f32 %v100, %v387
  %v389 = vpop.f32.mrb[0].mxu0
  %390 = vmatprep.mubr.bf16.mxu0 0
  %391 = vmatmul.mubr.bf16.gmra.mrb[0].mxu0 %v232
  %v392 = vpop.f32.mrb[0].mxu0
  %v393 = vadd.f32 %v100, %v392
  %v394 = vpop.f32.mrb[0].mxu0
  %v395 = vpop.f32.mrb[0].mxu0
  %v396 = vadd.f32 %v100, %v395
  %v397 = vpop.f32.mrb[0].mxu0
  %398 = vmatprep.mubr.bf16.mxu0 0
  %399 = vmatmul.mubr.bf16.gmra.mrb[0].mxu0 %v233
  %v400 = vpop.f32.mrb[0].mxu0
  %v401 = vadd.f32 %v100, %v400
  %v402 = vpop.f32.mrb[0].mxu0
  %v403 = vpop.f32.mrb[0].mxu0
  %v404 = vadd.f32 %v100, %v403
  %v405 = vpop.f32.mrb[0].mxu0
  %406 = vmatprep.mubr.bf16.mxu0 0
  %407 = vmatmul.mubr.bf16.gmra.mrb[0].mxu0 %v234
  %v408 = vpop.f32.mrb[0].mxu0
  %v409 = vadd.f32 %v100, %v408
  %v410 = vpop.f32.mrb[0].mxu0
  %v411 = vpop.f32.mrb[0].mxu0
  %v412 = vadd.f32 %v100, %v411
  %v413 = vpop.f32.mrb[0].mxu0
  %414 = vmatprep.mubr.bf16.mxu0 0
  %415 = vmatmul.mubr.bf16.gmra.mrb[0].mxu0 %v235
  %v416 = vpop.f32.mrb[0].mxu0
  %v417 = vadd.f32 %v100, %v416
  %v418 = vpop.f32.mrb[0].mxu0
  %v419 = vpop.f32.mrb[0].mxu0
  %v420 = vadd.f32 %v100, %v419
  %v421 = vpop.f32.mrb[0].mxu0
  %422 = vmatprep.mubr.bf16.mxu0 0
  %423 = vmatmul.mubr.bf16.gmra.mrb[0].mxu0 %v236
  %v424 = vpop.f32.mrb[0].mxu0
  %v425 = vadd.f32 %v100, %v424
  %v426 = vpop.f32.mrb[0].mxu0
  %v427 = vpop.f32.mrb[0].mxu0
  %v428 = vadd.f32 %v100, %v427
  %v429 = vpop.f32.mrb[0].mxu0
  %430 = vmatprep.mubr.bf16.mxu0 0
  %431 = vmatmul.mubr.bf16.gmra.mrb[0].mxu0 %v237
  %v432 = vpop.f32.mrb[0].mxu0
  %v433 = vadd.f32 %v100, %v432
  %v434 = vpop.f32.mrb[0].mxu0
  %v435 = vpop.f32.mrb[0].mxu0
  %v436 = vadd.f32 %v100, %v435
  %v437 = vpop.f32.mrb[0].mxu0
  %438 = vmatprep.mubr.bf16.mxu0 0
  %439 = vmatmul.mubr.bf16.gmra.mrb[0].mxu0 %v238
  %v440 = vpop.f32.mrb[0].mxu0
  %v441 = vadd.f32 %v100, %v440
  %v442 = vpop.f32.mrb[0].mxu0
  %v443 = vpop.f32.mrb[0].mxu0
  %v444 = vadd.f32 %v100, %v443
  %v445 = vpop.f32.mrb[0].mxu0
  %446 = vmatprep.mubr.bf16.mxu0 0
  %447 = vmatmul.mubr.bf16.gmra.mrb[0].mxu0 %v239
  %v448 = vpop.f32.mrb[0].mxu0
  %v449 = vadd.f32 %v100, %v448
  %v450 = vpop.f32.mrb[0].mxu0
  %v451 = vpop.f32.mrb[0].mxu0
  %v452 = vadd.f32 %v100, %v451
  %v453 = vpop.f32.mrb[0].mxu0
  %454 = vmatprep.mubr.bf16.mxu0 0
  %455 = vmatmul.mubr.bf16.gmra.mrb[0].mxu0 %v240
  %v456 = vpop.f32.mrb[0].mxu0
  %v457 = vadd.f32 %v100, %v456
  %v458 = vpop.f32.mrb[0].mxu0
  %v459 = vpop.f32.mrb[0].mxu0
  %v460 = vadd.f32 %v100, %v459
  %v461 = vpop.f32.mrb[0].mxu0
  %462 = vmatprep.mubr.bf16.mxu0 0
  %463 = vmatmul.mubr.bf16.gmra.mrb[0].mxu0 %v241
  %v464 = vpop.f32.mrb[0].mxu0
  %v465 = vadd.f32 %v100, %v464
  %v466 = vpop.f32.mrb[0].mxu0
  %v467 = vpop.f32.mrb[0].mxu0
  %v468 = vadd.f32 %v100, %v467
  %v469 = vpop.f32.mrb[0].mxu0
  %470 = vmatprep.mubr.bf16.mxu0 0
  %471 = vmatmul.mubr.bf16.gmra.mrb[0].mxu0 %v242
  %v472 = vpop.f32.mrb[0].mxu0
  %v473 = vadd.f32 %v100, %v472
  %v474 = vpop.f32.mrb[0].mxu0
  %v475 = vpop.f32.mrb[0].mxu0
  %v476 = vadd.f32 %v100, %v475
  %v477 = vpop.f32.mrb[0].mxu0
  %478 = vmatprep.mubr.bf16.mxu0 0
  %479 = vmatmul.mubr.bf16.gmra.mrb[0].mxu0 %v243
  %v480 = vpop.f32.mrb[0].mxu0
  %v481 = vadd.f32 %v100, %v480
  %v482 = vpop.f32.mrb[0].mxu0
  %v483 = vpop.f32.mrb[0].mxu0
  %v484 = vadd.f32 %v100, %v483
  %v485 = vpop.f32.mrb[0].mxu0
  %486 = vmatprep.mubr.bf16.mxu0 0
  %487 = vmatmul.mubr.bf16.gmra.mrb[0].mxu0 %v244
  %v488 = vpop.f32.mrb[0].mxu0
  %v489 = vadd.f32 %v100, %v488
  %v490 = vpop.f32.mrb[0].mxu0
  %v491 = vpop.f32.mrb[0].mxu0
  %v492 = vadd.f32 %v100, %v491
  %v493 = vpop.f32.mrb[0].mxu0
  %494 = vmatprep.mubr.bf16.mxu0 0
  %495 = vmatmul.mubr.bf16.gmra.mrb[0].mxu0 %v245
  %v496 = vpop.f32.mrb[0].mxu0
  %v497 = vadd.f32 %v100, %v496
  %v498 = vpop.f32.mrb[0].mxu0
  %v499 = vpop.f32.mrb[0].mxu0
  %v500 = vadd.f32 %v100, %v499
  %v501 = vpop.f32.mrb[0].mxu0
  %502 = vmatprep.mubr.bf16.mxu0 0
  %503 = vmatmul.mubr.bf16.gmra.mrb[0].mxu0 %v246
  %v504 = vpop.f32.mrb[0].mxu0
  %v505 = vadd.f32 %v100, %v504
  %v506 = vpop.f32.mrb[0].mxu0
  %v507 = vpop.f32.mrb[0].mxu0
  %v508 = vadd.f32 %v100, %v507
  %v509 = vpop.f32.mrb[0].mxu0
  %510 = vmatprep.mubr.bf16.mxu0 0
  %511 = vmatmul.mubr.bf16.gmra.mrb[0].mxu0 %v247
  %v512 = vpop.f32.mrb[0].mxu0
  %v513 = vadd.f32 %v100, %v512
  %v514 = vpop.f32.mrb[0].mxu0
  %v515 = vpop.f32.mrb[0].mxu0
  %v516 = vadd.f32 %v100, %v515
  %v517 = vpop.f32.mrb[0].mxu0
  %518 = vmatprep.mubr.bf16.mxu0 0
  %519 = vmatmul.mubr.bf16.gmra.mrb[0].mxu0 %v248
  %v520 = vpop.f32.mrb[0].mxu0
  %v521 = vadd.f32 %v100, %v520
  %v522 = vpop.f32.mrb[0].mxu0
  %v523 = vpop.f32.mrb[0].mxu0
  %v524 = vadd.f32 %v100, %v523
  %v525 = vpop.f32.mrb[0].mxu0
  %526 = vmatprep.mubr.bf16.mxu0 0
  %527 = vmatmul.mubr.bf16.gmra.mrb[0].mxu0 %v249
  %v528 = vpop.f32.mrb[0].mxu0
  %v529 = vadd.f32 %v100, %v528
  %v530 = vpop.f32.mrb[0].mxu0
  %v531 = vpop.f32.mrb[0].mxu0
  %v532 = vadd.f32 %v100, %v531
  %v533 = vpop.f32.mrb[0].mxu0
  %534 = vmatprep.mubr.bf16.mxu0 0
  %535 = vmatmul.mubr.bf16.gmra.mrb[0].mxu0 %v250
  %v536 = vpop.f32.mrb[0].mxu0
  %v537 = vadd.f32 %v100, %v536
  %v538 = vpop.f32.mrb[0].mxu0
  %v539 = vpop.f32.mrb[0].mxu0
  %v540 = vadd.f32 %v100, %v539
  %v541 = vpop.f32.mrb[0].mxu0
  %542 = vmatprep.mubr.bf16.mxu0 0
  %543 = vmatmul.mubr.bf16.gmra.mrb[0].mxu0 %v251
  %v544 = vpop.f32.mrb[0].mxu0
  %v545 = vadd.f32 %v100, %v544
  %v546 = vpop.f32.mrb[0].mxu0
  %v547 = vpop.f32.mrb[0].mxu0
  %v548 = vadd.f32 %v100, %v547
  %v549 = vpop.f32.mrb[0].mxu0
  %550 = vmatprep.mubr.bf16.mxu0 0
  %551 = vmatmul.mubr.bf16.gmra.mrb[0].mxu0 %v252
  %v552 = vpop.f32.mrb[0].mxu0
  %v553 = vadd.f32 %v100, %v552
  %v554 = vpop.f32.mrb[0].mxu0
  %v555 = vpop.f32.mrb[0].mxu0
  %v556 = vadd.f32 %v100, %v555
  %v557 = vpop.f32.mrb[0].mxu0
  %558 = vmatprep.mubr.bf16.mxu0 0
  %559 = vmatmul.mubr.bf16.gmra.mrb[0].mxu0 %v253
  %v560 = vpop.f32.mrb[0].mxu0
  %v561 = vadd.f32 %v100, %v560
  %v562 = vpop.f32.mrb[0].mxu0
  %v563 = vpop.f32.mrb[0].mxu0
  %v564 = vadd.f32 %v100, %v563
  %v565 = vpop.f32.mrb[0].mxu0
  %566 = vmatprep.mubr.bf16.mxu0 0
  %567 = vmatmul.mubr.bf16.gmra.mrb[0].mxu0 %v254
  %v568 = vpop.f32.mrb[0].mxu0
  %v569 = vadd.f32 %v100, %v568
  %v570 = vpop.f32.mrb[0].mxu0
  %v571 = vpop.f32.mrb[0].mxu0
  %v572 = vadd.f32 %v100, %v571
  %v573 = vpop.f32.mrb[0].mxu0
  %574 = vmatprep.mubr.bf16.mxu0 0
  %575 = vmatmul.mubr.bf16.gmra.mrb[0].mxu0 %v255
  %v576 = vpop.f32.mrb[0].mxu0
  %v577 = vadd.f32 %v100, %v576
  %v578 = vpop.f32.mrb[0].mxu0
  %v579 = vpop.f32.mrb[0].mxu0
  %v580 = vadd.f32 %v100, %v579
  %v581 = vpop.f32.mrb[0].mxu0
  %582 = vmatprep.mubr.bf16.mxu0 0
  %583 = vmatmul.mubr.bf16.gmra.mrb[0].mxu0 %v256
  %v584 = vpop.f32.mrb[0].mxu0
  %v585 = vadd.f32 %v100, %v584
  %v586 = vpop.f32.mrb[0].mxu0
  %v587 = vpop.f32.mrb[0].mxu0
  %v588 = vadd.f32 %v100, %v587
  %v589 = vpop.f32.mrb[0].mxu0
  %590 = vmatprep.mubr.bf16.mxu0 0
  %591 = vmatmul.mubr.bf16.gmra.mrb[0].mxu0 %v257
  %v592 = vpop.f32.mrb[0].mxu0
  %v593 = vadd.f32 %v100, %v592
  %v594 = vpop.f32.mrb[0].mxu0
  %v595 = vpop.f32.mrb[0].mxu0
  %v596 = vadd.f32 %v100, %v595
  %v597 = vpop.f32.mrb[0].mxu0
  %598 = vmatprep.mubr.bf16.mxu0 0
  %599 = vmatmul.mubr.bf16.gmra.mrb[0].mxu0 %v258
  %v600 = vpop.f32.mrb[0].mxu0
  %v601 = vadd.f32 %v100, %v600
  %v602 = vpop.f32.mrb[0].mxu0
  %v603 = vpop.f32.mrb[0].mxu0
  %v604 = vadd.f32 %v100, %v603
  %v605 = vpop.f32.mrb[0].mxu0
  %606 = vmatprep.mubr.bf16.mxu0 0
  %607 = vmatmul.mubr.bf16.gmra.mrb[0].mxu0 %v259
  %v608 = vpop.f32.mrb[0].mxu0
  %v609 = vadd.f32 %v100, %v608
  %v610 = vpop.f32.mrb[0].mxu0
  %v611 = vpop.f32.mrb[0].mxu0
  %v612 = vadd.f32 %v100, %v611
  %v613 = vpop.f32.mrb[0].mxu0
  %614 = vmatprep.mubr.bf16.mxu0 0
  %615 = vmatmul.mubr.bf16.gmra.mrb[0].mxu0 %v260
  %v616 = vpop.f32.mrb[0].mxu0
  %v617 = vadd.f32 %v100, %v616
  %v618 = vpop.f32.mrb[0].mxu0
  %v619 = vpop.f32.mrb[0].mxu0
  %v620 = vadd.f32 %v100, %v619
  %v621 = vpop.f32.mrb[0].mxu0
  %622 = vmatprep.mubr.bf16.mxu0 0
  %623 = vmatmul.mubr.bf16.gmra.mrb[0].mxu0 %v261
  %v624 = vpop.f32.mrb[0].mxu0
  %v625 = vadd.f32 %v100, %v624
  %v626 = vpop.f32.mrb[0].mxu0
  %v627 = vpop.f32.mrb[0].mxu0
  %v628 = vadd.f32 %v100, %v627
  %v629 = vpop.f32.mrb[0].mxu0
  %630 = vdwg.mxu0
  %631 = vst [vmem:[%s3] sm:$0xff] %v377
  %632 = vst [vmem:[%s3 + $0x8] sm:$0xff] %v380
  %633 = vst [vmem:[%s3 + $0x10] sm:$0xff] %v385
  %634 = vst [vmem:[%s3 + $0x18] sm:$0xff] %v388
  %635 = vst [vmem:[%s3 + $0x20] sm:$0xff] %v393
  %636 = vst [vmem:[%s3 + $0x28] sm:$0xff] %v396
  %637 = vst [vmem:[%s3 + $0x30] sm:$0xff] %v401
  %638 = vst [vmem:[%s3 + $0x38] sm:$0xff] %v404
  %639 = vst [vmem:[%s3 + $0x40] sm:$0xff] %v409
  %640 = vst [vmem:[%s3 + $0x48] sm:$0xff] %v412
  %641 = vst [vmem:[%s3 + $0x50] sm:$0xff] %v417
  %642 = vst [vmem:[%s3 + $0x58] sm:$0xff] %v420
  %643 = vst [vmem:[%s3 + $0x60] sm:$0xff] %v425
  %644 = vst [vmem:[%s3 + $0x68] sm:$0xff] %v428
  %645 = vst [vmem:[%s3 + $0x70] sm:$0xff] %v433
  %646 = vst [vmem:[%s3 + $0x78] sm:$0xff] %v436
  %647 = vst [vmem:[%s3 + $0x80] sm:$0xff] %v441
  %648 = vst [vmem:[%s3 + $0x88] sm:$0xff] %v444
  %649 = vst [vmem:[%s3 + $0x90] sm:$0xff] %v449
  %650 = vst [vmem:[%s3 + $0x98] sm:$0xff] %v452
  %651 = vst [vmem:[%s3 + $0xa0] sm:$0xff] %v457
  %652 = vst [vmem:[%s3 + $0xa8] sm:$0xff] %v460
  %653 = vst [vmem:[%s3 + $0xb0] sm:$0xff] %v465
  %654 = vst [vmem:[%s3 + $0xb8] sm:$0xff] %v468
  %655 = vst [vmem:[%s3 + $0xc0] sm:$0xff] %v473
  %656 = vst [vmem:[%s3 + $0xc8] sm:$0xff] %v476
  %657 = vst [vmem:[%s3 + $0xd0] sm:$0xff] %v481
  %658 = vst [vmem:[%s3 + $0xd8] sm:$0xff] %v484
  %659 = vst [vmem:[%s3 + $0xe0] sm:$0xff] %v489
  %660 = vst [vmem:[%s3 + $0xe8] sm:$0xff] %v492
  %661 = vst [vmem:[%s3 + $0xf0] sm:$0xff] %v497
  %662 = vst [vmem:[%s3 + $0xf8] sm:$0xff] %v500
  %663 = vst [vmem:[%s3 + $0x100] sm:$0xff] %v505
  %664 = vst [vmem:[%s3 + $0x108] sm:$0xff] %v508
  %665 = vst [vmem:[%s3 + $0x110] sm:$0xff] %v513
  %666 = vst [vmem:[%s3 + $0x118] sm:$0xff] %v516
  %667 = vst [vmem:[%s3 + $0x120] sm:$0xff] %v521
  %668 = vst [vmem:[%s3 + $0x128] sm:$0xff] %v524
  %669 = vst [vmem:[%s3 + $0x130] sm:$0xff] %v529
  %670 = vst [vmem:[%s3 + $0x138] sm:$0xff] %v532
  %671 = vst [vmem:[%s3 + $0x140] sm:$0xff] %v537
  %672 = vst [vmem:[%s3 + $0x148] sm:$0xff] %v540
  %673 = vst [vmem:[%s3 + $0x150] sm:$0xff] %v545
  %674 = vst [vmem:[%s3 + $0x158] sm:$0xff] %v548
  %675 = vst [vmem:[%s3 + $0x160] sm:$0xff] %v553
  %676 = vst [vmem:[%s3 + $0x168] sm:$0xff] %v556
  %677 = vst [vmem:[%s3 + $0x170] sm:$0xff] %v561
  %678 = vst [vmem:[%s3 + $0x178] sm:$0xff] %v564
  %679 = vst [vmem:[%s3 + $0x180] sm:$0xff] %v569
  %680 = vst [vmem:[%s3 + $0x188] sm:$0xff] %v572
  %681 = vst [vmem:[%s3 + $0x190] sm:$0xff] %v577
  %682 = vst [vmem:[%s3 + $0x198] sm:$0xff] %v580
  %683 = vst [vmem:[%s3 + $0x1a0] sm:$0xff] %v585
  %684 = vst [vmem:[%s3 + $0x1a8] sm:$0xff] %v588
  %685 = vst [vmem:[%s3 + $0x1b0] sm:$0xff] %v593
  %686 = vst [vmem:[%s3 + $0x1b8] sm:$0xff] %v596
  %687 = vst [vmem:[%s3 + $0x1c0] sm:$0xff] %v601
  %688 = vst [vmem:[%s3 + $0x1c8] sm:$0xff] %v604
  %689 = vst [vmem:[%s3 + $0x1d0] sm:$0xff] %v609
  %690 = vst [vmem:[%s3 + $0x1d8] sm:$0xff] %v612
  %691 = vst [vmem:[%s3 + $0x1e0] sm:$0xff] %v617
  %692 = vst [vmem:[%s3 + $0x1e8] sm:$0xff] %v620
  %693 = vst [vmem:[%s3 + $0x1f0] sm:$0xff] %v625
  %694 = vst [vmem:[%s3 + $0x1f8] sm:$0xff] %v628
  // Predicated region
  $region14: #{up_conv_forward.3} parent=0 // pred_check
    _
  $region15: #{up_conv_forward.3} parent=0 // pred_check_branch
    %696 = sbr.rel (0) target = $region17
  $region16: #{up_conv_forward.3} parent=0 // pred_region
    _
  $region17: #{up_conv_forward.3} parent=0 // pred_fallthru
    _
  // Predicated region
  $region18: #{up_conv_forward.3} parent=0 // pred_check
    _
  $region19: #{up_conv_forward.3} parent=0 // pred_check_branch
    %698 = sbr.rel (0) target = $region21
  $region20: #{up_conv_forward.3} parent=0 // pred_region
    _
  $region21: #{up_conv_forward.3} parent=0 // pred_fallthru
    _

// kernel: tile.23
$region0: #{tile.23}
  #allocation0 [shape = 's32[1]{0}', space=sflag, size = 0x4, scoped, tag = 'scoped memory for tile.23']
  %s0 = inlined_call_operand.vmem [shape: f32[4], index: 0, kind: input, shape index: {}]
  %s1 = inlined_call_operand.vmem [shape: f32[9,4], index: 1, kind: output, shape index: {}]
  // Predicated region
  $region2: #{tile.23} parent=0 // pred_check
    _
  $region3: #{tile.23} parent=0 // pred_check_branch
    %3 = sbr.rel (0) target = $region5
  $region4: #{tile.23} parent=0 // pred_region
    _
  $region5: #{tile.23} parent=0 // pred_fallthru
    _
  %v4 = vld [vmem:[%s0] ss:$0 sm:$0xff]
  %5 = vst [vmem:[%s1] sm:$0xff] %v4
  %s6 = scalar_lea.vmem %s1, 8
  %7 = vst [vmem:[%s6] sm:$0xff] %v4

// kernel: tile.24
$region0: #{tile.24}
  %s0 = inlined_call_operand.vmem [shape: f32[9,4], index: 0, kind: input, shape index: {}]
  %s1 = inlined_call_operand.vmem [shape: f32[36], index: 1, kind: output, shape index: {}]
  $region1: #{tile.24} parent=0
    #allocation0 [shape = 'u8[4096]{0}', space=vmem, size = 0x1000, scoped, tag = 'scoped mem for output reshape']
    %v2 = vld [vmem:[%s0] sm:$0x1]
    %vm3 = vcmask 31744
    %4 = vst.msk [vmem:[#allocation0] sm:$0x1] %vm3, %v2
    %s5 = scalar_lea.vmem %s0, 8
    %v6 = vld [vmem:[%s5] sm:$0x1]
    %7 = vrot.lane.b32.xlu0 %v6, 32
    %v8 = vpop.permute.xlu0 %7
    %vm9 = vcmask 294144
    %10 = vst.msk [vmem:[#allocation0] sm:$0x1] %vm9, %v8
    %s11 = scalar_lea.vmem %s0, 7
    %v12 = vld [vmem:[%s11] sm:$0x1]
    %13 = vrot.lane.b32.xlu0 %v12, 28
    %v14 = vpop.permute.xlu0 %13
    %vm15 = vcmask 261344
    %16 = vst.msk [vmem:[#allocation0] sm:$0x1] %vm15, %v14
    %s17 = scalar_lea.vmem %s0, 6
    %v18 = vld [vmem:[%s17] sm:$0x1]
    %19 = vrot.lane.b32.xlu0 %v18, 24
    %v20 = vpop.permute.xlu0 %19
    %vm21 = vcmask 228544
    %22 = vst.msk [vmem:[#allocation0] sm:$0x1] %vm21, %v20
    %s23 = scalar_lea.vmem %s0, 5
    %v24 = vld [vmem:[%s23] sm:$0x1]
    %25 = vrot.lane.b32.xlu0 %v24, 20
    %v26 = vpop.permute.xlu0 %25
    %vm27 = vcmask 195744
    %28 = vst.msk [vmem:[#allocation0] sm:$0x1] %vm27, %v26
    %s29 = scalar_lea.vmem %s0, 4
    %v30 = vld [vmem:[%s29] sm:$0x1]
    %31 = vrot.lane.b32.xlu0 %v30, 16
    %v32 = vpop.permute.xlu0 %31
    %vm33 = vcmask 162944
    %34 = vst.msk [vmem:[#allocation0] sm:$0x1] %vm33, %v32
    %s35 = scalar_lea.vmem %s0, 3
    %v36 = vld [vmem:[%s35] sm:$0x1]
    %37 = vrot.lane.b32.xlu0 %v36, 12
    %v38 = vpop.permute.xlu0 %37
    %vm39 = vcmask 130144
    %40 = vst.msk [vmem:[#allocation0] sm:$0x1] %vm39, %v38
    %s41 = scalar_lea.vmem %s0, 2
    %v42 = vld [vmem:[%s41] sm:$0x1]
    %43 = vrot.lane.b32.xlu0 %v42, 8
    %v44 = vpop.permute.xlu0 %43
    %vm45 = vcmask 97344
    %46 = vst.msk [vmem:[#allocation0] sm:$0x1] %vm45, %v44
    %s47 = scalar_lea.vmem %s0, 1
    %v48 = vld [vmem:[%s47] sm:$0x1]
    %49 = vrot.lane.b32.xlu0 %v48, 4
    %v50 = vpop.permute.xlu0 %49
    %vm51 = vcmask 64544
    %52 = vst.msk [vmem:[#allocation0] sm:$0x1] %vm51, %v50
    %s54 = sshllo.u32 0, 1
    %v56 = vld [vmem:[#allocation0] sm:%s54]
    %s57 = sshllo.u32 0, 1
    %58 = vst [vmem:[%s1] sm:%s57] %v56

// kernel: up_conv_forward.4
$region0: #{up_conv_forward.4}
  #allocation0 [shape = 'u32[]', space=smem, size = 0x4, offset = 0x4, fixed_abs, tag = 'smem constant byte address 0x4 - core index']
  #allocation1 [shape = 'u32[144,128]{1,0:T(1,128)}', space=vmem, size = 0x12000, scoped, tag = 'internal scratch']
  %s0 = inlined_call_operand.vmem [shape: bf16[1800,128], index: 0, kind: input, shape index: {}]
  %s1 = inlined_call_operand.vmem [shape: bf16[128,128], index: 1, kind: input, shape index: {}]
  %s2 = inlined_call_operand.vmem [shape: f32[1,128], index: 2, kind: input, shape index: {}, may-alias: {2,3}]
  %s3 = inlined_call_operand.vmem [shape: f32[1,128], index: 3, kind: input, shape index: {}, may-alias: {2,3}]
  %s4 = inlined_call_operand.vmem [shape: f32[1800,8], index: 4, kind: output, shape index: {0}]
  %s5 = inlined_call_operand.vmem [shape: f32[3,2,128], index: 5, kind: output, shape index: {1}]
  %6 = xla_tuple %s4, %s5
  %s7 = sld [smem:[#allocation0]]
  $region57: #{up_conv_forward.4} parent=0
    _
  %s9 = ssub.s32 1, %s7
  %s10 = scalar_select 0, %s9, %s7
  loop: start=0, step=1, limit=5
  $region2: #{up_conv_forward.4} parent=0 // loop_pre_header
    _
  $region3: #{up_conv_forward.4} parent=0 // loop_header
    %s12 = sphi 0, %s16
    %p13 = scmp.ge.s32.totalorder %s12, 5
    %s22 = sphi 0, %s24
    %s25 = sphi 0, %s22
    %s26 = sphi 0, %s25
    %s42 = sphi 0, %s26
    %s46 = sphi 0, %s46
    %s48 = sphi 0, %s46
    %s49 = sphi 0, %s48
    %s63 = sphi 0, %s49
    %s67 = sphi 0, %s67
    %s69 = sphi 0, %s67
    %s70 = sphi 0, %s69
    %s84 = sphi 0, %s70
    %s88 = sphi 0, %s88
    %s90 = sphi 0, %s88
    %s91 = sphi 0, %s90
    %s105 = sphi 0, %s91
    %s111 = sphi 0, %s113
    %s114 = sphi 0, %s111
    %s115 = sphi 0, %s114
    %s131 = sphi 0, %s115
    %s137 = sphi 0, %s139
    %s140 = sphi 0, %s137
    %s141 = sphi 0, %s140
    %s157 = sphi 0, %s141
  $region4: #{up_conv_forward.4} parent=0 // loop_header_branch
    %15 = sbr.rel (%p13) target = $region8
  $region5: #{up_conv_forward.4} parent=0 // loop_body
    %s17 = ssub.s32 %s12, 1
    %s18 = ssub.s32 %s12, 2
    %s19 = sadd.s32 %s12, 1
    %s20 = ssub.s32 %s12, %s19
    %p21 = scmp.eq.s32.totalorder %s20, 0
    %s23 = sadd.s32 %s22, 1
    %s24 = scalar_select %p21, %s22, %s23
    %p27 = pneg %p21
    %p28 = scmp.eq.s32.totalorder %s12, 2
    %p29 = por %p27, %p28
    %p30 = scmp.ne.s32.totalorder %s22, %s25
    %p31 = scmp.eq.s32.totalorder %s12, 0
    %p32 = por %p30, %p31
    %p33 = scmp.ne.s32.totalorder %s22, %s25
    %p34 = scmp.eq.s32.totalorder %s17, 2
    %p35 = por %p33, %p34
    %p36 = scmp.ne.s32.totalorder %s25, %s26
    %p37 = scmp.eq.s32.totalorder %s17, 0
    %p38 = por %p36, %p37
    %p39 = scmp.ne.s32.totalorder %s25, %s26
    %p40 = scmp.eq.s32.totalorder %s18, 2
    %p41 = por %p39, %p40
    %p43 = scmp.ne.s32.totalorder %s26, %s42
    %p44 = scmp.eq.s32.totalorder %s18, 0
    %p45 = por %p43, %p44
    %s47 = sadd.s32 %s46, 1
    %p50 = scmp.eq.s32.totalorder %s12, 2
    %p51 = scmp.ne.s32.totalorder %s46, %s48
    %p52 = scmp.eq.s32.totalorder %s12, 0
    %p53 = por %p51, %p52
    %p54 = scmp.ne.s32.totalorder %s46, %s48
    %p55 = scmp.eq.s32.totalorder %s17, 2
    %p56 = por %p54, %p55
    %p57 = scmp.ne.s32.totalorder %s48, %s49
    %p58 = scmp.eq.s32.totalorder %s17, 0
    %p59 = por %p57, %p58
    %p60 = scmp.ne.s32.totalorder %s48, %s49
    %p61 = scmp.eq.s32.totalorder %s18, 2
    %p62 = por %p60, %p61
    %p64 = scmp.ne.s32.totalorder %s49, %s63
    %p65 = scmp.eq.s32.totalorder %s18, 0
    %p66 = por %p64, %p65
    %s68 = sadd.s32 %s67, 1
    %p71 = scmp.eq.s32.totalorder %s12, 2
    %p72 = scmp.ne.s32.totalorder %s67, %s69
    %p73 = scmp.eq.s32.totalorder %s12, 0
    %p74 = por %p72, %p73
    %p75 = scmp.ne.s32.totalorder %s67, %s69
    %p76 = scmp.eq.s32.totalorder %s17, 2
    %p77 = por %p75, %p76
    %p78 = scmp.ne.s32.totalorder %s69, %s70
    %p79 = scmp.eq.s32.totalorder %s17, 0
    %p80 = por %p78, %p79
    %p81 = scmp.ne.s32.totalorder %s69, %s70
    %p82 = scmp.eq.s32.totalorder %s18, 2
    %p83 = por %p81, %p82
    %p85 = scmp.ne.s32.totalorder %s70, %s84
    %p86 = scmp.eq.s32.totalorder %s18, 0
    %p87 = por %p85, %p86
    %s89 = sadd.s32 %s88, 1
    %p92 = scmp.eq.s32.totalorder %s12, 2
    %p93 = scmp.ne.s32.totalorder %s88, %s90
    %p94 = scmp.eq.s32.totalorder %s12, 0
    %p95 = por %p93, %p94
    %p96 = scmp.ne.s32.totalorder %s88, %s90
    %p97 = scmp.eq.s32.totalorder %s17, 2
    %p98 = por %p96, %p97
    %p99 = scmp.ne.s32.totalorder %s90, %s91
    %p100 = scmp.eq.s32.totalorder %s17, 0
    %p101 = por %p99, %p100
    %p102 = scmp.ne.s32.totalorder %s90, %s91
    %p103 = scmp.eq.s32.totalorder %s18, 2
    %p104 = por %p102, %p103
    %p106 = scmp.ne.s32.totalorder %s91, %s105
    %p107 = scmp.eq.s32.totalorder %s18, 0
    %p108 = por %p106, %p107
    %s109 = ssub.s32 %s12, %s19
    %p110 = scmp.eq.s32.totalorder %s109, 0
    %s112 = sadd.s32 %s111, 1
    %s113 = scalar_select %p110, %s111, %s112
    %p116 = pneg %p110
    %p117 = scmp.eq.s32.totalorder %s12, 2
    %p118 = por %p116, %p117
    %p119 = scmp.ne.s32.totalorder %s111, %s114
    %p120 = scmp.eq.s32.totalorder %s12, 0
    %p121 = por %p119, %p120
    %p122 = scmp.ne.s32.totalorder %s111, %s114
    %p123 = scmp.eq.s32.totalorder %s17, 2
    %p124 = por %p122, %p123
    %p125 = scmp.ne.s32.totalorder %s114, %s115
    %p126 = scmp.eq.s32.totalorder %s17, 0
    %p127 = por %p125, %p126
    %p128 = scmp.ne.s32.totalorder %s114, %s115
    %p129 = scmp.eq.s32.totalorder %s18, 2
    %p130 = por %p128, %p129
    %p132 = scmp.ne.s32.totalorder %s115, %s131
    %p133 = scmp.eq.s32.totalorder %s18, 0
    %p134 = por %p132, %p133
    %s135 = ssub.s32 %s12, %s19
    %p136 = scmp.eq.s32.totalorder %s135, 0
    %s138 = sadd.s32 %s137, 1
    %s139 = scalar_select %p136, %s137, %s138
    %p142 = pneg %p136
    %p143 = scmp.eq.s32.totalorder %s12, 2
    %p144 = por %p142, %p143
    %p145 = scmp.ne.s32.totalorder %s137, %s140
    %p146 = scmp.eq.s32.totalorder %s12, 0
    %p147 = por %p145, %p146
    %p148 = scmp.ne.s32.totalorder %s137, %s140
    %p149 = scmp.eq.s32.totalorder %s17, 2
    %p150 = por %p148, %p149
    %p151 = scmp.ne.s32.totalorder %s140, %s141
    %p152 = scmp.eq.s32.totalorder %s17, 0
    %p153 = por %p151, %p152
    %p154 = scmp.ne.s32.totalorder %s140, %s141
    %p155 = scmp.eq.s32.totalorder %s18, 2
    %p156 = por %p154, %p155
    %p158 = scmp.ne.s32.totalorder %s141, %s157
    %p159 = scmp.eq.s32.totalorder %s18, 0
    %p160 = por %p158, %p159
    %p161 = scmp.le.s32.totalorder 1, %s12
    %p162 = scmp.lt.s32.totalorder %s12, 4
    %p163 = pnand %p161, %p162
    %p164 = pneg %p163
    // Predicated region
    $region9: #{up_conv_forward.4} parent=5 // pred_check
      _
    $region10: #{up_conv_forward.4} parent=5 // pred_check_branch
      %166 = sbr.rel (%p163) target = $region12
    $region11: #{up_conv_forward.4} parent=5 // pred_region
      %s167 = ssub.s32 %s12, 1
      // Predicated region
      $region13: #{up_conv_forward.4} parent=11 // pred_check
        %p168 = pneg %p59
      $region14: #{up_conv_forward.4} parent=11 // pred_check_branch
        %170 = sbr.rel (%p168) target = $region16
      $region15: #{up_conv_forward.4} parent=11 // pred_region
        _
      $region16: #{up_conv_forward.4} parent=11 // pred_fallthru
        _
      // Predicated region
      $region17: #{up_conv_forward.4} parent=11 // pred_check
        %p171 = pneg %p80
      $region18: #{up_conv_forward.4} parent=11 // pred_check_branch
        %173 = sbr.rel (%p171) target = $region20
      $region19: #{up_conv_forward.4} parent=11 // pred_region
        _
      $region20: #{up_conv_forward.4} parent=11 // pred_fallthru
        _
      // Predicated region
      $region21: #{up_conv_forward.4} parent=11 // pred_check
        %p174 = pneg %p101
      $region22: #{up_conv_forward.4} parent=11 // pred_check_branch
        %176 = sbr.rel (%p174) target = $region24
      $region23: #{up_conv_forward.4} parent=11 // pred_region
        _
      $region24: #{up_conv_forward.4} parent=11 // pred_fallthru
        _
    $region12: #{up_conv_forward.4} parent=5 // pred_fallthru
      _
    %p177 = scmp.lt.s32.totalorder %s12, 3
    // Predicated region
    $region25: #{up_conv_forward.4} parent=5 // pred_check
      %p178 = pneg %p177
    $region26: #{up_conv_forward.4} parent=5 // pred_check_branch
      %180 = sbr.rel (%p178) target = $region28
    $region27: #{up_conv_forward.4} parent=5 // pred_region
      // Predicated region
      $region29: #{up_conv_forward.4} parent=27 // pred_check
        %p181 = pneg %p32
      $region30: #{up_conv_forward.4} parent=27 // pred_check_branch
        %183 = sbr.rel (%p181) target = $region32
      $region31: #{up_conv_forward.4} parent=27 // pred_region
        %s184 = smul.u32 75, %s12
        %p185 = scmp.lt.s32.totalorder %s184, 224
        %s186 = scalar_select %p185, %s184, 224
        %s187 = smul.addr %s186, 4
        %s188 = scalar_lea.vmem %s0, %s187
        %s189 = smul.u32 75, %s12
      $region32: #{up_conv_forward.4} parent=27 // pred_fallthru
        _
    $region28: #{up_conv_forward.4} parent=5 // pred_fallthru
      _
    %p190 = scmp.le.s32.totalorder 1, %s12
    %p191 = scmp.lt.s32.totalorder %s12, 4
    %p192 = pnand %p190, %p191
    %p193 = pneg %p192
    // Predicated region
    $region33: #{up_conv_forward.4} parent=5 // pred_check
      _
    $region34: #{up_conv_forward.4} parent=5 // pred_check_branch
      %195 = sbr.rel (%p192) target = $region36
    $region35: #{up_conv_forward.4} parent=5 // pred_region
      %s196 = ssub.s32 %s12, 1
      %s197 = smul.u32 75, %s17
      %p198 = scmp.lt.s32.totalorder %s197, 224
      %s199 = scalar_select %p198, %s197, 224
      %s200 = smul.addr %s199, 4
      %s201 = scalar_lea.vmem %s0, %s200
      %p202 = pneg %p38
      %p203 = pneg %p35
      %p204 = pneg %p59
      %p205 = pneg %p56
      %p206 = pneg %p80
      %p207 = pneg %p77
      %p208 = pneg %p101
      %p209 = pneg %p98
      %p210 = pneg %p127
      %p211 = pneg %p124
      %s212 = smul.u32 75, %s17
      %p213 = scmp.lt.s32.totalorder %s212, 224
      %s214 = scalar_select %p213, %s212, 224
      %s215 = smul.addr %s214, 8
      %s216 = scalar_lea.vmem %s4, %s215
      %p217 = pneg %p153
      %p218 = pneg %p150
      %p219 = scmp.lt.s32.totalorder %s17, 2
      %s220 = scalar_select %p219, %s17, 2
      %s221 = smul.addr %s220, 2
      %s222 = scalar_lea.vmem %s5, %s221
      %s223 = smul.u32 75, %s17
      %p224 = scmp.lt.s32.totalorder %s223, 224
      %s225 = scalar_select %p224, %s223, 224
      %s226 = smul.addr %s225, 4
      %s227 = scalar_lea.vmem %s0, %s226
      %s228 = smul.u32 75, %s17
      %s229 = smul.u32 75, %s17
      %p230 = scmp.lt.s32.totalorder %s229, 224
      %s231 = scalar_select %p230, %s229, 224
      %s232 = smul.addr %s231, 8
      %s233 = scalar_lea.vmem %s4, %s232
      %s234 = smul.u32 75, %s17
      %p235 = scmp.lt.s32.totalorder %s17, 2
      %s236 = scalar_select %p235, %s17, 2
      %s237 = smul.addr %s236, 2
      %s238 = scalar_lea.vmem %s5, %s237
      %v240 = vld [vmem:[%s227] sm:$0xf]
      %v241 = vld [vmem:[%s227 + $0x4] sm:$0xf]
      %v242 = vld [vmem:[%s227 + $0x8] sm:$0xf]
      %v243 = vld [vmem:[%s227 + $0xc] sm:$0xf]
      %v244 = vld [vmem:[%s227 + $0x10] sm:$0xf]
      %v245 = vld [vmem:[%s227 + $0x14] sm:$0xf]
      %v246 = vld [vmem:[%s227 + $0x18] sm:$0xf]
      %v247 = vld [vmem:[%s227 + $0x1c] sm:$0xf]
      %v248 = vld [vmem:[%s227 + $0x20] sm:$0xf]
      %v249 = vld [vmem:[%s227 + $0x24] sm:$0xf]
      %v250 = vld [vmem:[%s227 + $0x28] sm:$0xf]
      %v251 = vld [vmem:[%s227 + $0x2c] sm:$0xf]
      %v252 = vld [vmem:[%s227 + $0x30] sm:$0xf]
      %v253 = vld [vmem:[%s227 + $0x34] sm:$0xf]
      %v254 = vld [vmem:[%s227 + $0x38] sm:$0xf]
      %v255 = vld [vmem:[%s227 + $0x3c] sm:$0xf]
      %v256 = vld [vmem:[%s227 + $0x40] sm:$0xf]
      %v257 = vld [vmem:[%s227 + $0x44] sm:$0xf]
      %v258 = vld [vmem:[%s227 + $0x48] sm:$0xf]
      %v259 = vld [vmem:[%s227 + $0x4c] sm:$0xf]
      %v260 = vld [vmem:[%s227 + $0x50] sm:$0xf]
      %v261 = vld [vmem:[%s227 + $0x54] sm:$0xf]
      %v262 = vld [vmem:[%s227 + $0x58] sm:$0xf]
      %v263 = vld [vmem:[%s227 + $0x5c] sm:$0xf]
      %v264 = vld [vmem:[%s227 + $0x60] sm:$0xf]
      %v265 = vld [vmem:[%s227 + $0x64] sm:$0xf]
      %v266 = vld [vmem:[%s227 + $0x68] sm:$0xf]
      %v267 = vld [vmem:[%s227 + $0x6c] sm:$0xf]
      %v268 = vld [vmem:[%s227 + $0x70] sm:$0xf]
      %v269 = vld [vmem:[%s227 + $0x74] sm:$0xf]
      %v270 = vld [vmem:[%s227 + $0x78] sm:$0xf]
      %v271 = vld [vmem:[%s227 + $0x7c] sm:$0xf]
      %v272 = vld [vmem:[%s227 + $0x80] sm:$0xf]
      %v273 = vld [vmem:[%s227 + $0x84] sm:$0xf]
      %v274 = vld [vmem:[%s227 + $0x88] sm:$0xf]
      %v275 = vld [vmem:[%s227 + $0x8c] sm:$0xf]
      %v276 = vld [vmem:[%s227 + $0x90] sm:$0xf]
      %v277 = vld [vmem:[%s227 + $0x94] sm:$0xf]
      %v278 = vld [vmem:[%s227 + $0x98] sm:$0xf]
      %v279 = vld [vmem:[%s227 + $0x9c] sm:$0xf]
      %v280 = vld [vmem:[%s227 + $0xa0] sm:$0xf]
      %v281 = vld [vmem:[%s227 + $0xa4] sm:$0xf]
      %v282 = vld [vmem:[%s227 + $0xa8] sm:$0xf]
      %v283 = vld [vmem:[%s227 + $0xac] sm:$0xf]
      %v284 = vld [vmem:[%s227 + $0xb0] sm:$0xf]
      %v285 = vld [vmem:[%s227 + $0xb4] sm:$0xf]
      %v286 = vld [vmem:[%s227 + $0xb8] sm:$0xf]
      %v287 = vld [vmem:[%s227 + $0xbc] sm:$0xf]
      %v288 = vld [vmem:[%s227 + $0xc0] sm:$0xf]
      %v289 = vld [vmem:[%s227 + $0xc4] sm:$0xf]
      %v290 = vld [vmem:[%s227 + $0xc8] sm:$0xf]
      %v291 = vld [vmem:[%s227 + $0xcc] sm:$0xf]
      %v292 = vld [vmem:[%s227 + $0xd0] sm:$0xf]
      %v293 = vld [vmem:[%s227 + $0xd4] sm:$0xf]
      %v294 = vld [vmem:[%s227 + $0xd8] sm:$0xf]
      %v295 = vld [vmem:[%s227 + $0xdc] sm:$0xf]
      %v296 = vld [vmem:[%s227 + $0xe0] sm:$0xf]
      %v297 = vld [vmem:[%s227 + $0xe4] sm:$0xf]
      %v298 = vld [vmem:[%s227 + $0xe8] sm:$0xf]
      %v299 = vld [vmem:[%s227 + $0xec] sm:$0xf]
      %v300 = vld [vmem:[%s227 + $0xf0] sm:$0xf]
      %v301 = vld [vmem:[%s227 + $0xf4] sm:$0xf]
      %v302 = vld [vmem:[%s227 + $0xf8] sm:$0xf]
      %v303 = vld [vmem:[%s227 + $0xfc] sm:$0xf]
      %v304 = vld [vmem:[%s227 + $0x100] sm:$0xf]
      %v305 = vld [vmem:[%s227 + $0x104] sm:$0xf]
      %v306 = vld [vmem:[%s227 + $0x108] sm:$0xf]
      %v307 = vld [vmem:[%s227 + $0x10c] sm:$0xf]
      %v308 = vld [vmem:[%s227 + $0x110] sm:$0xf]
      %v309 = vld [vmem:[%s227 + $0x114] sm:$0xf]
      %v310 = vld [vmem:[%s227 + $0x118] sm:$0xf]
      %v311 = vld [vmem:[%s227 + $0x11c] sm:$0xf]
      %v312 = vld [vmem:[%s227 + $0x120] sm:$0xf]
      %v313 = vld [vmem:[%s227 + $0x124] sm:$0xf]
      %v314 = vld [vmem:[%s227 + $0x128] sm:$0xf]
      %v315 = vld [vmem:[%s1] sm:$0xf]
      %v316 = vld [vmem:[%s1 + $0x4] sm:$0xf]
      %v317 = vld [vmem:[%s1 + $0x8] sm:$0xf]
      %v318 = vld [vmem:[%s1 + $0xc] sm:$0xf]
      %v319 = vld [vmem:[%s1 + $0x10] sm:$0xf]
      %v320 = vld [vmem:[%s1 + $0x14] sm:$0xf]
      %v321 = vld [vmem:[%s1 + $0x18] sm:$0xf]
      %v322 = vld [vmem:[%s1 + $0x1c] sm:$0xf]
      %v323 = vld [vmem:[%s1 + $0x20] sm:$0xf]
      %v324 = vld [vmem:[%s1 + $0x24] sm:$0xf]
      %v325 = vld [vmem:[%s1 + $0x28] sm:$0xf]
      %v326 = vld [vmem:[%s1 + $0x2c] sm:$0xf]
      %v327 = vld [vmem:[%s1 + $0x30] sm:$0xf]
      %v328 = vld [vmem:[%s1 + $0x34] sm:$0xf]
      %v329 = vld [vmem:[%s1 + $0x38] sm:$0xf]
      %v330 = vld [vmem:[%s1 + $0x3c] sm:$0xf]
      %v406 = vunpack.c.l.b16 %v240
      %v407 = vunpack.c.l.b16 %v241
      %v408 = vunpack.c.l.b16 %v242
      %v409 = vunpack.c.l.b16 %v243
      %v410 = vunpack.c.l.b16 %v244
      %v411 = vunpack.c.l.b16 %v245
      %v412 = vunpack.c.l.b16 %v246
      %v413 = vunpack.c.l.b16 %v247
      %v414 = vunpack.c.l.b16 %v248
      %v415 = vunpack.c.l.b16 %v249
      %v416 = vunpack.c.l.b16 %v250
      %v417 = vunpack.c.l.b16 %v251
      %v418 = vunpack.c.l.b16 %v252
      %v419 = vunpack.c.l.b16 %v253
      %v420 = vunpack.c.l.b16 %v254
      %v421 = vunpack.c.l.b16 %v255
      %v422 = vunpack.c.l.b16 %v256
      %v423 = vunpack.c.l.b16 %v257
      %v424 = vunpack.c.l.b16 %v258
      %v425 = vunpack.c.l.b16 %v259
      %v426 = vunpack.c.l.b16 %v260
      %v427 = vunpack.c.l.b16 %v261
      %v428 = vunpack.c.l.b16 %v262
      %v429 = vunpack.c.l.b16 %v263
      %v430 = vunpack.c.l.b16 %v264
      %v431 = vunpack.c.l.b16 %v265
      %v432 = vunpack.c.l.b16 %v266
      %v433 = vunpack.c.l.b16 %v267
      %v434 = vunpack.c.l.b16 %v268
      %v435 = vunpack.c.l.b16 %v269
      %v436 = vunpack.c.l.b16 %v270
      %v437 = vunpack.c.l.b16 %v271
      %v438 = vunpack.c.l.b16 %v272
      %v439 = vunpack.c.l.b16 %v273
      %v440 = vunpack.c.l.b16 %v274
      %v441 = vunpack.c.l.b16 %v275
      %v442 = vunpack.c.l.b16 %v276
      %v443 = vunpack.c.l.b16 %v277
      %v444 = vunpack.c.l.b16 %v278
      %v445 = vunpack.c.l.b16 %v279
      %v446 = vunpack.c.l.b16 %v280
      %v447 = vunpack.c.l.b16 %v281
      %v448 = vunpack.c.l.b16 %v282
      %v449 = vunpack.c.l.b16 %v283
      %v450 = vunpack.c.l.b16 %v284
      %v451 = vunpack.c.l.b16 %v285
      %v452 = vunpack.c.l.b16 %v286
      %v453 = vunpack.c.l.b16 %v287
      %v454 = vunpack.c.l.b16 %v288
      %v455 = vunpack.c.l.b16 %v289
      %v456 = vunpack.c.l.b16 %v290
      %v457 = vunpack.c.l.b16 %v291
      %v458 = vunpack.c.l.b16 %v292
      %v459 = vunpack.c.l.b16 %v293
      %v460 = vunpack.c.l.b16 %v294
      %v461 = vunpack.c.l.b16 %v295
      %v462 = vunpack.c.l.b16 %v296
      %v463 = vunpack.c.l.b16 %v297
      %v464 = vunpack.c.l.b16 %v298
      %v465 = vunpack.c.l.b16 %v299
      %v466 = vunpack.c.l.b16 %v300
      %v467 = vunpack.c.l.b16 %v301
      %v468 = vunpack.c.l.b16 %v302
      %v469 = vunpack.c.l.b16 %v303
      %v470 = vunpack.c.l.b16 %v304
      %v471 = vunpack.c.l.b16 %v305
      %v472 = vunpack.c.l.b16 %v306
      %v473 = vunpack.c.l.b16 %v307
      %v474 = vunpack.c.l.b16 %v308
      %v475 = vunpack.c.l.b16 %v309
      %v476 = vunpack.c.l.b16 %v310
      %v477 = vunpack.c.l.b16 %v311
      %v478 = vunpack.c.l.b16 %v312
      %v479 = vunpack.c.l.b16 %v313
      %v480 = vunpack.c.l.b16 %v314
      %v481 = vpack.c.b16 %v407, %v406
      %v482 = vpack.c.b16 %v409, %v408
      %v483 = vpack.c.b16 %v411, %v410
      %v484 = vpack.c.b16 %v413, %v412
      %v485 = vpack.c.b16 %v415, %v414
      %v486 = vpack.c.b16 %v417, %v416
      %v487 = vpack.c.b16 %v419, %v418
      %v488 = vpack.c.b16 %v421, %v420
      %v489 = vpack.c.b16 %v423, %v422
      %v490 = vpack.c.b16 %v425, %v424
      %v491 = vpack.c.b16 %v427, %v426
      %v492 = vpack.c.b16 %v429, %v428
      %v493 = vpack.c.b16 %v431, %v430
      %v494 = vpack.c.b16 %v433, %v432
      %v495 = vpack.c.b16 %v435, %v434
      %v496 = vpack.c.b16 %v437, %v436
      %v497 = vpack.c.b16 %v439, %v438
      %v498 = vpack.c.b16 %v441, %v440
      %v499 = vpack.c.b16 %v443, %v442
      %v500 = vpack.c.b16 %v445, %v444
      %v501 = vpack.c.b16 %v447, %v446
      %v502 = vpack.c.b16 %v449, %v448
      %v503 = vpack.c.b16 %v451, %v450
      %v504 = vpack.c.b16 %v453, %v452
      %v505 = vpack.c.b16 %v455, %v454
      %v506 = vpack.c.b16 %v457, %v456
      %v507 = vpack.c.b16 %v459, %v458
      %v508 = vpack.c.b16 %v461, %v460
      %v509 = vpack.c.b16 %v463, %v462
      %v510 = vpack.c.b16 %v465, %v464
      %v511 = vpack.c.b16 %v467, %v466
      %v512 = vpack.c.b16 %v469, %v468
      %v513 = vpack.c.b16 %v471, %v470
      %v514 = vpack.c.b16 %v473, %v472
      %v515 = vpack.c.b16 %v475, %v474
      %v516 = vpack.c.b16 %v477, %v476
      %v517 = vpack.c.b16 %v479, %v478
      %v518 = vpack.c.b16 %v480, %v480
      %v573 = vunpack.c.l.b16 %v315
      %v574 = vunpack.c.l.b16 %v316
      %v575 = vunpack.c.l.b16 %v317
      %v576 = vunpack.c.l.b16 %v318
      %v577 = vunpack.c.l.b16 %v319
      %v578 = vunpack.c.l.b16 %v320
      %v579 = vunpack.c.l.b16 %v321
      %v580 = vunpack.c.l.b16 %v322
      %v581 = vunpack.c.l.b16 %v323
      %v582 = vunpack.c.l.b16 %v324
      %v583 = vunpack.c.l.b16 %v325
      %v584 = vunpack.c.l.b16 %v326
      %v585 = vunpack.c.l.b16 %v327
      %v586 = vunpack.c.l.b16 %v328
      %v587 = vunpack.c.l.b16 %v329
      %v588 = vunpack.c.l.b16 %v330
      %v589 = vpack.c.b16 %v574, %v573
      %v590 = vpack.c.b16 %v576, %v575
      %v591 = vpack.c.b16 %v578, %v577
      %v592 = vpack.c.b16 %v580, %v579
      %v593 = vpack.c.b16 %v582, %v581
      %v594 = vpack.c.b16 %v584, %v583
      %v595 = vpack.c.b16 %v586, %v585
      %v596 = vpack.c.b16 %v588, %v587
      %605 = vmatprep.subr.bf16.mxu0 0
      %606 = vmatpush1.bf16.msra.mxu0 %v589
      %607 = vmatprep.subr.bf16.mxu0 0
      %608 = vmatpush1.bf16.msra.mxu0 %v590
      %609 = vmatprep.subr.bf16.mxu0 0
      %610 = vmatpush1.bf16.msra.mxu0 %v591
      %611 = vmatprep.subr.bf16.mxu0 0
      %612 = vmatpush1.bf16.msra.mxu0 %v592
      %613 = vmatprep.subr.bf16.mxu0 0
      %614 = vmatpush1.bf16.msra.mxu0 %v593
      %615 = vmatprep.subr.bf16.mxu0 0
      %616 = vmatpush1.bf16.msra.mxu0 %v594
      %617 = vmatprep.subr.bf16.mxu0 0
      %618 = vmatpush1.bf16.msra.mxu0 %v595
      %619 = vmatprep.subr.bf16.mxu0 0
      %620 = vmatpush1.bf16.msra.mxu0 %v596
      %621 = vmatprep.subr.bf16.mxu0 0
      %622 = vmatpush1.bf16.msra.mxu0 0
      %623 = vmatprep.subr.bf16.mxu0 0
      %624 = vmatpush1.bf16.msra.mxu0 0
      %625 = vmatprep.subr.bf16.mxu0 0
      %626 = vmatpush1.bf16.msra.mxu0 0
      %627 = vmatprep.subr.bf16.mxu0 0
      %628 = vmatpush1.bf16.msra.mxu0 0
      %629 = vmatprep.subr.bf16.mxu0 0
      %630 = vmatpush1.bf16.msra.mxu0 0
      %631 = vmatprep.subr.bf16.mxu0 0
      %632 = vmatpush1.bf16.msra.mxu0 0
      %633 = vmatprep.subr.bf16.mxu0 0
      %634 = vmatpush1.bf16.msra.mxu0 0
      %635 = vmatprep.subr.bf16.mxu0 0
      %636 = vmatpush1.bf16.msra.mxu0 0
      %637 = vmatprep.mubr.bf16.mxu0 0
      %638 = vmatmul.mubr.bf16.gmra.mrb[0].mxu0 %v481
      %v639 = vpop.f32.mrb[0].mxu0
      %v640 = vadd.f32 0.0, %v639
      %v641 = vpop.f32.mrb[0].mxu0
      %v642 = vpop.f32.mrb[0].mxu0
      %v643 = vadd.f32 0.0, %v642
      %v644 = vpop.f32.mrb[0].mxu0
      %645 = vmatprep.mubr.bf16.mxu0 0
      %646 = vmatmul.mubr.bf16.gmra.mrb[0].mxu0 %v482
      %v647 = vpop.f32.mrb[0].mxu0
      %v648 = vadd.f32 0.0, %v647
      %v649 = vpop.f32.mrb[0].mxu0
      %v650 = vpop.f32.mrb[0].mxu0
      %v651 = vadd.f32 0.0, %v650
      %v652 = vpop.f32.mrb[0].mxu0
      %653 = vmatprep.mubr.bf16.mxu0 0
      %654 = vmatmul.mubr.bf16.gmra.mrb[0].mxu0 %v483
      %v655 = vpop.f32.mrb[0].mxu0
      %v656 = vadd.f32 0.0, %v655
      %v657 = vpop.f32.mrb[0].mxu0
      %v658 = vpop.f32.mrb[0].mxu0
      %v659 = vadd.f32 0.0, %v658
      %v660 = vpop.f32.mrb[0].mxu0
      %661 = vmatprep.mubr.bf16.mxu0 0
      %662 = vmatmul.mubr.bf16.gmra.mrb[0].mxu0 %v484
      %v663 = vpop.f32.mrb[0].mxu0
      %v664 = vadd.f32 0.0, %v663
      %v665 = vpop.f32.mrb[0].mxu0
      %v666 = vpop.f32.mrb[0].mxu0
      %v667 = vadd.f32 0.0, %v666
      %v668 = vpop.f32.mrb[0].mxu0
      %669 = vmatprep.mubr.bf16.mxu0 0
      %670 = vmatmul.mubr.bf16.gmra.mrb[0].mxu0 %v485
      %v671 = vpop.f32.mrb[0].mxu0
      %v672 = vadd.f32 0.0, %v671
      %v673 = vpop.f32.mrb[0].mxu0
      %v674 = vpop.f32.mrb[0].mxu0
      %v675 = vadd.f32 0.0, %v674
      %v676 = vpop.f32.mrb[0].mxu0
      %677 = vmatprep.mubr.bf16.mxu0 0
      %678 = vmatmul.mubr.bf16.gmra.mrb[0].mxu0 %v486
      %v679 = vpop.f32.mrb[0].mxu0
      %v680 = vadd.f32 0.0, %v679
      %v681 = vpop.f32.mrb[0].mxu0
      %v682 = vpop.f32.mrb[0].mxu0
      %v683 = vadd.f32 0.0, %v682
      %v684 = vpop.f32.mrb[0].mxu0
      %685 = vmatprep.mubr.bf16.mxu0 0
      %686 = vmatmul.mubr.bf16.gmra.mrb[0].mxu0 %v487
      %v687 = vpop.f32.mrb[0].mxu0
      %v688 = vadd.f32 0.0, %v687
      %v689 = vpop.f32.mrb[0].mxu0
      %v690 = vpop.f32.mrb[0].mxu0
      %v691 = vadd.f32 0.0, %v690
      %v692 = vpop.f32.mrb[0].mxu0
      %693 = vmatprep.mubr.bf16.mxu0 0
      %694 = vmatmul.mubr.bf16.gmra.mrb[0].mxu0 %v488
      %v695 = vpop.f32.mrb[0].mxu0
      %v696 = vadd.f32 0.0, %v695
      %v697 = vpop.f32.mrb[0].mxu0
      %v698 = vpop.f32.mrb[0].mxu0
      %v699 = vadd.f32 0.0, %v698
      %v700 = vpop.f32.mrb[0].mxu0
      %701 = vmatprep.mubr.bf16.mxu0 0
      %702 = vmatmul.mubr.bf16.gmra.mrb[0].mxu0 %v489
      %v703 = vpop.f32.mrb[0].mxu0
      %v704 = vadd.f32 0.0, %v703
      %v705 = vpop.f32.mrb[0].mxu0
      %v706 = vpop.f32.mrb[0].mxu0
      %v707 = vadd.f32 0.0, %v706
      %v708 = vpop.f32.mrb[0].mxu0
      %709 = vmatprep.mubr.bf16.mxu0 0
      %710 = vmatmul.mubr.bf16.gmra.mrb[0].mxu0 %v490
      %v711 = vpop.f32.mrb[0].mxu0
      %v712 = vadd.f32 0.0, %v711
      %v713 = vpop.f32.mrb[0].mxu0
      %v714 = vpop.f32.mrb[0].mxu0
      %v715 = vadd.f32 0.0, %v714
      %v716 = vpop.f32.mrb[0].mxu0
      %717 = vmatprep.mubr.bf16.mxu0 0
      %718 = vmatmul.mubr.bf16.gmra.mrb[0].mxu0 %v491
      %v719 = vpop.f32.mrb[0].mxu0
      %v720 = vadd.f32 0.0, %v719
      %v721 = vpop.f32.mrb[0].mxu0
      %v722 = vpop.f32.mrb[0].mxu0
      %v723 = vadd.f32 0.0, %v722
      %v724 = vpop.f32.mrb[0].mxu0
      %725 = vmatprep.mubr.bf16.mxu0 0
      %726 = vmatmul.mubr.bf16.gmra.mrb[0].mxu0 %v492
      %v727 = vpop.f32.mrb[0].mxu0
      %v728 = vadd.f32 0.0, %v727
      %v729 = vpop.f32.mrb[0].mxu0
      %v730 = vpop.f32.mrb[0].mxu0
      %v731 = vadd.f32 0.0, %v730
      %v732 = vpop.f32.mrb[0].mxu0
      %733 = vmatprep.mubr.bf16.mxu0 0
      %734 = vmatmul.mubr.bf16.gmra.mrb[0].mxu0 %v493
      %v735 = vpop.f32.mrb[0].mxu0
      %v736 = vadd.f32 0.0, %v735
      %v737 = vpop.f32.mrb[0].mxu0
      %v738 = vpop.f32.mrb[0].mxu0
      %v739 = vadd.f32 0.0, %v738
      %v740 = vpop.f32.mrb[0].mxu0
      %741 = vmatprep.mubr.bf16.mxu0 0
      %742 = vmatmul.mubr.bf16.gmra.mrb[0].mxu0 %v494
      %v743 = vpop.f32.mrb[0].mxu0
      %v744 = vadd.f32 0.0, %v743
      %v745 = vpop.f32.mrb[0].mxu0
      %v746 = vpop.f32.mrb[0].mxu0
      %v747 = vadd.f32 0.0, %v746
      %v748 = vpop.f32.mrb[0].mxu0
      %749 = vmatprep.mubr.bf16.mxu0 0
      %750 = vmatmul.mubr.bf16.gmra.mrb[0].mxu0 %v495
      %v751 = vpop.f32.mrb[0].mxu0
      %v752 = vadd.f32 0.0, %v751
      %v753 = vpop.f32.mrb[0].mxu0
      %v754 = vpop.f32.mrb[0].mxu0
      %v755 = vadd.f32 0.0, %v754
      %v756 = vpop.f32.mrb[0].mxu0
      %757 = vmatprep.mubr.bf16.mxu0 0
      %758 = vmatmul.mubr.bf16.gmra.mrb[0].mxu0 %v496
      %v759 = vpop.f32.mrb[0].mxu0
      %v760 = vadd.f32 0.0, %v759
      %v761 = vpop.f32.mrb[0].mxu0
      %v762 = vpop.f32.mrb[0].mxu0
      %v763 = vadd.f32 0.0, %v762
      %v764 = vpop.f32.mrb[0].mxu0
      %765 = vmatprep.mubr.bf16.mxu0 0
      %766 = vmatmul.mubr.bf16.gmra.mrb[0].mxu0 %v497
      %v767 = vpop.f32.mrb[0].mxu0
      %v768 = vadd.f32 0.0, %v767
      %v769 = vpop.f32.mrb[0].mxu0
      %v770 = vpop.f32.mrb[0].mxu0
      %v771 = vadd.f32 0.0, %v770
      %v772 = vpop.f32.mrb[0].mxu0
      %773 = vmatprep.mubr.bf16.mxu0 0
      %774 = vmatmul.mubr.bf16.gmra.mrb[0].mxu0 %v498
      %v775 = vpop.f32.mrb[0].mxu0
      %v776 = vadd.f32 0.0, %v775
      %v777 = vpop.f32.mrb[0].mxu0
      %v778 = vpop.f32.mrb[0].mxu0
      %v779 = vadd.f32 0.0, %v778
      %v780 = vpop.f32.mrb[0].mxu0
      %781 = vmatprep.mubr.bf16.mxu0 0
      %782 = vmatmul.mubr.bf16.gmra.mrb[0].mxu0 %v499
      %v783 = vpop.f32.mrb[0].mxu0
      %v784 = vadd.f32 0.0, %v783
      %v785 = vpop.f32.mrb[0].mxu0
      %v786 = vpop.f32.mrb[0].mxu0
      %v787 = vadd.f32 0.0, %v786
      %v788 = vpop.f32.mrb[0].mxu0
      %789 = vmatprep.mubr.bf16.mxu0 0
      %790 = vmatmul.mubr.bf16.gmra.mrb[0].mxu0 %v500
      %v791 = vpop.f32.mrb[0].mxu0
      %v792 = vadd.f32 0.0, %v791
      %v793 = vpop.f32.mrb[0].mxu0
      %v794 = vpop.f32.mrb[0].mxu0
      %v795 = vadd.f32 0.0, %v794
      %v796 = vpop.f32.mrb[0].mxu0
      %797 = vmatprep.mubr.bf16.mxu0 0
      %798 = vmatmul.mubr.bf16.gmra.mrb[0].mxu0 %v501
      %v799 = vpop.f32.mrb[0].mxu0
      %v800 = vadd.f32 0.0, %v799
      %v801 = vpop.f32.mrb[0].mxu0
      %v802 = vpop.f32.mrb[0].mxu0
      %v803 = vadd.f32 0.0, %v802
      %v804 = vpop.f32.mrb[0].mxu0
      %805 = vmatprep.mubr.bf16.mxu0 0
      %806 = vmatmul.mubr.bf16.gmra.mrb[0].mxu0 %v502
      %v807 = vpop.f32.mrb[0].mxu0
      %v808 = vadd.f32 0.0, %v807
      %v809 = vpop.f32.mrb[0].mxu0
      %v810 = vpop.f32.mrb[0].mxu0
      %v811 = vadd.f32 0.0, %v810
      %v812 = vpop.f32.mrb[0].mxu0
      %813 = vmatprep.mubr.bf16.mxu0 0
      %814 = vmatmul.mubr.bf16.gmra.mrb[0].mxu0 %v503
      %v815 = vpop.f32.mrb[0].mxu0
      %v816 = vadd.f32 0.0, %v815
      %v817 = vpop.f32.mrb[0].mxu0
      %v818 = vpop.f32.mrb[0].mxu0
      %v819 = vadd.f32 0.0, %v818
      %v820 = vpop.f32.mrb[0].mxu0
      %821 = vmatprep.mubr.bf16.mxu0 0
      %822 = vmatmul.mubr.bf16.gmra.mrb[0].mxu0 %v504
      %v823 = vpop.f32.mrb[0].mxu0
      %v824 = vadd.f32 0.0, %v823
      %v825 = vpop.f32.mrb[0].mxu0
      %v826 = vpop.f32.mrb[0].mxu0
      %v827 = vadd.f32 0.0, %v826
      %v828 = vpop.f32.mrb[0].mxu0
      %829 = vmatprep.mubr.bf16.mxu0 0
      %830 = vmatmul.mubr.bf16.gmra.mrb[0].mxu0 %v505
      %v831 = vpop.f32.mrb[0].mxu0
      %v832 = vadd.f32 0.0, %v831
      %v833 = vpop.f32.mrb[0].mxu0
      %v834 = vpop.f32.mrb[0].mxu0
      %v835 = vadd.f32 0.0, %v834
      %v836 = vpop.f32.mrb[0].mxu0
      %837 = vmatprep.mubr.bf16.mxu0 0
      %838 = vmatmul.mubr.bf16.gmra.mrb[0].mxu0 %v506
      %v839 = vpop.f32.mrb[0].mxu0
      %v840 = vadd.f32 0.0, %v839
      %v841 = vpop.f32.mrb[0].mxu0
      %v842 = vpop.f32.mrb[0].mxu0
      %v843 = vadd.f32 0.0, %v842
      %v844 = vpop.f32.mrb[0].mxu0
      %845 = vmatprep.mubr.bf16.mxu0 0
      %846 = vmatmul.mubr.bf16.gmra.mrb[0].mxu0 %v507
      %v847 = vpop.f32.mrb[0].mxu0
      %v848 = vadd.f32 0.0, %v847
      %v849 = vpop.f32.mrb[0].mxu0
      %v850 = vpop.f32.mrb[0].mxu0
      %v851 = vadd.f32 0.0, %v850
      %v852 = vpop.f32.mrb[0].mxu0
      %853 = vmatprep.mubr.bf16.mxu0 0
      %854 = vmatmul.mubr.bf16.gmra.mrb[0].mxu0 %v508
      %v855 = vpop.f32.mrb[0].mxu0
      %v856 = vadd.f32 0.0, %v855
      %v857 = vpop.f32.mrb[0].mxu0
      %v858 = vpop.f32.mrb[0].mxu0
      %v859 = vadd.f32 0.0, %v858
      %v860 = vpop.f32.mrb[0].mxu0
      %861 = vmatprep.mubr.bf16.mxu0 0
      %862 = vmatmul.mubr.bf16.gmra.mrb[0].mxu0 %v509
      %v863 = vpop.f32.mrb[0].mxu0
      %v864 = vadd.f32 0.0, %v863
      %v865 = vpop.f32.mrb[0].mxu0
      %v866 = vpop.f32.mrb[0].mxu0
      %v867 = vadd.f32 0.0, %v866
      %v868 = vpop.f32.mrb[0].mxu0
      %869 = vmatprep.mubr.bf16.mxu0 0
      %870 = vmatmul.mubr.bf16.gmra.mrb[0].mxu0 %v510
      %v871 = vpop.f32.mrb[0].mxu0
      %v872 = vadd.f32 0.0, %v871
      %v873 = vpop.f32.mrb[0].mxu0
      %v874 = vpop.f32.mrb[0].mxu0
      %v875 = vadd.f32 0.0, %v874
      %v876 = vpop.f32.mrb[0].mxu0
      %877 = vmatprep.mubr.bf16.mxu0 0
      %878 = vmatmul.mubr.bf16.gmra.mrb[0].mxu0 %v511
      %v879 = vpop.f32.mrb[0].mxu0
      %v880 = vadd.f32 0.0, %v879
      %v881 = vpop.f32.mrb[0].mxu0
      %v882 = vpop.f32.mrb[0].mxu0
      %v883 = vadd.f32 0.0, %v882
      %v884 = vpop.f32.mrb[0].mxu0
      %885 = vmatprep.mubr.bf16.mxu0 0
      %886 = vmatmul.mubr.bf16.gmra.mrb[0].mxu0 %v512
      %v887 = vpop.f32.mrb[0].mxu0
      %v888 = vadd.f32 0.0, %v887
      %v889 = vpop.f32.mrb[0].mxu0
      %v890 = vpop.f32.mrb[0].mxu0
      %v891 = vadd.f32 0.0, %v890
      %v892 = vpop.f32.mrb[0].mxu0
      %893 = vmatprep.mubr.bf16.mxu0 0
      %894 = vmatmul.mubr.bf16.gmra.mrb[0].mxu0 %v513
      %v895 = vpop.f32.mrb[0].mxu0
      %v896 = vadd.f32 0.0, %v895
      %v897 = vpop.f32.mrb[0].mxu0
      %v898 = vpop.f32.mrb[0].mxu0
      %v899 = vadd.f32 0.0, %v898
      %v900 = vpop.f32.mrb[0].mxu0
      %901 = vmatprep.mubr.bf16.mxu0 0
      %902 = vmatmul.mubr.bf16.gmra.mrb[0].mxu0 %v514
      %v903 = vpop.f32.mrb[0].mxu0
      %v904 = vadd.f32 0.0, %v903
      %v905 = vpop.f32.mrb[0].mxu0
      %v906 = vpop.f32.mrb[0].mxu0
      %v907 = vadd.f32 0.0, %v906
      %v908 = vpop.f32.mrb[0].mxu0
      %909 = vmatprep.mubr.bf16.mxu0 0
      %910 = vmatmul.mubr.bf16.gmra.mrb[0].mxu0 %v515
      %v911 = vpop.f32.mrb[0].mxu0
      %v912 = vadd.f32 0.0, %v911
      %v913 = vpop.f32.mrb[0].mxu0
      %v914 = vpop.f32.mrb[0].mxu0
      %v915 = vadd.f32 0.0, %v914
      %v916 = vpop.f32.mrb[0].mxu0
      %917 = vmatprep.mubr.bf16.mxu0 0
      %918 = vmatmul.mubr.bf16.gmra.mrb[0].mxu0 %v516
      %v919 = vpop.f32.mrb[0].mxu0
      %v920 = vadd.f32 0.0, %v919
      %v921 = vpop.f32.mrb[0].mxu0
      %v922 = vpop.f32.mrb[0].mxu0
      %v923 = vadd.f32 0.0, %v922
      %v924 = vpop.f32.mrb[0].mxu0
      %925 = vmatprep.mubr.bf16.mxu0 0
      %926 = vmatmul.mubr.bf16.gmra.mrb[0].mxu0 %v517
      %v927 = vpop.f32.mrb[0].mxu0
      %v928 = vadd.f32 0.0, %v927
      %v929 = vpop.f32.mrb[0].mxu0
      %v930 = vpop.f32.mrb[0].mxu0
      %v931 = vadd.f32 0.0, %v930
      %v932 = vpop.f32.mrb[0].mxu0
      %933 = vmatprep.mubr.bf16.mxu0 0
      %934 = vmatmul.mubr.bf16.gmra.mrb[0].mxu0 %v518
      %v935 = vpop.f32.mrb[0].mxu0
      %v936 = vadd.f32 0.0, %v935
      %v937 = vpop.f32.mrb[0].mxu0
      %v938 = vpop.f32.mrb[0].mxu0
      %v939 = vpop.f32.mrb[0].mxu0
      %940 = vdwg.mxu0
      %vm941 = vcmask 64512
      %942 = vst.msk [vmem:[%s233] sm:$0xff] %vm941, %v640
      %943 = vst.msk [vmem:[%s233 + $0x8] sm:$0xff] %vm941, %v643
      %944 = vst.msk [vmem:[%s233 + $0x10] sm:$0xff] %vm941, %v648
      %945 = vst.msk [vmem:[%s233 + $0x18] sm:$0xff] %vm941, %v651
      %946 = vst.msk [vmem:[%s233 + $0x20] sm:$0xff] %vm941, %v656
      %947 = vst.msk [vmem:[%s233 + $0x28] sm:$0xff] %vm941, %v659
      %948 = vst.msk [vmem:[%s233 + $0x30] sm:$0xff] %vm941, %v664
      %949 = vst.msk [vmem:[%s233 + $0x38] sm:$0xff] %vm941, %v667
      %950 = vst.msk [vmem:[%s233 + $0x40] sm:$0xff] %vm941, %v672
      %951 = vst.msk [vmem:[%s233 + $0x48] sm:$0xff] %vm941, %v675
      %952 = vst.msk [vmem:[%s233 + $0x50] sm:$0xff] %vm941, %v680
      %953 = vst.msk [vmem:[%s233 + $0x58] sm:$0xff] %vm941, %v683
      %954 = vst.msk [vmem:[%s233 + $0x60] sm:$0xff] %vm941, %v688
      %955 = vst.msk [vmem:[%s233 + $0x68] sm:$0xff] %vm941, %v691
      %956 = vst.msk [vmem:[%s233 + $0x70] sm:$0xff] %vm941, %v696
      %957 = vst.msk [vmem:[%s233 + $0x78] sm:$0xff] %vm941, %v699
      %958 = vst.msk [vmem:[%s233 + $0x80] sm:$0xff] %vm941, %v704
      %959 = vst.msk [vmem:[%s233 + $0x88] sm:$0xff] %vm941, %v707
      %960 = vst.msk [vmem:[%s233 + $0x90] sm:$0xff] %vm941, %v712
      %961 = vst.msk [vmem:[%s233 + $0x98] sm:$0xff] %vm941, %v715
      %962 = vst.msk [vmem:[%s233 + $0xa0] sm:$0xff] %vm941, %v720
      %963 = vst.msk [vmem:[%s233 + $0xa8] sm:$0xff] %vm941, %v723
      %964 = vst.msk [vmem:[%s233 + $0xb0] sm:$0xff] %vm941, %v728
      %965 = vst.msk [vmem:[%s233 + $0xb8] sm:$0xff] %vm941, %v731
      %966 = vst.msk [vmem:[%s233 + $0xc0] sm:$0xff] %vm941, %v736
      %967 = vst.msk [vmem:[%s233 + $0xc8] sm:$0xff] %vm941, %v739
      %968 = vst.msk [vmem:[%s233 + $0xd0] sm:$0xff] %vm941, %v744
      %969 = vst.msk [vmem:[%s233 + $0xd8] sm:$0xff] %vm941, %v747
      %970 = vst.msk [vmem:[%s233 + $0xe0] sm:$0xff] %vm941, %v752
      %971 = vst.msk [vmem:[%s233 + $0xe8] sm:$0xff] %vm941, %v755
      %972 = vst.msk [vmem:[%s233 + $0xf0] sm:$0xff] %vm941, %v760
      %973 = vst.msk [vmem:[%s233 + $0xf8] sm:$0xff] %vm941, %v763
      %974 = vst.msk [vmem:[%s233 + $0x100] sm:$0xff] %vm941, %v768
      %975 = vst.msk [vmem:[%s233 + $0x108] sm:$0xff] %vm941, %v771
      %976 = vst.msk [vmem:[%s233 + $0x110] sm:$0xff] %vm941, %v776
      %977 = vst.msk [vmem:[%s233 + $0x118] sm:$0xff] %vm941, %v779
      %978 = vst.msk [vmem:[%s233 + $0x120] sm:$0xff] %vm941, %v784
      %979 = vst.msk [vmem:[%s233 + $0x128] sm:$0xff] %vm941, %v787
      %980 = vst.msk [vmem:[%s233 + $0x130] sm:$0xff] %vm941, %v792
      %981 = vst.msk [vmem:[%s233 + $0x138] sm:$0xff] %vm941, %v795
      %982 = vst.msk [vmem:[%s233 + $0x140] sm:$0xff] %vm941, %v800
      %983 = vst.msk [vmem:[%s233 + $0x148] sm:$0xff] %vm941, %v803
      %984 = vst.msk [vmem:[%s233 + $0x150] sm:$0xff] %vm941, %v808
      %985 = vst.msk [vmem:[%s233 + $0x158] sm:$0xff] %vm941, %v811
      %986 = vst.msk [vmem:[%s233 + $0x160] sm:$0xff] %vm941, %v816
      %987 = vst.msk [vmem:[%s233 + $0x168] sm:$0xff] %vm941, %v819
      %988 = vst.msk [vmem:[%s233 + $0x170] sm:$0xff] %vm941, %v824
      %989 = vst.msk [vmem:[%s233 + $0x178] sm:$0xff] %vm941, %v827
      %990 = vst.msk [vmem:[%s233 + $0x180] sm:$0xff] %vm941, %v832
      %991 = vst.msk [vmem:[%s233 + $0x188] sm:$0xff] %vm941, %v835
      %992 = vst.msk [vmem:[%s233 + $0x190] sm:$0xff] %vm941, %v840
      %993 = vst.msk [vmem:[%s233 + $0x198] sm:$0xff] %vm941, %v843
      %994 = vst.msk [vmem:[%s233 + $0x1a0] sm:$0xff] %vm941, %v848
      %995 = vst.msk [vmem:[%s233 + $0x1a8] sm:$0xff] %vm941, %v851
      %996 = vst.msk [vmem:[%s233 + $0x1b0] sm:$0xff] %vm941, %v856
      %997 = vst.msk [vmem:[%s233 + $0x1b8] sm:$0xff] %vm941, %v859
      %998 = vst.msk [vmem:[%s233 + $0x1c0] sm:$0xff] %vm941, %v864
      %999 = vst.msk [vmem:[%s233 + $0x1c8] sm:$0xff] %vm941, %v867
      %1000 = vst.msk [vmem:[%s233 + $0x1d0] sm:$0xff] %vm941, %v872
      %1001 = vst.msk [vmem:[%s233 + $0x1d8] sm:$0xff] %vm941, %v875
      %1002 = vst.msk [vmem:[%s233 + $0x1e0] sm:$0xff] %vm941, %v880
      %1003 = vst.msk [vmem:[%s233 + $0x1e8] sm:$0xff] %vm941, %v883
      %1004 = vst.msk [vmem:[%s233 + $0x1f0] sm:$0xff] %vm941, %v888
      %1005 = vst.msk [vmem:[%s233 + $0x1f8] sm:$0xff] %vm941, %v891
      %1006 = vst.msk [vmem:[%s233 + $0x200] sm:$0xff] %vm941, %v896
      %1007 = vst.msk [vmem:[%s233 + $0x208] sm:$0xff] %vm941, %v899
      %1008 = vst.msk [vmem:[%s233 + $0x210] sm:$0xff] %vm941, %v904
      %1009 = vst.msk [vmem:[%s233 + $0x218] sm:$0xff] %vm941, %v907
      %1010 = vst.msk [vmem:[%s233 + $0x220] sm:$0xff] %vm941, %v912
      %1011 = vst.msk [vmem:[%s233 + $0x228] sm:$0xff] %vm941, %v915
      %1012 = vst.msk [vmem:[%s233 + $0x230] sm:$0xff] %vm941, %v920
      %1013 = vst.msk [vmem:[%s233 + $0x238] sm:$0xff] %vm941, %v923
      %1014 = vst.msk [vmem:[%s233 + $0x240] sm:$0xff] %vm941, %v928
      %1015 = vst.msk [vmem:[%s233 + $0x248] sm:$0xff] %vm941, %v931
      %1016 = vst.msk [vmem:[%s233 + $0x250] sm:$0xff] %vm941, %v936
      %v1017 = vadd.f32 %v640, %v643
      %v1018 = vadd.f32 %v1017, %v648
      %v1019 = vadd.f32 %v1018, %v651
      %v1020 = vadd.f32 %v1019, %v656
      %v1021 = vadd.f32 %v1020, %v659
      %v1022 = vadd.f32 %v1021, %v664
      %v1023 = vadd.f32 %v1022, %v667
      %v1024 = vadd.f32 %v1023, %v672
      %v1025 = vadd.f32 %v1024, %v675
      %v1026 = vadd.f32 %v1025, %v680
      %v1027 = vadd.f32 %v1026, %v683
      %v1028 = vadd.f32 %v1027, %v688
      %v1029 = vadd.f32 %v1028, %v691
      %v1030 = vadd.f32 %v1029, %v696
      %v1031 = vadd.f32 %v1030, %v699
      %v1032 = vadd.f32 %v1031, %v704
      %v1033 = vadd.f32 %v1032, %v707
      %v1034 = vadd.f32 %v1033, %v712
      %v1035 = vadd.f32 %v1034, %v715
      %v1036 = vadd.f32 %v1035, %v720
      %v1037 = vadd.f32 %v1036, %v723
      %v1038 = vadd.f32 %v1037, %v728
      %v1039 = vadd.f32 %v1038, %v731
      %v1040 = vadd.f32 %v1039, %v736
      %v1041 = vadd.f32 %v1040, %v739
      %v1042 = vadd.f32 %v1041, %v744
      %v1043 = vadd.f32 %v1042, %v747
      %v1044 = vadd.f32 %v1043, %v752
      %v1045 = vadd.f32 %v1044, %v755
      %v1046 = vadd.f32 %v1045, %v760
      %v1047 = vadd.f32 %v1046, %v763
      %v1048 = vadd.f32 %v1047, %v768
      %v1049 = vadd.f32 %v1048, %v771
      %v1050 = vadd.f32 %v1049, %v776
      %v1051 = vadd.f32 %v1050, %v779
      %v1052 = vadd.f32 %v1051, %v784
      %v1053 = vadd.f32 %v1052, %v787
      %v1054 = vadd.f32 %v1053, %v792
      %v1055 = vadd.f32 %v1054, %v795
      %v1056 = vadd.f32 %v1055, %v800
      %v1057 = vadd.f32 %v1056, %v803
      %v1058 = vadd.f32 %v1057, %v808
      %v1059 = vadd.f32 %v1058, %v811
      %v1060 = vadd.f32 %v1059, %v816
      %v1061 = vadd.f32 %v1060, %v819
      %v1062 = vadd.f32 %v1061, %v824
      %v1063 = vadd.f32 %v1062, %v827
      %v1064 = vadd.f32 %v1063, %v832
      %v1065 = vadd.f32 %v1064, %v835
      %v1066 = vadd.f32 %v1065, %v840
      %v1067 = vadd.f32 %v1066, %v843
      %v1068 = vadd.f32 %v1067, %v848
      %v1069 = vadd.f32 %v1068, %v851
      %v1070 = vadd.f32 %v1069, %v856
      %v1071 = vadd.f32 %v1070, %v859
      %v1072 = vadd.f32 %v1071, %v864
      %v1073 = vadd.f32 %v1072, %v867
      %v1074 = vadd.f32 %v1073, %v872
      %v1075 = vadd.f32 %v1074, %v875
      %v1076 = vadd.f32 %v1075, %v880
      %v1077 = vadd.f32 %v1076, %v883
      %v1078 = vadd.f32 %v1077, %v888
      %v1079 = vadd.f32 %v1078, %v891
      %v1080 = vadd.f32 %v1079, %v896
      %v1081 = vadd.f32 %v1080, %v899
      %v1082 = vadd.f32 %v1081, %v904
      %v1083 = vadd.f32 %v1082, %v907
      %v1084 = vadd.f32 %v1083, %v912
      %v1085 = vadd.f32 %v1084, %v915
      %v1086 = vadd.f32 %v1085, %v920
      %v1087 = vadd.f32 %v1086, %v923
      %v1088 = vadd.f32 %v1087, %v928
      %v1089 = vadd.f32 %v1088, %v931
      %v1090 = vadd.f32 %v1089, %v936
      %v1091 = vrot.slane %v1090, 4
      %v1092 = vadd.f32 %v1090, %v1091
      %v1093 = vrot.slane %v1092, 2
      %v1094 = vadd.f32 %v1092, %v1093
      %v1095 = vrot.slane %v1094, 1
      %v1096 = vadd.f32 %v1094, %v1095
      %1097 = vst [vmem:[%s238] sm:$0x1] %v1096
      %v1098 = vmul.f32 %v640, %v640
      %v1099 = vmul.f32 %v643, %v643
      %v1100 = vmul.f32 %v648, %v648
      %v1101 = vmul.f32 %v651, %v651
      %v1102 = vmul.f32 %v656, %v656
      %v1103 = vmul.f32 %v659, %v659
      %v1104 = vmul.f32 %v664, %v664
      %v1105 = vmul.f32 %v667, %v667
      %v1106 = vmul.f32 %v672, %v672
      %v1107 = vmul.f32 %v675, %v675
      %v1108 = vmul.f32 %v680, %v680
      %v1109 = vmul.f32 %v683, %v683
      %v1110 = vmul.f32 %v688, %v688
      %v1111 = vmul.f32 %v691, %v691
      %v1112 = vmul.f32 %v696, %v696
      %v1113 = vmul.f32 %v699, %v699
      %v1114 = vmul.f32 %v704, %v704
      %v1115 = vmul.f32 %v707, %v707
      %v1116 = vmul.f32 %v712, %v712
      %v1117 = vmul.f32 %v715, %v715
      %v1118 = vmul.f32 %v720, %v720
      %v1119 = vmul.f32 %v723, %v723
      %v1120 = vmul.f32 %v728, %v728
      %v1121 = vmul.f32 %v731, %v731
      %v1122 = vmul.f32 %v736, %v736
      %v1123 = vmul.f32 %v739, %v739
      %v1124 = vmul.f32 %v744, %v744
      %v1125 = vmul.f32 %v747, %v747
      %v1126 = vmul.f32 %v752, %v752
      %v1127 = vmul.f32 %v755, %v755
      %v1128 = vmul.f32 %v760, %v760
      %v1129 = vmul.f32 %v763, %v763
      %v1130 = vmul.f32 %v768, %v768
      %v1131 = vmul.f32 %v771, %v771
      %v1132 = vmul.f32 %v776, %v776
      %v1133 = vmul.f32 %v779, %v779
      %v1134 = vmul.f32 %v784, %v784
      %v1135 = vmul.f32 %v787, %v787
      %v1136 = vmul.f32 %v792, %v792
      %v1137 = vmul.f32 %v795, %v795
      %v1138 = vmul.f32 %v800, %v800
      %v1139 = vmul.f32 %v803, %v803
      %v1140 = vmul.f32 %v808, %v808
      %v1141 = vmul.f32 %v811, %v811
      %v1142 = vmul.f32 %v816, %v816
      %v1143 = vmul.f32 %v819, %v819
      %v1144 = vmul.f32 %v824, %v824
      %v1145 = vmul.f32 %v827, %v827
      %v1146 = vmul.f32 %v832, %v832
      %v1147 = vmul.f32 %v835, %v835
      %v1148 = vmul.f32 %v840, %v840
      %v1149 = vmul.f32 %v843, %v843
      %v1150 = vmul.f32 %v848, %v848
      %v1151 = vmul.f32 %v851, %v851
      %v1152 = vmul.f32 %v856, %v856
      %v1153 = vmul.f32 %v859, %v859
      %v1154 = vmul.f32 %v864, %v864
      %v1155 = vmul.f32 %v867, %v867
      %v1156 = vmul.f32 %v872, %v872
      %v1157 = vmul.f32 %v875, %v875
      %v1158 = vmul.f32 %v880, %v880
      %v1159 = vmul.f32 %v883, %v883
      %v1160 = vmul.f32 %v888, %v888
      %v1161 = vmul.f32 %v891, %v891
      %v1162 = vmul.f32 %v896, %v896
      %v1163 = vmul.f32 %v899, %v899
      %v1164 = vmul.f32 %v904, %v904
      %v1165 = vmul.f32 %v907, %v907
      %v1166 = vmul.f32 %v912, %v912
      %v1167 = vmul.f32 %v915, %v915
      %v1168 = vmul.f32 %v920, %v920
      %v1169 = vmul.f32 %v923, %v923
      %v1170 = vmul.f32 %v928, %v928
      %v1171 = vmul.f32 %v931, %v931
      %v1172 = vmul.f32 %v936, %v936
      %v1173 = vadd.f32 %v1098, %v1099
      %v1174 = vadd.f32 %v1173, %v1100
      %v1175 = vadd.f32 %v1174, %v1101
      %v1176 = vadd.f32 %v1175, %v1102
      %v1177 = vadd.f32 %v1176, %v1103
      %v1178 = vadd.f32 %v1177, %v1104
      %v1179 = vadd.f32 %v1178, %v1105
      %v1180 = vadd.f32 %v1179, %v1106
      %v1181 = vadd.f32 %v1180, %v1107
      %v1182 = vadd.f32 %v1181, %v1108
      %v1183 = vadd.f32 %v1182, %v1109
      %v1184 = vadd.f32 %v1183, %v1110
      %v1185 = vadd.f32 %v1184, %v1111
      %v1186 = vadd.f32 %v1185, %v1112
      %v1187 = vadd.f32 %v1186, %v1113
      %v1188 = vadd.f32 %v1187, %v1114
      %v1189 = vadd.f32 %v1188, %v1115
      %v1190 = vadd.f32 %v1189, %v1116
      %v1191 = vadd.f32 %v1190, %v1117
      %v1192 = vadd.f32 %v1191, %v1118
      %v1193 = vadd.f32 %v1192, %v1119
      %v1194 = vadd.f32 %v1193, %v1120
      %v1195 = vadd.f32 %v1194, %v1121
      %v1196 = vadd.f32 %v1195, %v1122
      %v1197 = vadd.f32 %v1196, %v1123
      %v1198 = vadd.f32 %v1197, %v1124
      %v1199 = vadd.f32 %v1198, %v1125
      %v1200 = vadd.f32 %v1199, %v1126
      %v1201 = vadd.f32 %v1200, %v1127
      %v1202 = vadd.f32 %v1201, %v1128
      %v1203 = vadd.f32 %v1202, %v1129
      %v1204 = vadd.f32 %v1203, %v1130
      %v1205 = vadd.f32 %v1204, %v1131
      %v1206 = vadd.f32 %v1205, %v1132
      %v1207 = vadd.f32 %v1206, %v1133
      %v1208 = vadd.f32 %v1207, %v1134
      %v1209 = vadd.f32 %v1208, %v1135
      %v1210 = vadd.f32 %v1209, %v1136
      %v1211 = vadd.f32 %v1210, %v1137
      %v1212 = vadd.f32 %v1211, %v1138
      %v1213 = vadd.f32 %v1212, %v1139
      %v1214 = vadd.f32 %v1213, %v1140
      %v1215 = vadd.f32 %v1214, %v1141
      %v1216 = vadd.f32 %v1215, %v1142
      %v1217 = vadd.f32 %v1216, %v1143
      %v1218 = vadd.f32 %v1217, %v1144
      %v1219 = vadd.f32 %v1218, %v1145
      %v1220 = vadd.f32 %v1219, %v1146
      %v1221 = vadd.f32 %v1220, %v1147
      %v1222 = vadd.f32 %v1221, %v1148
      %v1223 = vadd.f32 %v1222, %v1149
      %v1224 = vadd.f32 %v1223, %v1150
      %v1225 = vadd.f32 %v1224, %v1151
      %v1226 = vadd.f32 %v1225, %v1152
      %v1227 = vadd.f32 %v1226, %v1153
      %v1228 = vadd.f32 %v1227, %v1154
      %v1229 = vadd.f32 %v1228, %v1155
      %v1230 = vadd.f32 %v1229, %v1156
      %v1231 = vadd.f32 %v1230, %v1157
      %v1232 = vadd.f32 %v1231, %v1158
      %v1233 = vadd.f32 %v1232, %v1159
      %v1234 = vadd.f32 %v1233, %v1160
      %v1235 = vadd.f32 %v1234, %v1161
      %v1236 = vadd.f32 %v1235, %v1162
      %v1237 = vadd.f32 %v1236, %v1163
      %v1238 = vadd.f32 %v1237, %v1164
      %v1239 = vadd.f32 %v1238, %v1165
      %v1240 = vadd.f32 %v1239, %v1166
      %v1241 = vadd.f32 %v1240, %v1167
      %v1242 = vadd.f32 %v1241, %v1168
      %v1243 = vadd.f32 %v1242, %v1169
      %v1244 = vadd.f32 %v1243, %v1170
      %v1245 = vadd.f32 %v1244, %v1171
      %v1246 = vadd.f32 %v1245, %v1172
      %v1247 = vrot.slane %v1246, 4
      %v1248 = vadd.f32 %v1246, %v1247
      %v1249 = vrot.slane %v1248, 2
      %v1250 = vadd.f32 %v1248, %v1249
      %v1251 = vrot.slane %v1250, 1
      %v1252 = vadd.f32 %v1250, %v1251
      %1253 = vst [vmem:[%s238 + $0x1] sm:$0x1] %v1252
      %s1254 = smul.u32 75, %s17
      %p1255 = scmp.lt.s32.totalorder %s1254, 224
      %s1256 = scalar_select %p1255, %s1254, 224
      %s1257 = smul.addr %s1256, 8
      %s1258 = scalar_lea.vmem %s4, %s1257
      %p1259 = scmp.lt.s32.totalorder %s17, 2
      %s1260 = scalar_select %p1259, %s17, 2
      %s1261 = smul.addr %s1260, 2
      %s1262 = scalar_lea.vmem %s5, %s1261
      // Predicated region
      $region37: #{up_conv_forward.4} parent=35 // pred_check
        %p1263 = pneg %p124
      $region38: #{up_conv_forward.4} parent=35 // pred_check_branch
        %1265 = sbr.rel (%p1263) target = $region40
      $region39: #{up_conv_forward.4} parent=35 // pred_region
        %s1266 = smul.u32 75, %s17
      $region40: #{up_conv_forward.4} parent=35 // pred_fallthru
        _
      // Predicated region
      $region41: #{up_conv_forward.4} parent=35 // pred_check
        %p1267 = pneg %p150
      $region42: #{up_conv_forward.4} parent=35 // pred_check_branch
        %1269 = sbr.rel (%p1267) target = $region44
      $region43: #{up_conv_forward.4} parent=35 // pred_region
        _
      $region44: #{up_conv_forward.4} parent=35 // pred_fallthru
        _
    $region36: #{up_conv_forward.4} parent=5 // pred_fallthru
      _
    %p1270 = scmp.le.s32.totalorder 2, %s12
    // Predicated region
    $region45: #{up_conv_forward.4} parent=5 // pred_check
      %p1271 = pneg %p1270
    $region46: #{up_conv_forward.4} parent=5 // pred_check_branch
      %1273 = sbr.rel (%p1271) target = $region48
    $region47: #{up_conv_forward.4} parent=5 // pred_region
      %s1274 = ssub.s32 %s12, 2
      // Predicated region
      $region49: #{up_conv_forward.4} parent=47 // pred_check
        %p1275 = pneg %p130
      $region50: #{up_conv_forward.4} parent=47 // pred_check_branch
        %1277 = sbr.rel (%p1275) target = $region52
      $region51: #{up_conv_forward.4} parent=47 // pred_region
        %s1278 = smul.u32 75, %s18
        %p1279 = scmp.lt.s32.totalorder %s1278, 224
        %s1280 = scalar_select %p1279, %s1278, 224
        %s1281 = smul.addr %s1280, 8
        %s1282 = scalar_lea.vmem %s4, %s1281
      $region52: #{up_conv_forward.4} parent=47 // pred_fallthru
        _
      // Predicated region
      $region53: #{up_conv_forward.4} parent=47 // pred_check
        %p1283 = pneg %p156
      $region54: #{up_conv_forward.4} parent=47 // pred_check_branch
        %1285 = sbr.rel (%p1283) target = $region56
      $region55: #{up_conv_forward.4} parent=47 // pred_region
        %p1286 = scmp.lt.s32.totalorder %s18, 2
        %s1287 = scalar_select %p1286, %s18, 2
        %s1288 = smul.addr %s1287, 2
        %s1289 = scalar_lea.vmem %s5, %s1288
      $region56: #{up_conv_forward.4} parent=47 // pred_fallthru
        _
    $region48: #{up_conv_forward.4} parent=5 // pred_fallthru
      _
  $region6: #{up_conv_forward.4} parent=0 // loop_footer
    %s16 = sadd.s32 1, %s12
  $region7: #{up_conv_forward.4} parent=0 // loop_footer_branch
    %11 = sbr.rel target = $region3
  $region8: #{up_conv_forward.4} parent=0 // loop_exit
    _

// kernel: up_conv_forward.5
$region0: #{up_conv_forward.5}
  #allocation0 [shape = 'u32[]', space=smem, size = 0x4, offset = 0x4, fixed_abs, tag = 'smem constant byte address 0x4 - core index']
  #allocation1 [shape = 'u32[144,128]{1,0:T(1,128)}', space=vmem, size = 0x12000, scoped, tag = 'internal scratch']
  %s0 = inlined_call_operand.vmem [shape: bf16[1568,128], index: 0, kind: input, shape index: {}]
  %s1 = inlined_call_operand.vmem [shape: bf16[128,128], index: 1, kind: input, shape index: {}]
  %s2 = inlined_call_operand.vmem [shape: f32[1,128], index: 2, kind: input, shape index: {}]
  %s3 = inlined_call_operand.vmem [shape: f32[1,128], index: 3, kind: input, shape index: {}]
  %s4 = inlined_call_operand.vmem [shape: f32[1568,8], index: 4, kind: output, shape index: {0}]
  %s5 = inlined_call_operand.vmem [shape: f32[2,2,128], index: 5, kind: output, shape index: {1}]
  %6 = xla_tuple %s4, %s5
  %s7 = sld [smem:[#allocation0]]
  $region57: #{up_conv_forward.5} parent=0
    _
  %s9 = ssub.s32 1, %s7
  %s10 = scalar_select 0, %s9, %s7
  loop: start=0, step=1, limit=4
  $region2: #{up_conv_forward.5} parent=0 // loop_pre_header
    _
  $region3: #{up_conv_forward.5} parent=0 // loop_header
    %s12 = sphi 0, %s16
    %p13 = scmp.ge.s32.totalorder %s12, 4
    %s22 = sphi 0, %s24
    %s25 = sphi 0, %s22
    %s26 = sphi 0, %s25
    %s42 = sphi 0, %s26
    %s46 = sphi 0, %s46
    %s48 = sphi 0, %s46
    %s49 = sphi 0, %s48
    %s63 = sphi 0, %s49
    %s67 = sphi 0, %s67
    %s69 = sphi 0, %s67
    %s70 = sphi 0, %s69
    %s84 = sphi 0, %s70
    %s88 = sphi 0, %s88
    %s90 = sphi 0, %s88
    %s91 = sphi 0, %s90
    %s105 = sphi 0, %s91
    %s111 = sphi 0, %s113
    %s114 = sphi 0, %s111
    %s115 = sphi 0, %s114
    %s131 = sphi 0, %s115
    %s137 = sphi 0, %s139
    %s140 = sphi 0, %s137
    %s141 = sphi 0, %s140
    %s157 = sphi 0, %s141
  $region4: #{up_conv_forward.5} parent=0 // loop_header_branch
    %15 = sbr.rel (%p13) target = $region8
  $region5: #{up_conv_forward.5} parent=0 // loop_body
    %s17 = ssub.s32 %s12, 1
    %s18 = ssub.s32 %s12, 2
    %s19 = sadd.s32 %s12, 1
    %s20 = ssub.s32 %s12, %s19
    %p21 = scmp.eq.s32.totalorder %s20, 0
    %s23 = sadd.s32 %s22, 1
    %s24 = scalar_select %p21, %s22, %s23
    %p27 = pneg %p21
    %p28 = scmp.eq.s32.totalorder %s12, 1
    %p29 = por %p27, %p28
    %p30 = scmp.ne.s32.totalorder %s22, %s25
    %p31 = scmp.eq.s32.totalorder %s12, 0
    %p32 = por %p30, %p31
    %p33 = scmp.ne.s32.totalorder %s22, %s25
    %p34 = scmp.eq.s32.totalorder %s17, 1
    %p35 = por %p33, %p34
    %p36 = scmp.ne.s32.totalorder %s25, %s26
    %p37 = scmp.eq.s32.totalorder %s17, 0
    %p38 = por %p36, %p37
    %p39 = scmp.ne.s32.totalorder %s25, %s26
    %p40 = scmp.eq.s32.totalorder %s18, 1
    %p41 = por %p39, %p40
    %p43 = scmp.ne.s32.totalorder %s26, %s42
    %p44 = scmp.eq.s32.totalorder %s18, 0
    %p45 = por %p43, %p44
    %s47 = sadd.s32 %s46, 1
    %p50 = scmp.eq.s32.totalorder %s12, 1
    %p51 = scmp.ne.s32.totalorder %s46, %s48
    %p52 = scmp.eq.s32.totalorder %s12, 0
    %p53 = por %p51, %p52
    %p54 = scmp.ne.s32.totalorder %s46, %s48
    %p55 = scmp.eq.s32.totalorder %s17, 1
    %p56 = por %p54, %p55
    %p57 = scmp.ne.s32.totalorder %s48, %s49
    %p58 = scmp.eq.s32.totalorder %s17, 0
    %p59 = por %p57, %p58
    %p60 = scmp.ne.s32.totalorder %s48, %s49
    %p61 = scmp.eq.s32.totalorder %s18, 1
    %p62 = por %p60, %p61
    %p64 = scmp.ne.s32.totalorder %s49, %s63
    %p65 = scmp.eq.s32.totalorder %s18, 0
    %p66 = por %p64, %p65
    %s68 = sadd.s32 %s67, 1
    %p71 = scmp.eq.s32.totalorder %s12, 1
    %p72 = scmp.ne.s32.totalorder %s67, %s69
    %p73 = scmp.eq.s32.totalorder %s12, 0
    %p74 = por %p72, %p73
    %p75 = scmp.ne.s32.totalorder %s67, %s69
    %p76 = scmp.eq.s32.totalorder %s17, 1
    %p77 = por %p75, %p76
    %p78 = scmp.ne.s32.totalorder %s69, %s70
    %p79 = scmp.eq.s32.totalorder %s17, 0
    %p80 = por %p78, %p79
    %p81 = scmp.ne.s32.totalorder %s69, %s70
    %p82 = scmp.eq.s32.totalorder %s18, 1
    %p83 = por %p81, %p82
    %p85 = scmp.ne.s32.totalorder %s70, %s84
    %p86 = scmp.eq.s32.totalorder %s18, 0
    %p87 = por %p85, %p86
    %s89 = sadd.s32 %s88, 1
    %p92 = scmp.eq.s32.totalorder %s12, 1
    %p93 = scmp.ne.s32.totalorder %s88, %s90
    %p94 = scmp.eq.s32.totalorder %s12, 0
    %p95 = por %p93, %p94
    %p96 = scmp.ne.s32.totalorder %s88, %s90
    %p97 = scmp.eq.s32.totalorder %s17, 1
    %p98 = por %p96, %p97
    %p99 = scmp.ne.s32.totalorder %s90, %s91
    %p100 = scmp.eq.s32.totalorder %s17, 0
    %p101 = por %p99, %p100
    %p102 = scmp.ne.s32.totalorder %s90, %s91
    %p103 = scmp.eq.s32.totalorder %s18, 1
    %p104 = por %p102, %p103
    %p106 = scmp.ne.s32.totalorder %s91, %s105
    %p107 = scmp.eq.s32.totalorder %s18, 0
    %p108 = por %p106, %p107
    %s109 = ssub.s32 %s12, %s19
    %p110 = scmp.eq.s32.totalorder %s109, 0
    %s112 = sadd.s32 %s111, 1
    %s113 = scalar_select %p110, %s111, %s112
    %p116 = pneg %p110
    %p117 = scmp.eq.s32.totalorder %s12, 1
    %p118 = por %p116, %p117
    %p119 = scmp.ne.s32.totalorder %s111, %s114
    %p120 = scmp.eq.s32.totalorder %s12, 0
    %p121 = por %p119, %p120
    %p122 = scmp.ne.s32.totalorder %s111, %s114
    %p123 = scmp.eq.s32.totalorder %s17, 1
    %p124 = por %p122, %p123
    %p125 = scmp.ne.s32.totalorder %s114, %s115
    %p126 = scmp.eq.s32.totalorder %s17, 0
    %p127 = por %p125, %p126
    %p128 = scmp.ne.s32.totalorder %s114, %s115
    %p129 = scmp.eq.s32.totalorder %s18, 1
    %p130 = por %p128, %p129
    %p132 = scmp.ne.s32.totalorder %s115, %s131
    %p133 = scmp.eq.s32.totalorder %s18, 0
    %p134 = por %p132, %p133
    %s135 = ssub.s32 %s12, %s19
    %p136 = scmp.eq.s32.totalorder %s135, 0
    %s138 = sadd.s32 %s137, 1
    %s139 = scalar_select %p136, %s137, %s138
    %p142 = pneg %p136
    %p143 = scmp.eq.s32.totalorder %s12, 1
    %p144 = por %p142, %p143
    %p145 = scmp.ne.s32.totalorder %s137, %s140
    %p146 = scmp.eq.s32.totalorder %s12, 0
    %p147 = por %p145, %p146
    %p148 = scmp.ne.s32.totalorder %s137, %s140
    %p149 = scmp.eq.s32.totalorder %s17, 1
    %p150 = por %p148, %p149
    %p151 = scmp.ne.s32.totalorder %s140, %s141
    %p152 = scmp.eq.s32.totalorder %s17, 0
    %p153 = por %p151, %p152
    %p154 = scmp.ne.s32.totalorder %s140, %s141
    %p155 = scmp.eq.s32.totalorder %s18, 1
    %p156 = por %p154, %p155
    %p158 = scmp.ne.s32.totalorder %s141, %s157
    %p159 = scmp.eq.s32.totalorder %s18, 0
    %p160 = por %p158, %p159
    %p161 = scmp.le.s32.totalorder 1, %s12
    %p162 = scmp.lt.s32.totalorder %s12, 3
    %p163 = pnand %p161, %p162
    %p164 = pneg %p163
    // Predicated region
    $region9: #{up_conv_forward.5} parent=5 // pred_check
      _
    $region10: #{up_conv_forward.5} parent=5 // pred_check_branch
      %166 = sbr.rel (%p163) target = $region12
    $region11: #{up_conv_forward.5} parent=5 // pred_region
      %s167 = ssub.s32 %s12, 1
      // Predicated region
      $region13: #{up_conv_forward.5} parent=11 // pred_check
        %p168 = pneg %p59
      $region14: #{up_conv_forward.5} parent=11 // pred_check_branch
        %170 = sbr.rel (%p168) target = $region16
      $region15: #{up_conv_forward.5} parent=11 // pred_region
        _
      $region16: #{up_conv_forward.5} parent=11 // pred_fallthru
        _
      // Predicated region
      $region17: #{up_conv_forward.5} parent=11 // pred_check
        %p171 = pneg %p80
      $region18: #{up_conv_forward.5} parent=11 // pred_check_branch
        %173 = sbr.rel (%p171) target = $region20
      $region19: #{up_conv_forward.5} parent=11 // pred_region
        _
      $region20: #{up_conv_forward.5} parent=11 // pred_fallthru
        _
      // Predicated region
      $region21: #{up_conv_forward.5} parent=11 // pred_check
        %p174 = pneg %p101
      $region22: #{up_conv_forward.5} parent=11 // pred_check_branch
        %176 = sbr.rel (%p174) target = $region24
      $region23: #{up_conv_forward.5} parent=11 // pred_region
        _
      $region24: #{up_conv_forward.5} parent=11 // pred_fallthru
        _
    $region12: #{up_conv_forward.5} parent=5 // pred_fallthru
      _
    %p177 = scmp.lt.s32.totalorder %s12, 2
    // Predicated region
    $region25: #{up_conv_forward.5} parent=5 // pred_check
      %p178 = pneg %p177
    $region26: #{up_conv_forward.5} parent=5 // pred_check_branch
      %180 = sbr.rel (%p178) target = $region28
    $region27: #{up_conv_forward.5} parent=5 // pred_region
      // Predicated region
      $region29: #{up_conv_forward.5} parent=27 // pred_check
        %p181 = pneg %p32
      $region30: #{up_conv_forward.5} parent=27 // pred_check_branch
        %183 = sbr.rel (%p181) target = $region32
      $region31: #{up_conv_forward.5} parent=27 // pred_region
        %s184 = smul.u32 98, %s12
        %p185 = scmp.lt.s32.totalorder %s184, 195
        %s186 = scalar_select %p185, %s184, 195
        %s187 = smul.addr %s186, 4
        %s188 = scalar_lea.vmem %s0, %s187
        %s189 = smul.u32 98, %s12
      $region32: #{up_conv_forward.5} parent=27 // pred_fallthru
        _
    $region28: #{up_conv_forward.5} parent=5 // pred_fallthru
      _
    %p190 = scmp.le.s32.totalorder 1, %s12
    %p191 = scmp.lt.s32.totalorder %s12, 3
    %p192 = pnand %p190, %p191
    %p193 = pneg %p192
    // Predicated region
    $region33: #{up_conv_forward.5} parent=5 // pred_check
      _
    $region34: #{up_conv_forward.5} parent=5 // pred_check_branch
      %195 = sbr.rel (%p192) target = $region36
    $region35: #{up_conv_forward.5} parent=5 // pred_region
      %s196 = ssub.s32 %s12, 1
      %s197 = smul.u32 98, %s17
      %p198 = scmp.lt.s32.totalorder %s197, 195
      %s199 = scalar_select %p198, %s197, 195
      %s200 = smul.addr %s199, 4
      %s201 = scalar_lea.vmem %s0, %s200
      %p202 = pneg %p38
      %p203 = pneg %p35
      %p204 = pneg %p59
      %p205 = pneg %p56
      %p206 = pneg %p80
      %p207 = pneg %p77
      %p208 = pneg %p101
      %p209 = pneg %p98
      %p210 = pneg %p127
      %p211 = pneg %p124
      %s212 = smul.u32 98, %s17
      %p213 = scmp.lt.s32.totalorder %s212, 195
      %s214 = scalar_select %p213, %s212, 195
      %s215 = smul.addr %s214, 8
      %s216 = scalar_lea.vmem %s4, %s215
      %p217 = pneg %p153
      %p218 = pneg %p150
      %p219 = scmp.lt.s32.totalorder %s17, 1
      %s220 = scalar_select %p219, %s17, 1
      %s221 = smul.addr %s220, 2
      %s222 = scalar_lea.vmem %s5, %s221
      %s223 = smul.u32 98, %s17
      %p224 = scmp.lt.s32.totalorder %s223, 195
      %s225 = scalar_select %p224, %s223, 195
      %s226 = smul.addr %s225, 4
      %s227 = scalar_lea.vmem %s0, %s226
      %s228 = smul.u32 98, %s17
      %s229 = smul.u32 98, %s17
      %p230 = scmp.lt.s32.totalorder %s229, 195
      %s231 = scalar_select %p230, %s229, 195
      %s232 = smul.addr %s231, 8
      %s233 = scalar_lea.vmem %s4, %s232
      %s234 = smul.u32 98, %s17
      %p235 = scmp.lt.s32.totalorder %s17, 1
      %s236 = scalar_select %p235, %s17, 1
      %s237 = smul.addr %s236, 2
      %s238 = scalar_lea.vmem %s5, %s237
      %v240 = vld [vmem:[%s227] sm:$0xf]
      %v241 = vld [vmem:[%s227 + $0x4] sm:$0xf]
      %v242 = vld [vmem:[%s227 + $0x8] sm:$0xf]
      %v243 = vld [vmem:[%s227 + $0xc] sm:$0xf]
      %v244 = vld [vmem:[%s227 + $0x10] sm:$0xf]
      %v245 = vld [vmem:[%s227 + $0x14] sm:$0xf]
      %v246 = vld [vmem:[%s227 + $0x18] sm:$0xf]
      %v247 = vld [vmem:[%s227 + $0x1c] sm:$0xf]
      %v248 = vld [vmem:[%s227 + $0x20] sm:$0xf]
      %v249 = vld [vmem:[%s227 + $0x24] sm:$0xf]
      %v250 = vld [vmem:[%s227 + $0x28] sm:$0xf]
      %v251 = vld [vmem:[%s227 + $0x2c] sm:$0xf]
      %v252 = vld [vmem:[%s227 + $0x30] sm:$0xf]
      %v253 = vld [vmem:[%s227 + $0x34] sm:$0xf]
      %v254 = vld [vmem:[%s227 + $0x38] sm:$0xf]
      %v255 = vld [vmem:[%s227 + $0x3c] sm:$0xf]
      %v256 = vld [vmem:[%s227 + $0x40] sm:$0xf]
      %v257 = vld [vmem:[%s227 + $0x44] sm:$0xf]
      %v258 = vld [vmem:[%s227 + $0x48] sm:$0xf]
      %v259 = vld [vmem:[%s227 + $0x4c] sm:$0xf]
      %v260 = vld [vmem:[%s227 + $0x50] sm:$0xf]
      %v261 = vld [vmem:[%s227 + $0x54] sm:$0xf]
      %v262 = vld [vmem:[%s227 + $0x58] sm:$0xf]
      %v263 = vld [vmem:[%s227 + $0x5c] sm:$0xf]
      %v264 = vld [vmem:[%s227 + $0x60] sm:$0xf]
      %v265 = vld [vmem:[%s227 + $0x64] sm:$0xf]
      %v266 = vld [vmem:[%s227 + $0x68] sm:$0xf]
      %v267 = vld [vmem:[%s227 + $0x6c] sm:$0xf]
      %v268 = vld [vmem:[%s227 + $0x70] sm:$0xf]
      %v269 = vld [vmem:[%s227 + $0x74] sm:$0xf]
      %v270 = vld [vmem:[%s227 + $0x78] sm:$0xf]
      %v271 = vld [vmem:[%s227 + $0x7c] sm:$0xf]
      %v272 = vld [vmem:[%s227 + $0x80] sm:$0xf]
      %v273 = vld [vmem:[%s227 + $0x84] sm:$0xf]
      %v274 = vld [vmem:[%s227 + $0x88] sm:$0xf]
      %v275 = vld [vmem:[%s227 + $0x8c] sm:$0xf]
      %v276 = vld [vmem:[%s227 + $0x90] sm:$0xf]
      %v277 = vld [vmem:[%s227 + $0x94] sm:$0xf]
      %v278 = vld [vmem:[%s227 + $0x98] sm:$0xf]
      %v279 = vld [vmem:[%s227 + $0x9c] sm:$0xf]
      %v280 = vld [vmem:[%s227 + $0xa0] sm:$0xf]
      %v281 = vld [vmem:[%s227 + $0xa4] sm:$0xf]
      %v282 = vld [vmem:[%s227 + $0xa8] sm:$0xf]
      %v283 = vld [vmem:[%s227 + $0xac] sm:$0xf]
      %v284 = vld [vmem:[%s227 + $0xb0] sm:$0xf]
      %v285 = vld [vmem:[%s227 + $0xb4] sm:$0xf]
      %v286 = vld [vmem:[%s227 + $0xb8] sm:$0xf]
      %v287 = vld [vmem:[%s227 + $0xbc] sm:$0xf]
      %v288 = vld [vmem:[%s227 + $0xc0] sm:$0xf]
      %v289 = vld [vmem:[%s227 + $0xc4] sm:$0xf]
      %v290 = vld [vmem:[%s227 + $0xc8] sm:$0xf]
      %v291 = vld [vmem:[%s227 + $0xcc] sm:$0xf]
      %v292 = vld [vmem:[%s227 + $0xd0] sm:$0xf]
      %v293 = vld [vmem:[%s227 + $0xd4] sm:$0xf]
      %v294 = vld [vmem:[%s227 + $0xd8] sm:$0xf]
      %v295 = vld [vmem:[%s227 + $0xdc] sm:$0xf]
      %v296 = vld [vmem:[%s227 + $0xe0] sm:$0xf]
      %v297 = vld [vmem:[%s227 + $0xe4] sm:$0xf]
      %v298 = vld [vmem:[%s227 + $0xe8] sm:$0xf]
      %v299 = vld [vmem:[%s227 + $0xec] sm:$0xf]
      %v300 = vld [vmem:[%s227 + $0xf0] sm:$0xf]
      %v301 = vld [vmem:[%s227 + $0xf4] sm:$0xf]
      %v302 = vld [vmem:[%s227 + $0xf8] sm:$0xf]
      %v303 = vld [vmem:[%s227 + $0xfc] sm:$0xf]
      %v304 = vld [vmem:[%s227 + $0x100] sm:$0xf]
      %v305 = vld [vmem:[%s227 + $0x104] sm:$0xf]
      %v306 = vld [vmem:[%s227 + $0x108] sm:$0xf]
      %v307 = vld [vmem:[%s227 + $0x10c] sm:$0xf]
      %v308 = vld [vmem:[%s227 + $0x110] sm:$0xf]
      %v309 = vld [vmem:[%s227 + $0x114] sm:$0xf]
      %v310 = vld [vmem:[%s227 + $0x118] sm:$0xf]
      %v311 = vld [vmem:[%s227 + $0x11c] sm:$0xf]
      %v312 = vld [vmem:[%s227 + $0x120] sm:$0xf]
      %v313 = vld [vmem:[%s227 + $0x124] sm:$0xf]
      %v314 = vld [vmem:[%s227 + $0x128] sm:$0xf]
      %v315 = vld [vmem:[%s227 + $0x12c] sm:$0xf]
      %v316 = vld [vmem:[%s227 + $0x130] sm:$0xf]
      %v317 = vld [vmem:[%s227 + $0x134] sm:$0xf]
      %v318 = vld [vmem:[%s227 + $0x138] sm:$0xf]
      %v319 = vld [vmem:[%s227 + $0x13c] sm:$0xf]
      %v320 = vld [vmem:[%s227 + $0x140] sm:$0xf]
      %v321 = vld [vmem:[%s227 + $0x144] sm:$0xf]
      %v322 = vld [vmem:[%s227 + $0x148] sm:$0xf]
      %v323 = vld [vmem:[%s227 + $0x14c] sm:$0xf]
      %v324 = vld [vmem:[%s227 + $0x150] sm:$0xf]
      %v325 = vld [vmem:[%s227 + $0x154] sm:$0xf]
      %v326 = vld [vmem:[%s227 + $0x158] sm:$0xf]
      %v327 = vld [vmem:[%s227 + $0x15c] sm:$0xf]
      %v328 = vld [vmem:[%s227 + $0x160] sm:$0xf]
      %v329 = vld [vmem:[%s227 + $0x164] sm:$0xf]
      %v330 = vld [vmem:[%s227 + $0x168] sm:$0xf]
      %v331 = vld [vmem:[%s227 + $0x16c] sm:$0xf]
      %v332 = vld [vmem:[%s227 + $0x170] sm:$0xf]
      %v333 = vld [vmem:[%s227 + $0x174] sm:$0xf]
      %v334 = vld [vmem:[%s227 + $0x178] sm:$0xf]
      %v335 = vld [vmem:[%s227 + $0x17c] sm:$0xf]
      %v336 = vld [vmem:[%s227 + $0x180] sm:$0xf]
      %v337 = vld [vmem:[%s227 + $0x184] sm:$0xf]
      %v338 = vunpack.c.l.bf16 %v240
      %v339 = vunpack.c.l.bf16 %v241
      %v340 = vunpack.c.l.bf16 %v242
      %v341 = vunpack.c.l.bf16 %v243
      %v342 = vunpack.c.l.bf16 %v244
      %v343 = vunpack.c.l.bf16 %v245
      %v344 = vunpack.c.l.bf16 %v246
      %v345 = vunpack.c.l.bf16 %v247
      %v346 = vunpack.c.l.bf16 %v248
      %v347 = vunpack.c.l.bf16 %v249
      %v348 = vunpack.c.l.bf16 %v250
      %v349 = vunpack.c.l.bf16 %v251
      %v350 = vunpack.c.l.bf16 %v252
      %v351 = vunpack.c.l.bf16 %v253
      %v352 = vunpack.c.l.bf16 %v254
      %v353 = vunpack.c.l.bf16 %v255
      %v354 = vunpack.c.l.bf16 %v256
      %v355 = vunpack.c.l.bf16 %v257
      %v356 = vunpack.c.l.bf16 %v258
      %v357 = vunpack.c.l.bf16 %v259
      %v358 = vunpack.c.l.bf16 %v260
      %v359 = vunpack.c.l.bf16 %v261
      %v360 = vunpack.c.l.bf16 %v262
      %v361 = vunpack.c.l.bf16 %v263
      %v362 = vunpack.c.l.bf16 %v264
      %v363 = vunpack.c.l.bf16 %v265
      %v364 = vunpack.c.l.bf16 %v266
      %v365 = vunpack.c.l.bf16 %v267
      %v366 = vunpack.c.l.bf16 %v268
      %v367 = vunpack.c.l.bf16 %v269
      %v368 = vunpack.c.l.bf16 %v270
      %v369 = vunpack.c.l.bf16 %v271
      %v370 = vunpack.c.l.bf16 %v272
      %v371 = vunpack.c.l.bf16 %v273
      %v372 = vunpack.c.l.bf16 %v274
      %v373 = vunpack.c.l.bf16 %v275
      %v374 = vunpack.c.l.bf16 %v276
      %v375 = vunpack.c.l.bf16 %v277
      %v376 = vunpack.c.l.bf16 %v278
      %v377 = vunpack.c.l.bf16 %v279
      %v378 = vunpack.c.l.bf16 %v280
      %v379 = vunpack.c.l.bf16 %v281
      %v380 = vunpack.c.l.bf16 %v282
      %v381 = vunpack.c.l.bf16 %v283
      %v382 = vunpack.c.l.bf16 %v284
      %v383 = vunpack.c.l.bf16 %v285
      %v384 = vunpack.c.l.bf16 %v286
      %v385 = vunpack.c.l.bf16 %v287
      %v386 = vunpack.c.l.bf16 %v288
      %v387 = vunpack.c.l.bf16 %v289
      %v388 = vunpack.c.l.bf16 %v290
      %v389 = vunpack.c.l.bf16 %v291
      %v390 = vunpack.c.l.bf16 %v292
      %v391 = vunpack.c.l.bf16 %v293
      %v392 = vunpack.c.l.bf16 %v294
      %v393 = vunpack.c.l.bf16 %v295
      %v394 = vunpack.c.l.bf16 %v296
      %v395 = vunpack.c.l.bf16 %v297
      %v396 = vunpack.c.l.bf16 %v298
      %v397 = vunpack.c.l.bf16 %v299
      %v398 = vunpack.c.l.bf16 %v300
      %v399 = vunpack.c.l.bf16 %v301
      %v400 = vunpack.c.l.bf16 %v302
      %v401 = vunpack.c.l.bf16 %v303
      %v402 = vunpack.c.l.bf16 %v304
      %v403 = vunpack.c.l.bf16 %v305
      %v404 = vunpack.c.l.bf16 %v306
      %v405 = vunpack.c.l.bf16 %v307
      %v406 = vunpack.c.l.bf16 %v308
      %v407 = vunpack.c.l.bf16 %v309
      %v408 = vunpack.c.l.bf16 %v310
      %v409 = vunpack.c.l.bf16 %v311
      %v410 = vunpack.c.l.bf16 %v312
      %v411 = vunpack.c.l.bf16 %v313
      %v412 = vunpack.c.l.bf16 %v314
      %v413 = vunpack.c.l.bf16 %v315
      %v414 = vunpack.c.l.bf16 %v316
      %v415 = vunpack.c.l.bf16 %v317
      %v416 = vunpack.c.l.bf16 %v318
      %v417 = vunpack.c.l.bf16 %v319
      %v418 = vunpack.c.l.bf16 %v320
      %v419 = vunpack.c.l.bf16 %v321
      %v420 = vunpack.c.l.bf16 %v322
      %v421 = vunpack.c.l.bf16 %v323
      %v422 = vunpack.c.l.bf16 %v324
      %v423 = vunpack.c.l.bf16 %v325
      %v424 = vunpack.c.l.bf16 %v326
      %v425 = vunpack.c.l.bf16 %v327
      %v426 = vunpack.c.l.bf16 %v328
      %v427 = vunpack.c.l.bf16 %v329
      %v428 = vunpack.c.l.bf16 %v330
      %v429 = vunpack.c.l.bf16 %v331
      %v430 = vunpack.c.l.bf16 %v332
      %v431 = vunpack.c.l.bf16 %v333
      %v432 = vunpack.c.l.bf16 %v334
      %v433 = vunpack.c.l.bf16 %v335
      %v434 = vunpack.c.l.bf16 %v336
      %v435 = vunpack.c.l.bf16 %v337
      %v436 = vld [vmem:[%s2] sm:$0x1]
      %v438 = vlaneseq
      %v439 = vshrl.u32 %v438, 7
      %v440 = vsub.s32 0, %v439
      %v441 = vrot.slane %v436, %v440
      %v443 = vmul.f32 %v338, %v441
      %v444 = vmul.f32 %v339, %v441
      %v445 = vmul.f32 %v340, %v441
      %v446 = vmul.f32 %v341, %v441
      %v447 = vmul.f32 %v342, %v441
      %v448 = vmul.f32 %v343, %v441
      %v449 = vmul.f32 %v344, %v441
      %v450 = vmul.f32 %v345, %v441
      %v451 = vmul.f32 %v346, %v441
      %v452 = vmul.f32 %v347, %v441
      %v453 = vmul.f32 %v348, %v441
      %v454 = vmul.f32 %v349, %v441
      %v455 = vmul.f32 %v350, %v441
      %v456 = vmul.f32 %v351, %v441
      %v457 = vmul.f32 %v352, %v441
      %v458 = vmul.f32 %v353, %v441
      %v459 = vmul.f32 %v354, %v441
      %v460 = vmul.f32 %v355, %v441
      %v461 = vmul.f32 %v356, %v441
      %v462 = vmul.f32 %v357, %v441
      %v463 = vmul.f32 %v358, %v441
      %v464 = vmul.f32 %v359, %v441
      %v465 = vmul.f32 %v360, %v441
      %v466 = vmul.f32 %v361, %v441
      %v467 = vmul.f32 %v362, %v441
      %v468 = vmul.f32 %v363, %v441
      %v469 = vmul.f32 %v364, %v441
      %v470 = vmul.f32 %v365, %v441
      %v471 = vmul.f32 %v366, %v441
      %v472 = vmul.f32 %v367, %v441
      %v473 = vmul.f32 %v368, %v441
      %v474 = vmul.f32 %v369, %v441
      %v475 = vmul.f32 %v370, %v441
      %v476 = vmul.f32 %v371, %v441
      %v477 = vmul.f32 %v372, %v441
      %v478 = vmul.f32 %v373, %v441
      %v479 = vmul.f32 %v374, %v441
      %v480 = vmul.f32 %v375, %v441
      %v481 = vmul.f32 %v376, %v441
      %v482 = vmul.f32 %v377, %v441
      %v483 = vmul.f32 %v378, %v441
      %v484 = vmul.f32 %v379, %v441
      %v485 = vmul.f32 %v380, %v441
      %v486 = vmul.f32 %v381, %v441
      %v487 = vmul.f32 %v382, %v441
      %v488 = vmul.f32 %v383, %v441
      %v489 = vmul.f32 %v384, %v441
      %v490 = vmul.f32 %v385, %v441
      %v491 = vmul.f32 %v386, %v441
      %v492 = vmul.f32 %v387, %v441
      %v493 = vmul.f32 %v388, %v441
      %v494 = vmul.f32 %v389, %v441
      %v495 = vmul.f32 %v390, %v441
      %v496 = vmul.f32 %v391, %v441
      %v497 = vmul.f32 %v392, %v441
      %v498 = vmul.f32 %v393, %v441
      %v499 = vmul.f32 %v394, %v441
      %v500 = vmul.f32 %v395, %v441
      %v501 = vmul.f32 %v396, %v441
      %v502 = vmul.f32 %v397, %v441
      %v503 = vmul.f32 %v398, %v441
      %v504 = vmul.f32 %v399, %v441
      %v505 = vmul.f32 %v400, %v441
      %v506 = vmul.f32 %v401, %v441
      %v507 = vmul.f32 %v402, %v441
      %v508 = vmul.f32 %v403, %v441
      %v509 = vmul.f32 %v404, %v441
      %v510 = vmul.f32 %v405, %v441
      %v511 = vmul.f32 %v406, %v441
      %v512 = vmul.f32 %v407, %v441
      %v513 = vmul.f32 %v408, %v441
      %v514 = vmul.f32 %v409, %v441
      %v515 = vmul.f32 %v410, %v441
      %v516 = vmul.f32 %v411, %v441
      %v517 = vmul.f32 %v412, %v441
      %v518 = vmul.f32 %v413, %v441
      %v519 = vmul.f32 %v414, %v441
      %v520 = vmul.f32 %v415, %v441
      %v521 = vmul.f32 %v416, %v441
      %v522 = vmul.f32 %v417, %v441
      %v523 = vmul.f32 %v418, %v441
      %v524 = vmul.f32 %v419, %v441
      %v525 = vmul.f32 %v420, %v441
      %v526 = vmul.f32 %v421, %v441
      %v527 = vmul.f32 %v422, %v441
      %v528 = vmul.f32 %v423, %v441
      %v529 = vmul.f32 %v424, %v441
      %v530 = vmul.f32 %v425, %v441
      %v531 = vmul.f32 %v426, %v441
      %v532 = vmul.f32 %v427, %v441
      %v533 = vmul.f32 %v428, %v441
      %v534 = vmul.f32 %v429, %v441
      %v535 = vmul.f32 %v430, %v441
      %v536 = vmul.f32 %v431, %v441
      %v537 = vmul.f32 %v432, %v441
      %v538 = vmul.f32 %v433, %v441
      %v539 = vmul.f32 %v434, %v441
      %v540 = vmul.f32 %v435, %v441
      %v541 = vld [vmem:[%s3] sm:$0x1]
      %v543 = vlaneseq
      %v544 = vshrl.u32 %v543, 7
      %v545 = vsub.s32 0, %v544
      %v546 = vrot.slane %v541, %v545
      %v548 = vadd.f32 %v443, %v546
      %v549 = vadd.f32 %v444, %v546
      %v550 = vadd.f32 %v445, %v546
      %v551 = vadd.f32 %v446, %v546
      %v552 = vadd.f32 %v447, %v546
      %v553 = vadd.f32 %v448, %v546
      %v554 = vadd.f32 %v449, %v546
      %v555 = vadd.f32 %v450, %v546
      %v556 = vadd.f32 %v451, %v546
      %v557 = vadd.f32 %v452, %v546
      %v558 = vadd.f32 %v453, %v546
      %v559 = vadd.f32 %v454, %v546
      %v560 = vadd.f32 %v455, %v546
      %v561 = vadd.f32 %v456, %v546
      %v562 = vadd.f32 %v457, %v546
      %v563 = vadd.f32 %v458, %v546
      %v564 = vadd.f32 %v459, %v546
      %v565 = vadd.f32 %v460, %v546
      %v566 = vadd.f32 %v461, %v546
      %v567 = vadd.f32 %v462, %v546
      %v568 = vadd.f32 %v463, %v546
      %v569 = vadd.f32 %v464, %v546
      %v570 = vadd.f32 %v465, %v546
      %v571 = vadd.f32 %v466, %v546
      %v572 = vadd.f32 %v467, %v546
      %v573 = vadd.f32 %v468, %v546
      %v574 = vadd.f32 %v469, %v546
      %v575 = vadd.f32 %v470, %v546
      %v576 = vadd.f32 %v471, %v546
      %v577 = vadd.f32 %v472, %v546
      %v578 = vadd.f32 %v473, %v546
      %v579 = vadd.f32 %v474, %v546
      %v580 = vadd.f32 %v475, %v546
      %v581 = vadd.f32 %v476, %v546
      %v582 = vadd.f32 %v477, %v546
      %v583 = vadd.f32 %v478, %v546
      %v584 = vadd.f32 %v479, %v546
      %v585 = vadd.f32 %v480, %v546
      %v586 = vadd.f32 %v481, %v546
      %v587 = vadd.f32 %v482, %v546
      %v588 = vadd.f32 %v483, %v546
      %v589 = vadd.f32 %v484, %v546
      %v590 = vadd.f32 %v485, %v546
      %v591 = vadd.f32 %v486, %v546
      %v592 = vadd.f32 %v487, %v546
      %v593 = vadd.f32 %v488, %v546
      %v594 = vadd.f32 %v489, %v546
      %v595 = vadd.f32 %v490, %v546
      %v596 = vadd.f32 %v491, %v546
      %v597 = vadd.f32 %v492, %v546
      %v598 = vadd.f32 %v493, %v546
      %v599 = vadd.f32 %v494, %v546
      %v600 = vadd.f32 %v495, %v546
      %v601 = vadd.f32 %v496, %v546
      %v602 = vadd.f32 %v497, %v546
      %v603 = vadd.f32 %v498, %v546
      %v604 = vadd.f32 %v499, %v546
      %v605 = vadd.f32 %v500, %v546
      %v606 = vadd.f32 %v501, %v546
      %v607 = vadd.f32 %v502, %v546
      %v608 = vadd.f32 %v503, %v546
      %v609 = vadd.f32 %v504, %v546
      %v610 = vadd.f32 %v505, %v546
      %v611 = vadd.f32 %v506, %v546
      %v612 = vadd.f32 %v507, %v546
      %v613 = vadd.f32 %v508, %v546
      %v614 = vadd.f32 %v509, %v546
      %v615 = vadd.f32 %v510, %v546
      %v616 = vadd.f32 %v511, %v546
      %v617 = vadd.f32 %v512, %v546
      %v618 = vadd.f32 %v513, %v546
      %v619 = vadd.f32 %v514, %v546
      %v620 = vadd.f32 %v515, %v546
      %v621 = vadd.f32 %v516, %v546
      %v622 = vadd.f32 %v517, %v546
      %v623 = vadd.f32 %v518, %v546
      %v624 = vadd.f32 %v519, %v546
      %v625 = vadd.f32 %v520, %v546
      %v626 = vadd.f32 %v521, %v546
      %v627 = vadd.f32 %v522, %v546
      %v628 = vadd.f32 %v523, %v546
      %v629 = vadd.f32 %v524, %v546
      %v630 = vadd.f32 %v525, %v546
      %v631 = vadd.f32 %v526, %v546
      %v632 = vadd.f32 %v527, %v546
      %v633 = vadd.f32 %v528, %v546
      %v634 = vadd.f32 %v529, %v546
      %v635 = vadd.f32 %v530, %v546
      %v636 = vadd.f32 %v531, %v546
      %v637 = vadd.f32 %v532, %v546
      %v638 = vadd.f32 %v533, %v546
      %v639 = vadd.f32 %v534, %v546
      %v640 = vadd.f32 %v535, %v546
      %v641 = vadd.f32 %v536, %v546
      %v642 = vadd.f32 %v537, %v546
      %v643 = vadd.f32 %v538, %v546
      %v644 = vadd.f32 %v539, %v546
      %v645 = vadd.f32 %v540, %v546
      %v646 = vmax.f32 %v548, 0.0
      %v647 = vmax.f32 %v549, 0.0
      %v648 = vmax.f32 %v550, 0.0
      %v649 = vmax.f32 %v551, 0.0
      %v650 = vmax.f32 %v552, 0.0
      %v651 = vmax.f32 %v553, 0.0
      %v652 = vmax.f32 %v554, 0.0
      %v653 = vmax.f32 %v555, 0.0
      %v654 = vmax.f32 %v556, 0.0
      %v655 = vmax.f32 %v557, 0.0
      %v656 = vmax.f32 %v558, 0.0
      %v657 = vmax.f32 %v559, 0.0
      %v658 = vmax.f32 %v560, 0.0
      %v659 = vmax.f32 %v561, 0.0
      %v660 = vmax.f32 %v562, 0.0
      %v661 = vmax.f32 %v563, 0.0
      %v662 = vmax.f32 %v564, 0.0
      %v663 = vmax.f32 %v565, 0.0
      %v664 = vmax.f32 %v566, 0.0
      %v665 = vmax.f32 %v567, 0.0
      %v666 = vmax.f32 %v568, 0.0
      %v667 = vmax.f32 %v569, 0.0
      %v668 = vmax.f32 %v570, 0.0
      %v669 = vmax.f32 %v571, 0.0
      %v670 = vmax.f32 %v572, 0.0
      %v671 = vmax.f32 %v573, 0.0
      %v672 = vmax.f32 %v574, 0.0
      %v673 = vmax.f32 %v575, 0.0
      %v674 = vmax.f32 %v576, 0.0
      %v675 = vmax.f32 %v577, 0.0
      %v676 = vmax.f32 %v578, 0.0
      %v677 = vmax.f32 %v579, 0.0
      %v678 = vmax.f32 %v580, 0.0
      %v679 = vmax.f32 %v581, 0.0
      %v680 = vmax.f32 %v582, 0.0
      %v681 = vmax.f32 %v583, 0.0
      %v682 = vmax.f32 %v584, 0.0
      %v683 = vmax.f32 %v585, 0.0
      %v684 = vmax.f32 %v586, 0.0
      %v685 = vmax.f32 %v587, 0.0
      %v686 = vmax.f32 %v588, 0.0
      %v687 = vmax.f32 %v589, 0.0
      %v688 = vmax.f32 %v590, 0.0
      %v689 = vmax.f32 %v591, 0.0
      %v690 = vmax.f32 %v592, 0.0
      %v691 = vmax.f32 %v593, 0.0
      %v692 = vmax.f32 %v594, 0.0
      %v693 = vmax.f32 %v595, 0.0
      %v694 = vmax.f32 %v596, 0.0
      %v695 = vmax.f32 %v597, 0.0
      %v696 = vmax.f32 %v598, 0.0
      %v697 = vmax.f32 %v599, 0.0
      %v698 = vmax.f32 %v600, 0.0
      %v699 = vmax.f32 %v601, 0.0
      %v700 = vmax.f32 %v602, 0.0
      %v701 = vmax.f32 %v603, 0.0
      %v702 = vmax.f32 %v604, 0.0
      %v703 = vmax.f32 %v605, 0.0
      %v704 = vmax.f32 %v606, 0.0
      %v705 = vmax.f32 %v607, 0.0
      %v706 = vmax.f32 %v608, 0.0
      %v707 = vmax.f32 %v609, 0.0
      %v708 = vmax.f32 %v610, 0.0
      %v709 = vmax.f32 %v611, 0.0
      %v710 = vmax.f32 %v612, 0.0
      %v711 = vmax.f32 %v613, 0.0
      %v712 = vmax.f32 %v614, 0.0
      %v713 = vmax.f32 %v615, 0.0
      %v714 = vmax.f32 %v616, 0.0
      %v715 = vmax.f32 %v617, 0.0
      %v716 = vmax.f32 %v618, 0.0
      %v717 = vmax.f32 %v619, 0.0
      %v718 = vmax.f32 %v620, 0.0
      %v719 = vmax.f32 %v621, 0.0
      %v720 = vmax.f32 %v622, 0.0
      %v721 = vmax.f32 %v623, 0.0
      %v722 = vmax.f32 %v624, 0.0
      %v723 = vmax.f32 %v625, 0.0
      %v724 = vmax.f32 %v626, 0.0
      %v725 = vmax.f32 %v627, 0.0
      %v726 = vmax.f32 %v628, 0.0
      %v727 = vmax.f32 %v629, 0.0
      %v728 = vmax.f32 %v630, 0.0
      %v729 = vmax.f32 %v631, 0.0
      %v730 = vmax.f32 %v632, 0.0
      %v731 = vmax.f32 %v633, 0.0
      %v732 = vmax.f32 %v634, 0.0
      %v733 = vmax.f32 %v635, 0.0
      %v734 = vmax.f32 %v636, 0.0
      %v735 = vmax.f32 %v637, 0.0
      %v736 = vmax.f32 %v638, 0.0
      %v737 = vmax.f32 %v639, 0.0
      %v738 = vmax.f32 %v640, 0.0
      %v739 = vmax.f32 %v641, 0.0
      %v740 = vmax.f32 %v642, 0.0
      %v741 = vmax.f32 %v643, 0.0
      %v742 = vmax.f32 %v644, 0.0
      %v743 = vmax.f32 %v645, 0.0
      %v744 = vpack.c.bf16 %v647, %v646
      %v745 = vpack.c.bf16 %v649, %v648
      %v746 = vpack.c.bf16 %v651, %v650
      %v747 = vpack.c.bf16 %v653, %v652
      %v748 = vpack.c.bf16 %v655, %v654
      %v749 = vpack.c.bf16 %v657, %v656
      %v750 = vpack.c.bf16 %v659, %v658
      %v751 = vpack.c.bf16 %v661, %v660
      %v752 = vpack.c.bf16 %v663, %v662
      %v753 = vpack.c.bf16 %v665, %v664
      %v754 = vpack.c.bf16 %v667, %v666
      %v755 = vpack.c.bf16 %v669, %v668
      %v756 = vpack.c.bf16 %v671, %v670
      %v757 = vpack.c.bf16 %v673, %v672
      %v758 = vpack.c.bf16 %v675, %v674
      %v759 = vpack.c.bf16 %v677, %v676
      %v760 = vpack.c.bf16 %v679, %v678
      %v761 = vpack.c.bf16 %v681, %v680
      %v762 = vpack.c.bf16 %v683, %v682
      %v763 = vpack.c.bf16 %v685, %v684
      %v764 = vpack.c.bf16 %v687, %v686
      %v765 = vpack.c.bf16 %v689, %v688
      %v766 = vpack.c.bf16 %v691, %v690
      %v767 = vpack.c.bf16 %v693, %v692
      %v768 = vpack.c.bf16 %v695, %v694
      %v769 = vpack.c.bf16 %v697, %v696
      %v770 = vpack.c.bf16 %v699, %v698
      %v771 = vpack.c.bf16 %v701, %v700
      %v772 = vpack.c.bf16 %v703, %v702
      %v773 = vpack.c.bf16 %v705, %v704
      %v774 = vpack.c.bf16 %v707, %v706
      %v775 = vpack.c.bf16 %v709, %v708
      %v776 = vpack.c.bf16 %v711, %v710
      %v777 = vpack.c.bf16 %v713, %v712
      %v778 = vpack.c.bf16 %v715, %v714
      %v779 = vpack.c.bf16 %v717, %v716
      %v780 = vpack.c.bf16 %v719, %v718
      %v781 = vpack.c.bf16 %v721, %v720
      %v782 = vpack.c.bf16 %v723, %v722
      %v783 = vpack.c.bf16 %v725, %v724
      %v784 = vpack.c.bf16 %v727, %v726
      %v785 = vpack.c.bf16 %v729, %v728
      %v786 = vpack.c.bf16 %v731, %v730
      %v787 = vpack.c.bf16 %v733, %v732
      %v788 = vpack.c.bf16 %v735, %v734
      %v789 = vpack.c.bf16 %v737, %v736
      %v790 = vpack.c.bf16 %v739, %v738
      %v791 = vpack.c.bf16 %v741, %v740
      %v792 = vpack.c.bf16 %v743, %v742
      %v793 = vld [vmem:[%s1] sm:$0xf]
      %v794 = vld [vmem:[%s1 + $0x4] sm:$0xf]
      %v795 = vld [vmem:[%s1 + $0x8] sm:$0xf]
      %v796 = vld [vmem:[%s1 + $0xc] sm:$0xf]
      %v797 = vld [vmem:[%s1 + $0x10] sm:$0xf]
      %v798 = vld [vmem:[%s1 + $0x14] sm:$0xf]
      %v799 = vld [vmem:[%s1 + $0x18] sm:$0xf]
      %v800 = vld [vmem:[%s1 + $0x1c] sm:$0xf]
      %v801 = vld [vmem:[%s1 + $0x20] sm:$0xf]
      %v802 = vld [vmem:[%s1 + $0x24] sm:$0xf]
      %v803 = vld [vmem:[%s1 + $0x28] sm:$0xf]
      %v804 = vld [vmem:[%s1 + $0x2c] sm:$0xf]
      %v805 = vld [vmem:[%s1 + $0x30] sm:$0xf]
      %v806 = vld [vmem:[%s1 + $0x34] sm:$0xf]
      %v807 = vld [vmem:[%s1 + $0x38] sm:$0xf]
      %v808 = vld [vmem:[%s1 + $0x3c] sm:$0xf]
      %v825 = vunpack.c.l.b16 %v793
      %v826 = vunpack.c.l.b16 %v794
      %v827 = vunpack.c.l.b16 %v795
      %v828 = vunpack.c.l.b16 %v796
      %v829 = vunpack.c.l.b16 %v797
      %v830 = vunpack.c.l.b16 %v798
      %v831 = vunpack.c.l.b16 %v799
      %v832 = vunpack.c.l.b16 %v800
      %v833 = vunpack.c.l.b16 %v801
      %v834 = vunpack.c.l.b16 %v802
      %v835 = vunpack.c.l.b16 %v803
      %v836 = vunpack.c.l.b16 %v804
      %v837 = vunpack.c.l.b16 %v805
      %v838 = vunpack.c.l.b16 %v806
      %v839 = vunpack.c.l.b16 %v807
      %v840 = vunpack.c.l.b16 %v808
      %v841 = vpack.c.b16 %v826, %v825
      %v842 = vpack.c.b16 %v828, %v827
      %v843 = vpack.c.b16 %v830, %v829
      %v844 = vpack.c.b16 %v832, %v831
      %v845 = vpack.c.b16 %v834, %v833
      %v846 = vpack.c.b16 %v836, %v835
      %v847 = vpack.c.b16 %v838, %v837
      %v848 = vpack.c.b16 %v840, %v839
      %857 = vmatprep.subr.bf16.mxu0 0
      %858 = vmatpush1.bf16.msra.mxu0 %v841
      %859 = vmatprep.subr.bf16.mxu0 0
      %860 = vmatpush1.bf16.msra.mxu0 %v842
      %861 = vmatprep.subr.bf16.mxu0 0
      %862 = vmatpush1.bf16.msra.mxu0 %v843
      %863 = vmatprep.subr.bf16.mxu0 0
      %864 = vmatpush1.bf16.msra.mxu0 %v844
      %865 = vmatprep.subr.bf16.mxu0 0
      %866 = vmatpush1.bf16.msra.mxu0 %v845
      %867 = vmatprep.subr.bf16.mxu0 0
      %868 = vmatpush1.bf16.msra.mxu0 %v846
      %869 = vmatprep.subr.bf16.mxu0 0
      %870 = vmatpush1.bf16.msra.mxu0 %v847
      %871 = vmatprep.subr.bf16.mxu0 0
      %872 = vmatpush1.bf16.msra.mxu0 %v848
      %873 = vmatprep.subr.bf16.mxu0 0
      %874 = vmatpush1.bf16.msra.mxu0 0
      %875 = vmatprep.subr.bf16.mxu0 0
      %876 = vmatpush1.bf16.msra.mxu0 0
      %877 = vmatprep.subr.bf16.mxu0 0
      %878 = vmatpush1.bf16.msra.mxu0 0
      %879 = vmatprep.subr.bf16.mxu0 0
      %880 = vmatpush1.bf16.msra.mxu0 0
      %881 = vmatprep.subr.bf16.mxu0 0
      %882 = vmatpush1.bf16.msra.mxu0 0
      %883 = vmatprep.subr.bf16.mxu0 0
      %884 = vmatpush1.bf16.msra.mxu0 0
      %885 = vmatprep.subr.bf16.mxu0 0
      %886 = vmatpush1.bf16.msra.mxu0 0
      %887 = vmatprep.subr.bf16.mxu0 0
      %888 = vmatpush1.bf16.msra.mxu0 0
      %889 = vmatprep.mubr.bf16.mxu0 0
      %890 = vmatmul.mubr.bf16.gmra.mrb[0].mxu0 %v744
      %v891 = vpop.f32.mrb[0].mxu0
      %v892 = vadd.f32 0.0, %v891
      %v893 = vpop.f32.mrb[0].mxu0
      %v894 = vpop.f32.mrb[0].mxu0
      %v895 = vadd.f32 0.0, %v894
      %v896 = vpop.f32.mrb[0].mxu0
      %897 = vmatprep.mubr.bf16.mxu0 0
      %898 = vmatmul.mubr.bf16.gmra.mrb[0].mxu0 %v745
      %v899 = vpop.f32.mrb[0].mxu0
      %v900 = vadd.f32 0.0, %v899
      %v901 = vpop.f32.mrb[0].mxu0
      %v902 = vpop.f32.mrb[0].mxu0
      %v903 = vadd.f32 0.0, %v902
      %v904 = vpop.f32.mrb[0].mxu0
      %905 = vmatprep.mubr.bf16.mxu0 0
      %906 = vmatmul.mubr.bf16.gmra.mrb[0].mxu0 %v746
      %v907 = vpop.f32.mrb[0].mxu0
      %v908 = vadd.f32 0.0, %v907
      %v909 = vpop.f32.mrb[0].mxu0
      %v910 = vpop.f32.mrb[0].mxu0
      %v911 = vadd.f32 0.0, %v910
      %v912 = vpop.f32.mrb[0].mxu0
      %913 = vmatprep.mubr.bf16.mxu0 0
      %914 = vmatmul.mubr.bf16.gmra.mrb[0].mxu0 %v747
      %v915 = vpop.f32.mrb[0].mxu0
      %v916 = vadd.f32 0.0, %v915
      %v917 = vpop.f32.mrb[0].mxu0
      %v918 = vpop.f32.mrb[0].mxu0
      %v919 = vadd.f32 0.0, %v918
      %v920 = vpop.f32.mrb[0].mxu0
      %921 = vmatprep.mubr.bf16.mxu0 0
      %922 = vmatmul.mubr.bf16.gmra.mrb[0].mxu0 %v748
      %v923 = vpop.f32.mrb[0].mxu0
      %v924 = vadd.f32 0.0, %v923
      %v925 = vpop.f32.mrb[0].mxu0
      %v926 = vpop.f32.mrb[0].mxu0
      %v927 = vadd.f32 0.0, %v926
      %v928 = vpop.f32.mrb[0].mxu0
      %929 = vmatprep.mubr.bf16.mxu0 0
      %930 = vmatmul.mubr.bf16.gmra.mrb[0].mxu0 %v749
      %v931 = vpop.f32.mrb[0].mxu0
      %v932 = vadd.f32 0.0, %v931
      %v933 = vpop.f32.mrb[0].mxu0
      %v934 = vpop.f32.mrb[0].mxu0
      %v935 = vadd.f32 0.0, %v934
      %v936 = vpop.f32.mrb[0].mxu0
      %937 = vmatprep.mubr.bf16.mxu0 0
      %938 = vmatmul.mubr.bf16.gmra.mrb[0].mxu0 %v750
      %v939 = vpop.f32.mrb[0].mxu0
      %v940 = vadd.f32 0.0, %v939
      %v941 = vpop.f32.mrb[0].mxu0
      %v942 = vpop.f32.mrb[0].mxu0
      %v943 = vadd.f32 0.0, %v942
      %v944 = vpop.f32.mrb[0].mxu0
      %945 = vmatprep.mubr.bf16.mxu0 0
      %946 = vmatmul.mubr.bf16.gmra.mrb[0].mxu0 %v751
      %v947 = vpop.f32.mrb[0].mxu0
      %v948 = vadd.f32 0.0, %v947
      %v949 = vpop.f32.mrb[0].mxu0
      %v950 = vpop.f32.mrb[0].mxu0
      %v951 = vadd.f32 0.0, %v950
      %v952 = vpop.f32.mrb[0].mxu0
      %953 = vmatprep.mubr.bf16.mxu0 0
      %954 = vmatmul.mubr.bf16.gmra.mrb[0].mxu0 %v752
      %v955 = vpop.f32.mrb[0].mxu0
      %v956 = vadd.f32 0.0, %v955
      %v957 = vpop.f32.mrb[0].mxu0
      %v958 = vpop.f32.mrb[0].mxu0
      %v959 = vadd.f32 0.0, %v958
      %v960 = vpop.f32.mrb[0].mxu0
      %961 = vmatprep.mubr.bf16.mxu0 0
      %962 = vmatmul.mubr.bf16.gmra.mrb[0].mxu0 %v753
      %v963 = vpop.f32.mrb[0].mxu0
      %v964 = vadd.f32 0.0, %v963
      %v965 = vpop.f32.mrb[0].mxu0
      %v966 = vpop.f32.mrb[0].mxu0
      %v967 = vadd.f32 0.0, %v966
      %v968 = vpop.f32.mrb[0].mxu0
      %969 = vmatprep.mubr.bf16.mxu0 0
      %970 = vmatmul.mubr.bf16.gmra.mrb[0].mxu0 %v754
      %v971 = vpop.f32.mrb[0].mxu0
      %v972 = vadd.f32 0.0, %v971
      %v973 = vpop.f32.mrb[0].mxu0
      %v974 = vpop.f32.mrb[0].mxu0
      %v975 = vadd.f32 0.0, %v974
      %v976 = vpop.f32.mrb[0].mxu0
      %977 = vmatprep.mubr.bf16.mxu0 0
      %978 = vmatmul.mubr.bf16.gmra.mrb[0].mxu0 %v755
      %v979 = vpop.f32.mrb[0].mxu0
      %v980 = vadd.f32 0.0, %v979
      %v981 = vpop.f32.mrb[0].mxu0
      %v982 = vpop.f32.mrb[0].mxu0
      %v983 = vadd.f32 0.0, %v982
      %v984 = vpop.f32.mrb[0].mxu0
      %985 = vmatprep.mubr.bf16.mxu0 0
      %986 = vmatmul.mubr.bf16.gmra.mrb[0].mxu0 %v756
      %v987 = vpop.f32.mrb[0].mxu0
      %v988 = vadd.f32 0.0, %v987
      %v989 = vpop.f32.mrb[0].mxu0
      %v990 = vpop.f32.mrb[0].mxu0
      %v991 = vadd.f32 0.0, %v990
      %v992 = vpop.f32.mrb[0].mxu0
      %993 = vmatprep.mubr.bf16.mxu0 0
      %994 = vmatmul.mubr.bf16.gmra.mrb[0].mxu0 %v757
      %v995 = vpop.f32.mrb[0].mxu0
      %v996 = vadd.f32 0.0, %v995
      %v997 = vpop.f32.mrb[0].mxu0
      %v998 = vpop.f32.mrb[0].mxu0
      %v999 = vadd.f32 0.0, %v998
      %v1000 = vpop.f32.mrb[0].mxu0
      %1001 = vmatprep.mubr.bf16.mxu0 0
      %1002 = vmatmul.mubr.bf16.gmra.mrb[0].mxu0 %v758
      %v1003 = vpop.f32.mrb[0].mxu0
      %v1004 = vadd.f32 0.0, %v1003
      %v1005 = vpop.f32.mrb[0].mxu0
      %v1006 = vpop.f32.mrb[0].mxu0
      %v1007 = vadd.f32 0.0, %v1006
      %v1008 = vpop.f32.mrb[0].mxu0
      %1009 = vmatprep.mubr.bf16.mxu0 0
      %1010 = vmatmul.mubr.bf16.gmra.mrb[0].mxu0 %v759
      %v1011 = vpop.f32.mrb[0].mxu0
      %v1012 = vadd.f32 0.0, %v1011
      %v1013 = vpop.f32.mrb[0].mxu0
      %v1014 = vpop.f32.mrb[0].mxu0
      %v1015 = vadd.f32 0.0, %v1014
      %v1016 = vpop.f32.mrb[0].mxu0
      %1017 = vmatprep.mubr.bf16.mxu0 0
      %1018 = vmatmul.mubr.bf16.gmra.mrb[0].mxu0 %v760
      %v1019 = vpop.f32.mrb[0].mxu0
      %v1020 = vadd.f32 0.0, %v1019
      %v1021 = vpop.f32.mrb[0].mxu0
      %v1022 = vpop.f32.mrb[0].mxu0
      %v1023 = vadd.f32 0.0, %v1022
      %v1024 = vpop.f32.mrb[0].mxu0
      %1025 = vmatprep.mubr.bf16.mxu0 0
      %1026 = vmatmul.mubr.bf16.gmra.mrb[0].mxu0 %v761
      %v1027 = vpop.f32.mrb[0].mxu0
      %v1028 = vadd.f32 0.0, %v1027
      %v1029 = vpop.f32.mrb[0].mxu0
      %v1030 = vpop.f32.mrb[0].mxu0
      %v1031 = vadd.f32 0.0, %v1030
      %v1032 = vpop.f32.mrb[0].mxu0
      %1033 = vmatprep.mubr.bf16.mxu0 0
      %1034 = vmatmul.mubr.bf16.gmra.mrb[0].mxu0 %v762
      %v1035 = vpop.f32.mrb[0].mxu0
      %v1036 = vadd.f32 0.0, %v1035
      %v1037 = vpop.f32.mrb[0].mxu0
      %v1038 = vpop.f32.mrb[0].mxu0
      %v1039 = vadd.f32 0.0, %v1038
      %v1040 = vpop.f32.mrb[0].mxu0
      %1041 = vmatprep.mubr.bf16.mxu0 0
      %1042 = vmatmul.mubr.bf16.gmra.mrb[0].mxu0 %v763
      %v1043 = vpop.f32.mrb[0].mxu0
      %v1044 = vadd.f32 0.0, %v1043
      %v1045 = vpop.f32.mrb[0].mxu0
      %v1046 = vpop.f32.mrb[0].mxu0
      %v1047 = vadd.f32 0.0, %v1046
      %v1048 = vpop.f32.mrb[0].mxu0
      %1049 = vmatprep.mubr.bf16.mxu0 0
      %1050 = vmatmul.mubr.bf16.gmra.mrb[0].mxu0 %v764
      %v1051 = vpop.f32.mrb[0].mxu0
      %v1052 = vadd.f32 0.0, %v1051
      %v1053 = vpop.f32.mrb[0].mxu0
      %v1054 = vpop.f32.mrb[0].mxu0
      %v1055 = vadd.f32 0.0, %v1054
      %v1056 = vpop.f32.mrb[0].mxu0
      %1057 = vmatprep.mubr.bf16.mxu0 0
      %1058 = vmatmul.mubr.bf16.gmra.mrb[0].mxu0 %v765
      %v1059 = vpop.f32.mrb[0].mxu0
      %v1060 = vadd.f32 0.0, %v1059
      %v1061 = vpop.f32.mrb[0].mxu0
      %v1062 = vpop.f32.mrb[0].mxu0
      %v1063 = vadd.f32 0.0, %v1062
      %v1064 = vpop.f32.mrb[0].mxu0
      %1065 = vmatprep.mubr.bf16.mxu0 0
      %1066 = vmatmul.mubr.bf16.gmra.mrb[0].mxu0 %v766
      %v1067 = vpop.f32.mrb[0].mxu0
      %v1068 = vadd.f32 0.0, %v1067
      %v1069 = vpop.f32.mrb[0].mxu0
      %v1070 = vpop.f32.mrb[0].mxu0
      %v1071 = vadd.f32 0.0, %v1070
      %v1072 = vpop.f32.mrb[0].mxu0
      %1073 = vmatprep.mubr.bf16.mxu0 0
      %1074 = vmatmul.mubr.bf16.gmra.mrb[0].mxu0 %v767
      %v1075 = vpop.f32.mrb[0].mxu0
      %v1076 = vadd.f32 0.0, %v1075
      %v1077 = vpop.f32.mrb[0].mxu0
      %v1078 = vpop.f32.mrb[0].mxu0
      %v1079 = vadd.f32 0.0, %v1078
      %v1080 = vpop.f32.mrb[0].mxu0
      %1081 = vmatprep.mubr.bf16.mxu0 0
      %1082 = vmatmul.mubr.bf16.gmra.mrb[0].mxu0 %v768
      %v1083 = vpop.f32.mrb[0].mxu0
      %v1084 = vadd.f32 0.0, %v1083
      %v1085 = vpop.f32.mrb[0].mxu0
      %v1086 = vpop.f32.mrb[0].mxu0
      %v1087 = vadd.f32 0.0, %v1086
      %v1088 = vpop.f32.mrb[0].mxu0
      %1089 = vmatprep.mubr.bf16.mxu0 0
      %1090 = vmatmul.mubr.bf16.gmra.mrb[0].mxu0 %v769
      %v1091 = vpop.f32.mrb[0].mxu0
      %v1092 = vadd.f32 0.0, %v1091
      %v1093 = vpop.f32.mrb[0].mxu0
      %v1094 = vpop.f32.mrb[0].mxu0
      %v1095 = vadd.f32 0.0, %v1094
      %v1096 = vpop.f32.mrb[0].mxu0
      %1097 = vmatprep.mubr.bf16.mxu0 0
      %1098 = vmatmul.mubr.bf16.gmra.mrb[0].mxu0 %v770
      %v1099 = vpop.f32.mrb[0].mxu0
      %v1100 = vadd.f32 0.0, %v1099
      %v1101 = vpop.f32.mrb[0].mxu0
      %v1102 = vpop.f32.mrb[0].mxu0
      %v1103 = vadd.f32 0.0, %v1102
      %v1104 = vpop.f32.mrb[0].mxu0
      %1105 = vmatprep.mubr.bf16.mxu0 0
      %1106 = vmatmul.mubr.bf16.gmra.mrb[0].mxu0 %v771
      %v1107 = vpop.f32.mrb[0].mxu0
      %v1108 = vadd.f32 0.0, %v1107
      %v1109 = vpop.f32.mrb[0].mxu0
      %v1110 = vpop.f32.mrb[0].mxu0
      %v1111 = vadd.f32 0.0, %v1110
      %v1112 = vpop.f32.mrb[0].mxu0
      %1113 = vmatprep.mubr.bf16.mxu0 0
      %1114 = vmatmul.mubr.bf16.gmra.mrb[0].mxu0 %v772
      %v1115 = vpop.f32.mrb[0].mxu0
      %v1116 = vadd.f32 0.0, %v1115
      %v1117 = vpop.f32.mrb[0].mxu0
      %v1118 = vpop.f32.mrb[0].mxu0
      %v1119 = vadd.f32 0.0, %v1118
      %v1120 = vpop.f32.mrb[0].mxu0
      %1121 = vmatprep.mubr.bf16.mxu0 0
      %1122 = vmatmul.mubr.bf16.gmra.mrb[0].mxu0 %v773
      %v1123 = vpop.f32.mrb[0].mxu0
      %v1124 = vadd.f32 0.0, %v1123
      %v1125 = vpop.f32.mrb[0].mxu0
      %v1126 = vpop.f32.mrb[0].mxu0
      %v1127 = vadd.f32 0.0, %v1126
      %v1128 = vpop.f32.mrb[0].mxu0
      %1129 = vmatprep.mubr.bf16.mxu0 0
      %1130 = vmatmul.mubr.bf16.gmra.mrb[0].mxu0 %v774
      %v1131 = vpop.f32.mrb[0].mxu0
      %v1132 = vadd.f32 0.0, %v1131
      %v1133 = vpop.f32.mrb[0].mxu0
      %v1134 = vpop.f32.mrb[0].mxu0
      %v1135 = vadd.f32 0.0, %v1134
      %v1136 = vpop.f32.mrb[0].mxu0
      %1137 = vmatprep.mubr.bf16.mxu0 0
      %1138 = vmatmul.mubr.bf16.gmra.mrb[0].mxu0 %v775
      %v1139 = vpop.f32.mrb[0].mxu0
      %v1140 = vadd.f32 0.0, %v1139
      %v1141 = vpop.f32.mrb[0].mxu0
      %v1142 = vpop.f32.mrb[0].mxu0
      %v1143 = vadd.f32 0.0, %v1142
      %v1144 = vpop.f32.mrb[0].mxu0
      %1145 = vmatprep.mubr.bf16.mxu0 0
      %1146 = vmatmul.mubr.bf16.gmra.mrb[0].mxu0 %v776
      %v1147 = vpop.f32.mrb[0].mxu0
      %v1148 = vadd.f32 0.0, %v1147
      %v1149 = vpop.f32.mrb[0].mxu0
      %v1150 = vpop.f32.mrb[0].mxu0
      %v1151 = vadd.f32 0.0, %v1150
      %v1152 = vpop.f32.mrb[0].mxu0
      %1153 = vmatprep.mubr.bf16.mxu0 0
      %1154 = vmatmul.mubr.bf16.gmra.mrb[0].mxu0 %v777
      %v1155 = vpop.f32.mrb[0].mxu0
      %v1156 = vadd.f32 0.0, %v1155
      %v1157 = vpop.f32.mrb[0].mxu0
      %v1158 = vpop.f32.mrb[0].mxu0
      %v1159 = vadd.f32 0.0, %v1158
      %v1160 = vpop.f32.mrb[0].mxu0
      %1161 = vmatprep.mubr.bf16.mxu0 0
      %1162 = vmatmul.mubr.bf16.gmra.mrb[0].mxu0 %v778
      %v1163 = vpop.f32.mrb[0].mxu0
      %v1164 = vadd.f32 0.0, %v1163
      %v1165 = vpop.f32.mrb[0].mxu0
      %v1166 = vpop.f32.mrb[0].mxu0
      %v1167 = vadd.f32 0.0, %v1166
      %v1168 = vpop.f32.mrb[0].mxu0
      %1169 = vmatprep.mubr.bf16.mxu0 0
      %1170 = vmatmul.mubr.bf16.gmra.mrb[0].mxu0 %v779
      %v1171 = vpop.f32.mrb[0].mxu0
      %v1172 = vadd.f32 0.0, %v1171
      %v1173 = vpop.f32.mrb[0].mxu0
      %v1174 = vpop.f32.mrb[0].mxu0
      %v1175 = vadd.f32 0.0, %v1174
      %v1176 = vpop.f32.mrb[0].mxu0
      %1177 = vmatprep.mubr.bf16.mxu0 0
      %1178 = vmatmul.mubr.bf16.gmra.mrb[0].mxu0 %v780
      %v1179 = vpop.f32.mrb[0].mxu0
      %v1180 = vadd.f32 0.0, %v1179
      %v1181 = vpop.f32.mrb[0].mxu0
      %v1182 = vpop.f32.mrb[0].mxu0
      %v1183 = vadd.f32 0.0, %v1182
      %v1184 = vpop.f32.mrb[0].mxu0
      %1185 = vmatprep.mubr.bf16.mxu0 0
      %1186 = vmatmul.mubr.bf16.gmra.mrb[0].mxu0 %v781
      %v1187 = vpop.f32.mrb[0].mxu0
      %v1188 = vadd.f32 0.0, %v1187
      %v1189 = vpop.f32.mrb[0].mxu0
      %v1190 = vpop.f32.mrb[0].mxu0
      %v1191 = vadd.f32 0.0, %v1190
      %v1192 = vpop.f32.mrb[0].mxu0
      %1193 = vmatprep.mubr.bf16.mxu0 0
      %1194 = vmatmul.mubr.bf16.gmra.mrb[0].mxu0 %v782
      %v1195 = vpop.f32.mrb[0].mxu0
      %v1196 = vadd.f32 0.0, %v1195
      %v1197 = vpop.f32.mrb[0].mxu0
      %v1198 = vpop.f32.mrb[0].mxu0
      %v1199 = vadd.f32 0.0, %v1198
      %v1200 = vpop.f32.mrb[0].mxu0
      %1201 = vmatprep.mubr.bf16.mxu0 0
      %1202 = vmatmul.mubr.bf16.gmra.mrb[0].mxu0 %v783
      %v1203 = vpop.f32.mrb[0].mxu0
      %v1204 = vadd.f32 0.0, %v1203
      %v1205 = vpop.f32.mrb[0].mxu0
      %v1206 = vpop.f32.mrb[0].mxu0
      %v1207 = vadd.f32 0.0, %v1206
      %v1208 = vpop.f32.mrb[0].mxu0
      %1209 = vmatprep.mubr.bf16.mxu0 0
      %1210 = vmatmul.mubr.bf16.gmra.mrb[0].mxu0 %v784
      %v1211 = vpop.f32.mrb[0].mxu0
      %v1212 = vadd.f32 0.0, %v1211
      %v1213 = vpop.f32.mrb[0].mxu0
      %v1214 = vpop.f32.mrb[0].mxu0
      %v1215 = vadd.f32 0.0, %v1214
      %v1216 = vpop.f32.mrb[0].mxu0
      %1217 = vmatprep.mubr.bf16.mxu0 0
      %1218 = vmatmul.mubr.bf16.gmra.mrb[0].mxu0 %v785
      %v1219 = vpop.f32.mrb[0].mxu0
      %v1220 = vadd.f32 0.0, %v1219
      %v1221 = vpop.f32.mrb[0].mxu0
      %v1222 = vpop.f32.mrb[0].mxu0
      %v1223 = vadd.f32 0.0, %v1222
      %v1224 = vpop.f32.mrb[0].mxu0
      %1225 = vmatprep.mubr.bf16.mxu0 0
      %1226 = vmatmul.mubr.bf16.gmra.mrb[0].mxu0 %v786
      %v1227 = vpop.f32.mrb[0].mxu0
      %v1228 = vadd.f32 0.0, %v1227
      %v1229 = vpop.f32.mrb[0].mxu0
      %v1230 = vpop.f32.mrb[0].mxu0
      %v1231 = vadd.f32 0.0, %v1230
      %v1232 = vpop.f32.mrb[0].mxu0
      %1233 = vmatprep.mubr.bf16.mxu0 0
      %1234 = vmatmul.mubr.bf16.gmra.mrb[0].mxu0 %v787
      %v1235 = vpop.f32.mrb[0].mxu0
      %v1236 = vadd.f32 0.0, %v1235
      %v1237 = vpop.f32.mrb[0].mxu0
      %v1238 = vpop.f32.mrb[0].mxu0
      %v1239 = vadd.f32 0.0, %v1238
      %v1240 = vpop.f32.mrb[0].mxu0
      %1241 = vmatprep.mubr.bf16.mxu0 0
      %1242 = vmatmul.mubr.bf16.gmra.mrb[0].mxu0 %v788
      %v1243 = vpop.f32.mrb[0].mxu0
      %v1244 = vadd.f32 0.0, %v1243
      %v1245 = vpop.f32.mrb[0].mxu0
      %v1246 = vpop.f32.mrb[0].mxu0
      %v1247 = vadd.f32 0.0, %v1246
      %v1248 = vpop.f32.mrb[0].mxu0
      %1249 = vmatprep.mubr.bf16.mxu0 0
      %1250 = vmatmul.mubr.bf16.gmra.mrb[0].mxu0 %v789
      %v1251 = vpop.f32.mrb[0].mxu0
      %v1252 = vadd.f32 0.0, %v1251
      %v1253 = vpop.f32.mrb[0].mxu0
      %v1254 = vpop.f32.mrb[0].mxu0
      %v1255 = vadd.f32 0.0, %v1254
      %v1256 = vpop.f32.mrb[0].mxu0
      %1257 = vmatprep.mubr.bf16.mxu0 0
      %1258 = vmatmul.mubr.bf16.gmra.mrb[0].mxu0 %v790
      %v1259 = vpop.f32.mrb[0].mxu0
      %v1260 = vadd.f32 0.0, %v1259
      %v1261 = vpop.f32.mrb[0].mxu0
      %v1262 = vpop.f32.mrb[0].mxu0
      %v1263 = vadd.f32 0.0, %v1262
      %v1264 = vpop.f32.mrb[0].mxu0
      %1265 = vmatprep.mubr.bf16.mxu0 0
      %1266 = vmatmul.mubr.bf16.gmra.mrb[0].mxu0 %v791
      %v1267 = vpop.f32.mrb[0].mxu0
      %v1268 = vadd.f32 0.0, %v1267
      %v1269 = vpop.f32.mrb[0].mxu0
      %v1270 = vpop.f32.mrb[0].mxu0
      %v1271 = vadd.f32 0.0, %v1270
      %v1272 = vpop.f32.mrb[0].mxu0
      %1273 = vmatprep.mubr.bf16.mxu0 0
      %1274 = vmatmul.mubr.bf16.gmra.mrb[0].mxu0 %v792
      %v1275 = vpop.f32.mrb[0].mxu0
      %v1276 = vadd.f32 0.0, %v1275
      %v1277 = vpop.f32.mrb[0].mxu0
      %v1278 = vpop.f32.mrb[0].mxu0
      %v1279 = vadd.f32 0.0, %v1278
      %v1280 = vpop.f32.mrb[0].mxu0
      %1281 = vdwg.mxu0
      %vm1282 = vcmask 64512
      %1283 = vst.msk [vmem:[%s233] sm:$0xff] %vm1282, %v892
      %1284 = vst.msk [vmem:[%s233 + $0x8] sm:$0xff] %vm1282, %v895
      %1285 = vst.msk [vmem:[%s233 + $0x10] sm:$0xff] %vm1282, %v900
      %1286 = vst.msk [vmem:[%s233 + $0x18] sm:$0xff] %vm1282, %v903
      %1287 = vst.msk [vmem:[%s233 + $0x20] sm:$0xff] %vm1282, %v908
      %1288 = vst.msk [vmem:[%s233 + $0x28] sm:$0xff] %vm1282, %v911
      %1289 = vst.msk [vmem:[%s233 + $0x30] sm:$0xff] %vm1282, %v916
      %1290 = vst.msk [vmem:[%s233 + $0x38] sm:$0xff] %vm1282, %v919
      %1291 = vst.msk [vmem:[%s233 + $0x40] sm:$0xff] %vm1282, %v924
      %1292 = vst.msk [vmem:[%s233 + $0x48] sm:$0xff] %vm1282, %v927
      %1293 = vst.msk [vmem:[%s233 + $0x50] sm:$0xff] %vm1282, %v932
      %1294 = vst.msk [vmem:[%s233 + $0x58] sm:$0xff] %vm1282, %v935
      %1295 = vst.msk [vmem:[%s233 + $0x60] sm:$0xff] %vm1282, %v940
      %1296 = vst.msk [vmem:[%s233 + $0x68] sm:$0xff] %vm1282, %v943
      %1297 = vst.msk [vmem:[%s233 + $0x70] sm:$0xff] %vm1282, %v948
      %1298 = vst.msk [vmem:[%s233 + $0x78] sm:$0xff] %vm1282, %v951
      %1299 = vst.msk [vmem:[%s233 + $0x80] sm:$0xff] %vm1282, %v956
      %1300 = vst.msk [vmem:[%s233 + $0x88] sm:$0xff] %vm1282, %v959
      %1301 = vst.msk [vmem:[%s233 + $0x90] sm:$0xff] %vm1282, %v964
      %1302 = vst.msk [vmem:[%s233 + $0x98] sm:$0xff] %vm1282, %v967
      %1303 = vst.msk [vmem:[%s233 + $0xa0] sm:$0xff] %vm1282, %v972
      %1304 = vst.msk [vmem:[%s233 + $0xa8] sm:$0xff] %vm1282, %v975
      %1305 = vst.msk [vmem:[%s233 + $0xb0] sm:$0xff] %vm1282, %v980
      %1306 = vst.msk [vmem:[%s233 + $0xb8] sm:$0xff] %vm1282, %v983
      %1307 = vst.msk [vmem:[%s233 + $0xc0] sm:$0xff] %vm1282, %v988
      %1308 = vst.msk [vmem:[%s233 + $0xc8] sm:$0xff] %vm1282, %v991
      %1309 = vst.msk [vmem:[%s233 + $0xd0] sm:$0xff] %vm1282, %v996
      %1310 = vst.msk [vmem:[%s233 + $0xd8] sm:$0xff] %vm1282, %v999
      %1311 = vst.msk [vmem:[%s233 + $0xe0] sm:$0xff] %vm1282, %v1004
      %1312 = vst.msk [vmem:[%s233 + $0xe8] sm:$0xff] %vm1282, %v1007
      %1313 = vst.msk [vmem:[%s233 + $0xf0] sm:$0xff] %vm1282, %v1012
      %1314 = vst.msk [vmem:[%s233 + $0xf8] sm:$0xff] %vm1282, %v1015
      %1315 = vst.msk [vmem:[%s233 + $0x100] sm:$0xff] %vm1282, %v1020
      %1316 = vst.msk [vmem:[%s233 + $0x108] sm:$0xff] %vm1282, %v1023
      %1317 = vst.msk [vmem:[%s233 + $0x110] sm:$0xff] %vm1282, %v1028
      %1318 = vst.msk [vmem:[%s233 + $0x118] sm:$0xff] %vm1282, %v1031
      %1319 = vst.msk [vmem:[%s233 + $0x120] sm:$0xff] %vm1282, %v1036
      %1320 = vst.msk [vmem:[%s233 + $0x128] sm:$0xff] %vm1282, %v1039
      %1321 = vst.msk [vmem:[%s233 + $0x130] sm:$0xff] %vm1282, %v1044
      %1322 = vst.msk [vmem:[%s233 + $0x138] sm:$0xff] %vm1282, %v1047
      %1323 = vst.msk [vmem:[%s233 + $0x140] sm:$0xff] %vm1282, %v1052
      %1324 = vst.msk [vmem:[%s233 + $0x148] sm:$0xff] %vm1282, %v1055
      %1325 = vst.msk [vmem:[%s233 + $0x150] sm:$0xff] %vm1282, %v1060
      %1326 = vst.msk [vmem:[%s233 + $0x158] sm:$0xff] %vm1282, %v1063
      %1327 = vst.msk [vmem:[%s233 + $0x160] sm:$0xff] %vm1282, %v1068
      %1328 = vst.msk [vmem:[%s233 + $0x168] sm:$0xff] %vm1282, %v1071
      %1329 = vst.msk [vmem:[%s233 + $0x170] sm:$0xff] %vm1282, %v1076
      %1330 = vst.msk [vmem:[%s233 + $0x178] sm:$0xff] %vm1282, %v1079
      %1331 = vst.msk [vmem:[%s233 + $0x180] sm:$0xff] %vm1282, %v1084
      %1332 = vst.msk [vmem:[%s233 + $0x188] sm:$0xff] %vm1282, %v1087
      %1333 = vst.msk [vmem:[%s233 + $0x190] sm:$0xff] %vm1282, %v1092
      %1334 = vst.msk [vmem:[%s233 + $0x198] sm:$0xff] %vm1282, %v1095
      %1335 = vst.msk [vmem:[%s233 + $0x1a0] sm:$0xff] %vm1282, %v1100
      %1336 = vst.msk [vmem:[%s233 + $0x1a8] sm:$0xff] %vm1282, %v1103
      %1337 = vst.msk [vmem:[%s233 + $0x1b0] sm:$0xff] %vm1282, %v1108
      %1338 = vst.msk [vmem:[%s233 + $0x1b8] sm:$0xff] %vm1282, %v1111
      %1339 = vst.msk [vmem:[%s233 + $0x1c0] sm:$0xff] %vm1282, %v1116
      %1340 = vst.msk [vmem:[%s233 + $0x1c8] sm:$0xff] %vm1282, %v1119
      %1341 = vst.msk [vmem:[%s233 + $0x1d0] sm:$0xff] %vm1282, %v1124
      %1342 = vst.msk [vmem:[%s233 + $0x1d8] sm:$0xff] %vm1282, %v1127
      %1343 = vst.msk [vmem:[%s233 + $0x1e0] sm:$0xff] %vm1282, %v1132
      %1344 = vst.msk [vmem:[%s233 + $0x1e8] sm:$0xff] %vm1282, %v1135
      %1345 = vst.msk [vmem:[%s233 + $0x1f0] sm:$0xff] %vm1282, %v1140
      %1346 = vst.msk [vmem:[%s233 + $0x1f8] sm:$0xff] %vm1282, %v1143
      %1347 = vst.msk [vmem:[%s233 + $0x200] sm:$0xff] %vm1282, %v1148
      %1348 = vst.msk [vmem:[%s233 + $0x208] sm:$0xff] %vm1282, %v1151
      %1349 = vst.msk [vmem:[%s233 + $0x210] sm:$0xff] %vm1282, %v1156
      %1350 = vst.msk [vmem:[%s233 + $0x218] sm:$0xff] %vm1282, %v1159
      %1351 = vst.msk [vmem:[%s233 + $0x220] sm:$0xff] %vm1282, %v1164
      %1352 = vst.msk [vmem:[%s233 + $0x228] sm:$0xff] %vm1282, %v1167
      %1353 = vst.msk [vmem:[%s233 + $0x230] sm:$0xff] %vm1282, %v1172
      %1354 = vst.msk [vmem:[%s233 + $0x238] sm:$0xff] %vm1282, %v1175
      %1355 = vst.msk [vmem:[%s233 + $0x240] sm:$0xff] %vm1282, %v1180
      %1356 = vst.msk [vmem:[%s233 + $0x248] sm:$0xff] %vm1282, %v1183
      %1357 = vst.msk [vmem:[%s233 + $0x250] sm:$0xff] %vm1282, %v1188
      %1358 = vst.msk [vmem:[%s233 + $0x258] sm:$0xff] %vm1282, %v1191
      %1359 = vst.msk [vmem:[%s233 + $0x260] sm:$0xff] %vm1282, %v1196
      %1360 = vst.msk [vmem:[%s233 + $0x268] sm:$0xff] %vm1282, %v1199
      %1361 = vst.msk [vmem:[%s233 + $0x270] sm:$0xff] %vm1282, %v1204
      %1362 = vst.msk [vmem:[%s233 + $0x278] sm:$0xff] %vm1282, %v1207
      %1363 = vst.msk [vmem:[%s233 + $0x280] sm:$0xff] %vm1282, %v1212
      %1364 = vst.msk [vmem:[%s233 + $0x288] sm:$0xff] %vm1282, %v1215
      %1365 = vst.msk [vmem:[%s233 + $0x290] sm:$0xff] %vm1282, %v1220
      %1366 = vst.msk [vmem:[%s233 + $0x298] sm:$0xff] %vm1282, %v1223
      %1367 = vst.msk [vmem:[%s233 + $0x2a0] sm:$0xff] %vm1282, %v1228
      %1368 = vst.msk [vmem:[%s233 + $0x2a8] sm:$0xff] %vm1282, %v1231
      %1369 = vst.msk [vmem:[%s233 + $0x2b0] sm:$0xff] %vm1282, %v1236
      %1370 = vst.msk [vmem:[%s233 + $0x2b8] sm:$0xff] %vm1282, %v1239
      %1371 = vst.msk [vmem:[%s233 + $0x2c0] sm:$0xff] %vm1282, %v1244
      %1372 = vst.msk [vmem:[%s233 + $0x2c8] sm:$0xff] %vm1282, %v1247
      %1373 = vst.msk [vmem:[%s233 + $0x2d0] sm:$0xff] %vm1282, %v1252
      %1374 = vst.msk [vmem:[%s233 + $0x2d8] sm:$0xff] %vm1282, %v1255
      %1375 = vst.msk [vmem:[%s233 + $0x2e0] sm:$0xff] %vm1282, %v1260
      %1376 = vst.msk [vmem:[%s233 + $0x2e8] sm:$0xff] %vm1282, %v1263
      %1377 = vst.msk [vmem:[%s233 + $0x2f0] sm:$0xff] %vm1282, %v1268
      %1378 = vst.msk [vmem:[%s233 + $0x2f8] sm:$0xff] %vm1282, %v1271
      %1379 = vst.msk [vmem:[%s233 + $0x300] sm:$0xff] %vm1282, %v1276
      %1380 = vst.msk [vmem:[%s233 + $0x308] sm:$0xff] %vm1282, %v1279
      %v1381 = vadd.f32 %v892, %v895
      %v1382 = vadd.f32 %v1381, %v900
      %v1383 = vadd.f32 %v1382, %v903
      %v1384 = vadd.f32 %v1383, %v908
      %v1385 = vadd.f32 %v1384, %v911
      %v1386 = vadd.f32 %v1385, %v916
      %v1387 = vadd.f32 %v1386, %v919
      %v1388 = vadd.f32 %v1387, %v924
      %v1389 = vadd.f32 %v1388, %v927
      %v1390 = vadd.f32 %v1389, %v932
      %v1391 = vadd.f32 %v1390, %v935
      %v1392 = vadd.f32 %v1391, %v940
      %v1393 = vadd.f32 %v1392, %v943
      %v1394 = vadd.f32 %v1393, %v948
      %v1395 = vadd.f32 %v1394, %v951
      %v1396 = vadd.f32 %v1395, %v956
      %v1397 = vadd.f32 %v1396, %v959
      %v1398 = vadd.f32 %v1397, %v964
      %v1399 = vadd.f32 %v1398, %v967
      %v1400 = vadd.f32 %v1399, %v972
      %v1401 = vadd.f32 %v1400, %v975
      %v1402 = vadd.f32 %v1401, %v980
      %v1403 = vadd.f32 %v1402, %v983
      %v1404 = vadd.f32 %v1403, %v988
      %v1405 = vadd.f32 %v1404, %v991
      %v1406 = vadd.f32 %v1405, %v996
      %v1407 = vadd.f32 %v1406, %v999
      %v1408 = vadd.f32 %v1407, %v1004
      %v1409 = vadd.f32 %v1408, %v1007
      %v1410 = vadd.f32 %v1409, %v1012
      %v1411 = vadd.f32 %v1410, %v1015
      %v1412 = vadd.f32 %v1411, %v1020
      %v1413 = vadd.f32 %v1412, %v1023
      %v1414 = vadd.f32 %v1413, %v1028
      %v1415 = vadd.f32 %v1414, %v1031
      %v1416 = vadd.f32 %v1415, %v1036
      %v1417 = vadd.f32 %v1416, %v1039
      %v1418 = vadd.f32 %v1417, %v1044
      %v1419 = vadd.f32 %v1418, %v1047
      %v1420 = vadd.f32 %v1419, %v1052
      %v1421 = vadd.f32 %v1420, %v1055
      %v1422 = vadd.f32 %v1421, %v1060
      %v1423 = vadd.f32 %v1422, %v1063
      %v1424 = vadd.f32 %v1423, %v1068
      %v1425 = vadd.f32 %v1424, %v1071
      %v1426 = vadd.f32 %v1425, %v1076
      %v1427 = vadd.f32 %v1426, %v1079
      %v1428 = vadd.f32 %v1427, %v1084
      %v1429 = vadd.f32 %v1428, %v1087
      %v1430 = vadd.f32 %v1429, %v1092
      %v1431 = vadd.f32 %v1430, %v1095
      %v1432 = vadd.f32 %v1431, %v1100
      %v1433 = vadd.f32 %v1432, %v1103
      %v1434 = vadd.f32 %v1433, %v1108
      %v1435 = vadd.f32 %v1434, %v1111
      %v1436 = vadd.f32 %v1435, %v1116
      %v1437 = vadd.f32 %v1436, %v1119
      %v1438 = vadd.f32 %v1437, %v1124
      %v1439 = vadd.f32 %v1438, %v1127
      %v1440 = vadd.f32 %v1439, %v1132
      %v1441 = vadd.f32 %v1440, %v1135
      %v1442 = vadd.f32 %v1441, %v1140
      %v1443 = vadd.f32 %v1442, %v1143
      %v1444 = vadd.f32 %v1443, %v1148
      %v1445 = vadd.f32 %v1444, %v1151
      %v1446 = vadd.f32 %v1445, %v1156
      %v1447 = vadd.f32 %v1446, %v1159
      %v1448 = vadd.f32 %v1447, %v1164
      %v1449 = vadd.f32 %v1448, %v1167
      %v1450 = vadd.f32 %v1449, %v1172
      %v1451 = vadd.f32 %v1450, %v1175
      %v1452 = vadd.f32 %v1451, %v1180
      %v1453 = vadd.f32 %v1452, %v1183
      %v1454 = vadd.f32 %v1453, %v1188
      %v1455 = vadd.f32 %v1454, %v1191
      %v1456 = vadd.f32 %v1455, %v1196
      %v1457 = vadd.f32 %v1456, %v1199
      %v1458 = vadd.f32 %v1457, %v1204
      %v1459 = vadd.f32 %v1458, %v1207
      %v1460 = vadd.f32 %v1459, %v1212
      %v1461 = vadd.f32 %v1460, %v1215
      %v1462 = vadd.f32 %v1461, %v1220
      %v1463 = vadd.f32 %v1462, %v1223
      %v1464 = vadd.f32 %v1463, %v1228
      %v1465 = vadd.f32 %v1464, %v1231
      %v1466 = vadd.f32 %v1465, %v1236
      %v1467 = vadd.f32 %v1466, %v1239
      %v1468 = vadd.f32 %v1467, %v1244
      %v1469 = vadd.f32 %v1468, %v1247
      %v1470 = vadd.f32 %v1469, %v1252
      %v1471 = vadd.f32 %v1470, %v1255
      %v1472 = vadd.f32 %v1471, %v1260
      %v1473 = vadd.f32 %v1472, %v1263
      %v1474 = vadd.f32 %v1473, %v1268
      %v1475 = vadd.f32 %v1474, %v1271
      %v1476 = vadd.f32 %v1475, %v1276
      %v1477 = vadd.f32 %v1476, %v1279
      %v1478 = vrot.slane %v1477, 4
      %v1479 = vadd.f32 %v1477, %v1478
      %v1480 = vrot.slane %v1479, 2
      %v1481 = vadd.f32 %v1479, %v1480
      %v1482 = vrot.slane %v1481, 1
      %v1483 = vadd.f32 %v1481, %v1482
      %1484 = vst [vmem:[%s238] sm:$0x1] %v1483
      %v1485 = vmul.f32 %v892, %v892
      %v1486 = vmul.f32 %v895, %v895
      %v1487 = vmul.f32 %v900, %v900
      %v1488 = vmul.f32 %v903, %v903
      %v1489 = vmul.f32 %v908, %v908
      %v1490 = vmul.f32 %v911, %v911
      %v1491 = vmul.f32 %v916, %v916
      %v1492 = vmul.f32 %v919, %v919
      %v1493 = vmul.f32 %v924, %v924
      %v1494 = vmul.f32 %v927, %v927
      %v1495 = vmul.f32 %v932, %v932
      %v1496 = vmul.f32 %v935, %v935
      %v1497 = vmul.f32 %v940, %v940
      %v1498 = vmul.f32 %v943, %v943
      %v1499 = vmul.f32 %v948, %v948
      %v1500 = vmul.f32 %v951, %v951
      %v1501 = vmul.f32 %v956, %v956
      %v1502 = vmul.f32 %v959, %v959
      %v1503 = vmul.f32 %v964, %v964
      %v1504 = vmul.f32 %v967, %v967
      %v1505 = vmul.f32 %v972, %v972
      %v1506 = vmul.f32 %v975, %v975
      %v1507 = vmul.f32 %v980, %v980
      %v1508 = vmul.f32 %v983, %v983
      %v1509 = vmul.f32 %v988, %v988
      %v1510 = vmul.f32 %v991, %v991
      %v1511 = vmul.f32 %v996, %v996
      %v1512 = vmul.f32 %v999, %v999
      %v1513 = vmul.f32 %v1004, %v1004
      %v1514 = vmul.f32 %v1007, %v1007
      %v1515 = vmul.f32 %v1012, %v1012
      %v1516 = vmul.f32 %v1015, %v1015
      %v1517 = vmul.f32 %v1020, %v1020
      %v1518 = vmul.f32 %v1023, %v1023
      %v1519 = vmul.f32 %v1028, %v1028
      %v1520 = vmul.f32 %v1031, %v1031
      %v1521 = vmul.f32 %v1036, %v1036
      %v1522 = vmul.f32 %v1039, %v1039
      %v1523 = vmul.f32 %v1044, %v1044
      %v1524 = vmul.f32 %v1047, %v1047
      %v1525 = vmul.f32 %v1052, %v1052
      %v1526 = vmul.f32 %v1055, %v1055
      %v1527 = vmul.f32 %v1060, %v1060
      %v1528 = vmul.f32 %v1063, %v1063
      %v1529 = vmul.f32 %v1068, %v1068
      %v1530 = vmul.f32 %v1071, %v1071
      %v1531 = vmul.f32 %v1076, %v1076
      %v1532 = vmul.f32 %v1079, %v1079
      %v1533 = vmul.f32 %v1084, %v1084
      %v1534 = vmul.f32 %v1087, %v1087
      %v1535 = vmul.f32 %v1092, %v1092
      %v1536 = vmul.f32 %v1095, %v1095
      %v1537 = vmul.f32 %v1100, %v1100
      %v1538 = vmul.f32 %v1103, %v1103
      %v1539 = vmul.f32 %v1108, %v1108
      %v1540 = vmul.f32 %v1111, %v1111
      %v1541 = vmul.f32 %v1116, %v1116
      %v1542 = vmul.f32 %v1119, %v1119
      %v1543 = vmul.f32 %v1124, %v1124
      %v1544 = vmul.f32 %v1127, %v1127
      %v1545 = vmul.f32 %v1132, %v1132
      %v1546 = vmul.f32 %v1135, %v1135
      %v1547 = vmul.f32 %v1140, %v1140
      %v1548 = vmul.f32 %v1143, %v1143
      %v1549 = vmul.f32 %v1148, %v1148
      %v1550 = vmul.f32 %v1151, %v1151
      %v1551 = vmul.f32 %v1156, %v1156
      %v1552 = vmul.f32 %v1159, %v1159
      %v1553 = vmul.f32 %v1164, %v1164
      %v1554 = vmul.f32 %v1167, %v1167
      %v1555 = vmul.f32 %v1172, %v1172
      %v1556 = vmul.f32 %v1175, %v1175
      %v1557 = vmul.f32 %v1180, %v1180
      %v1558 = vmul.f32 %v1183, %v1183
      %v1559 = vmul.f32 %v1188, %v1188
      %v1560 = vmul.f32 %v1191, %v1191
      %v1561 = vmul.f32 %v1196, %v1196
      %v1562 = vmul.f32 %v1199, %v1199
      %v1563 = vmul.f32 %v1204, %v1204
      %v1564 = vmul.f32 %v1207, %v1207
      %v1565 = vmul.f32 %v1212, %v1212
      %v1566 = vmul.f32 %v1215, %v1215
      %v1567 = vmul.f32 %v1220, %v1220
      %v1568 = vmul.f32 %v1223, %v1223
      %v1569 = vmul.f32 %v1228, %v1228
      %v1570 = vmul.f32 %v1231, %v1231
      %v1571 = vmul.f32 %v1236, %v1236
      %v1572 = vmul.f32 %v1239, %v1239
      %v1573 = vmul.f32 %v1244, %v1244
      %v1574 = vmul.f32 %v1247, %v1247
      %v1575 = vmul.f32 %v1252, %v1252
      %v1576 = vmul.f32 %v1255, %v1255
      %v1577 = vmul.f32 %v1260, %v1260
      %v1578 = vmul.f32 %v1263, %v1263
      %v1579 = vmul.f32 %v1268, %v1268
      %v1580 = vmul.f32 %v1271, %v1271
      %v1581 = vmul.f32 %v1276, %v1276
      %v1582 = vmul.f32 %v1279, %v1279
      %v1583 = vadd.f32 %v1485, %v1486
      %v1584 = vadd.f32 %v1583, %v1487
      %v1585 = vadd.f32 %v1584, %v1488
      %v1586 = vadd.f32 %v1585, %v1489
      %v1587 = vadd.f32 %v1586, %v1490
      %v1588 = vadd.f32 %v1587, %v1491
      %v1589 = vadd.f32 %v1588, %v1492
      %v1590 = vadd.f32 %v1589, %v1493
      %v1591 = vadd.f32 %v1590, %v1494
      %v1592 = vadd.f32 %v1591, %v1495
      %v1593 = vadd.f32 %v1592, %v1496
      %v1594 = vadd.f32 %v1593, %v1497
      %v1595 = vadd.f32 %v1594, %v1498
      %v1596 = vadd.f32 %v1595, %v1499
      %v1597 = vadd.f32 %v1596, %v1500
      %v1598 = vadd.f32 %v1597, %v1501
      %v1599 = vadd.f32 %v1598, %v1502
      %v1600 = vadd.f32 %v1599, %v1503
      %v1601 = vadd.f32 %v1600, %v1504
      %v1602 = vadd.f32 %v1601, %v1505
      %v1603 = vadd.f32 %v1602, %v1506
      %v1604 = vadd.f32 %v1603, %v1507
      %v1605 = vadd.f32 %v1604, %v1508
      %v1606 = vadd.f32 %v1605, %v1509
      %v1607 = vadd.f32 %v1606, %v1510
      %v1608 = vadd.f32 %v1607, %v1511
      %v1609 = vadd.f32 %v1608, %v1512
      %v1610 = vadd.f32 %v1609, %v1513
      %v1611 = vadd.f32 %v1610, %v1514
      %v1612 = vadd.f32 %v1611, %v1515
      %v1613 = vadd.f32 %v1612, %v1516
      %v1614 = vadd.f32 %v1613, %v1517
      %v1615 = vadd.f32 %v1614, %v1518
      %v1616 = vadd.f32 %v1615, %v1519
      %v1617 = vadd.f32 %v1616, %v1520
      %v1618 = vadd.f32 %v1617, %v1521
      %v1619 = vadd.f32 %v1618, %v1522
      %v1620 = vadd.f32 %v1619, %v1523
      %v1621 = vadd.f32 %v1620, %v1524
      %v1622 = vadd.f32 %v1621, %v1525
      %v1623 = vadd.f32 %v1622, %v1526
      %v1624 = vadd.f32 %v1623, %v1527
      %v1625 = vadd.f32 %v1624, %v1528
      %v1626 = vadd.f32 %v1625, %v1529
      %v1627 = vadd.f32 %v1626, %v1530
      %v1628 = vadd.f32 %v1627, %v1531
      %v1629 = vadd.f32 %v1628, %v1532
      %v1630 = vadd.f32 %v1629, %v1533
      %v1631 = vadd.f32 %v1630, %v1534
      %v1632 = vadd.f32 %v1631, %v1535
      %v1633 = vadd.f32 %v1632, %v1536
      %v1634 = vadd.f32 %v1633, %v1537
      %v1635 = vadd.f32 %v1634, %v1538
      %v1636 = vadd.f32 %v1635, %v1539
      %v1637 = vadd.f32 %v1636, %v1540
      %v1638 = vadd.f32 %v1637, %v1541
      %v1639 = vadd.f32 %v1638, %v1542
      %v1640 = vadd.f32 %v1639, %v1543
      %v1641 = vadd.f32 %v1640, %v1544
      %v1642 = vadd.f32 %v1641, %v1545
      %v1643 = vadd.f32 %v1642, %v1546
      %v1644 = vadd.f32 %v1643, %v1547
      %v1645 = vadd.f32 %v1644, %v1548
      %v1646 = vadd.f32 %v1645, %v1549
      %v1647 = vadd.f32 %v1646, %v1550
      %v1648 = vadd.f32 %v1647, %v1551
      %v1649 = vadd.f32 %v1648, %v1552
      %v1650 = vadd.f32 %v1649, %v1553
      %v1651 = vadd.f32 %v1650, %v1554
      %v1652 = vadd.f32 %v1651, %v1555
      %v1653 = vadd.f32 %v1652, %v1556
      %v1654 = vadd.f32 %v1653, %v1557
      %v1655 = vadd.f32 %v1654, %v1558
      %v1656 = vadd.f32 %v1655, %v1559
      %v1657 = vadd.f32 %v1656, %v1560
      %v1658 = vadd.f32 %v1657, %v1561
      %v1659 = vadd.f32 %v1658, %v1562
      %v1660 = vadd.f32 %v1659, %v1563
      %v1661 = vadd.f32 %v1660, %v1564
      %v1662 = vadd.f32 %v1661, %v1565
      %v1663 = vadd.f32 %v1662, %v1566
      %v1664 = vadd.f32 %v1663, %v1567
      %v1665 = vadd.f32 %v1664, %v1568
      %v1666 = vadd.f32 %v1665, %v1569
      %v1667 = vadd.f32 %v1666, %v1570
      %v1668 = vadd.f32 %v1667, %v1571
      %v1669 = vadd.f32 %v1668, %v1572
      %v1670 = vadd.f32 %v1669, %v1573
      %v1671 = vadd.f32 %v1670, %v1574
      %v1672 = vadd.f32 %v1671, %v1575
      %v1673 = vadd.f32 %v1672, %v1576
      %v1674 = vadd.f32 %v1673, %v1577
      %v1675 = vadd.f32 %v1674, %v1578
      %v1676 = vadd.f32 %v1675, %v1579
      %v1677 = vadd.f32 %v1676, %v1580
      %v1678 = vadd.f32 %v1677, %v1581
      %v1679 = vadd.f32 %v1678, %v1582
      %v1680 = vrot.slane %v1679, 4
      %v1681 = vadd.f32 %v1679, %v1680
      %v1682 = vrot.slane %v1681, 2
      %v1683 = vadd.f32 %v1681, %v1682
      %v1684 = vrot.slane %v1683, 1
      %v1685 = vadd.f32 %v1683, %v1684
      %1686 = vst [vmem:[%s238 + $0x1] sm:$0x1] %v1685
      %s1687 = smul.u32 98, %s17
      %p1688 = scmp.lt.s32.totalorder %s1687, 195
      %s1689 = scalar_select %p1688, %s1687, 195
      %s1690 = smul.addr %s1689, 8
      %s1691 = scalar_lea.vmem %s4, %s1690
      %p1692 = scmp.lt.s32.totalorder %s17, 1
      %s1693 = scalar_select %p1692, %s17, 1
      %s1694 = smul.addr %s1693, 2
      %s1695 = scalar_lea.vmem %s5, %s1694
      // Predicated region
      $region37: #{up_conv_forward.5} parent=35 // pred_check
        %p1696 = pneg %p124
      $region38: #{up_conv_forward.5} parent=35 // pred_check_branch
        %1698 = sbr.rel (%p1696) target = $region40
      $region39: #{up_conv_forward.5} parent=35 // pred_region
        %s1699 = smul.u32 98, %s17
      $region40: #{up_conv_forward.5} parent=35 // pred_fallthru
        _
      // Predicated region
      $region41: #{up_conv_forward.5} parent=35 // pred_check
        %p1700 = pneg %p150
      $region42: #{up_conv_forward.5} parent=35 // pred_check_branch
        %1702 = sbr.rel (%p1700) target = $region44
      $region43: #{up_conv_forward.5} parent=35 // pred_region
        _
      $region44: #{up_conv_forward.5} parent=35 // pred_fallthru
        _
    $region36: #{up_conv_forward.5} parent=5 // pred_fallthru
      _
    %p1703 = scmp.le.s32.totalorder 2, %s12
    // Predicated region
    $region45: #{up_conv_forward.5} parent=5 // pred_check
      %p1704 = pneg %p1703
    $region46: #{up_conv_forward.5} parent=5 // pred_check_branch
      %1706 = sbr.rel (%p1704) target = $region48
    $region47: #{up_conv_forward.5} parent=5 // pred_region
      %s1707 = ssub.s32 %s12, 2
      // Predicated region
      $region49: #{up_conv_forward.5} parent=47 // pred_check
        %p1708 = pneg %p130
      $region50: #{up_conv_forward.5} parent=47 // pred_check_branch
        %1710 = sbr.rel (%p1708) target = $region52
      $region51: #{up_conv_forward.5} parent=47 // pred_region
        %s1711 = smul.u32 98, %s18
        %p1712 = scmp.lt.s32.totalorder %s1711, 195
        %s1713 = scalar_select %p1712, %s1711, 195
        %s1714 = smul.addr %s1713, 8
        %s1715 = scalar_lea.vmem %s4, %s1714
      $region52: #{up_conv_forward.5} parent=47 // pred_fallthru
        _
      // Predicated region
      $region53: #{up_conv_forward.5} parent=47 // pred_check
        %p1716 = pneg %p156
      $region54: #{up_conv_forward.5} parent=47 // pred_check_branch
        %1718 = sbr.rel (%p1716) target = $region56
      $region55: #{up_conv_forward.5} parent=47 // pred_region
        %p1719 = scmp.lt.s32.totalorder %s18, 1
        %s1720 = scalar_select %p1719, %s18, 1
        %s1721 = smul.addr %s1720, 2
        %s1722 = scalar_lea.vmem %s5, %s1721
      $region56: #{up_conv_forward.5} parent=47 // pred_fallthru
        _
    $region48: #{up_conv_forward.5} parent=5 // pred_fallthru
      _
  $region6: #{up_conv_forward.5} parent=0 // loop_footer
    %s16 = sadd.s32 1, %s12
  $region7: #{up_conv_forward.5} parent=0 // loop_footer_branch
    %11 = sbr.rel target = $region3
  $region8: #{up_conv_forward.5} parent=0 // loop_exit
    _

</llo_original>
